<compile_context>
chip_gen: v7x
topology: tpu7x:2x2x1
jax: 0.10.0
libtpu: 0.0.40
codegen_flags: <defaults>
</compile_context>

<pallas_src>
import jax
import jax.numpy as jnp
import numpy as np
from jax.experimental import pallas as pl
from jax.experimental.pallas import tpu as pltpu

B = 1            # batch (x151 = torch.randn([1, 1280]))
K = 1280         # in_features
N = 1000         # out_features (torch)
N_PAD = 1024     # padded out_features -> lane-dense, tile-aligned
DROP_P = 0.2
KEEP_PROB = 1.0 - DROP_P


def _n_tiles():
    """2 output tiles on 2-TensorCore chips (v7x/v4/v5p), 1 otherwise (v5e/v6e)."""
    try:
        kind = jax.devices()[0].device_kind.lower()
    except Exception:
        return 1
    if ("v7" in kind) or ("tpu7" in kind) or ("v4" in kind) or ("v5p" in kind):
        return 2
    return 1


def dropout_linear_kernel(x_ref, mask_ref, w_ref, scale_ref, b_ref, o_ref):
    # Dropout: mask_ref holds 0.0 (dropped) or 1/keep_prob (kept). Tiny VPU work,
    # fully hidden under the int8 weight DMA.
    x = x_ref[...] * mask_ref[...]                        # (B, K) f32
    # int8 -> f32 is exact (|q| <= 127); per-channel scale applied to the output.
    w = w_ref[...].astype(jnp.float32)                    # (K, TN) f32 (integer values)
    y = jnp.dot(x, w, preferred_element_type=jnp.float32)  # (B, TN) f32 acc
    o_ref[...] = y * scale_ref[...] + b_ref[...]


def make_dropout_linear(w, bias):
    """w: torch-layout (N, K) f32, bias: (N,) f32 -> callable(x, mask) -> (B, N)."""
    tiles = _n_tiles()
    tn = N_PAD // tiles                                   # 1024 (1 TC) or 512 (2 TC)

    # Pre-transpose, zero-pad N -> N_PAD, quantize to int8 with per-output-channel
    # scales (done once at build time; the kernel only ever sees the int8 weight).
    w_t = jnp.zeros((K, N_PAD), jnp.float32).at[:, :N].set(jnp.asarray(w).T)
    abs_max = jnp.max(jnp.abs(w_t), axis=0, keepdims=True)        # (1, N_PAD)
    scale = jnp.maximum(abs_max, jnp.float32(1e-30)) / 127.0      # (1, N_PAD) f32
    w_q = jnp.clip(jnp.round(w_t / scale), -127.0, 127.0).astype(jnp.int8)  # (K, N_PAD)
    b_pad = jnp.zeros((1, N_PAD), jnp.float32).at[0, :N].set(jnp.asarray(bias))

    fn = pl.pallas_call(
        dropout_linear_kernel,
        out_shape=jax.ShapeDtypeStruct((B, N_PAD), jnp.float32),
        grid=(tiles,),
        in_specs=[
            pl.BlockSpec((B, K), lambda j: (0, 0)),      # x (tiny)
            pl.BlockSpec((B, K), lambda j: (0, 0)),      # dropout mask
            pl.BlockSpec((K, tn), lambda j: (0, j)),     # W^T tile (int8)
            pl.BlockSpec((1, tn), lambda j: (0, j)),     # per-channel scale tile
            pl.BlockSpec((1, tn), lambda j: (0, j)),     # bias tile
        ],
        out_specs=pl.BlockSpec((B, tn), lambda j: (0, j)),
        compiler_params=pltpu.CompilerParams(
            dimension_semantics=("parallel",)),
        cost_estimate=pl.CostEstimate(
            flops=2 * B * K * N_PAD,
            bytes_accessed=(K * N_PAD * 1          # int8 weight
                            + 2 * B * K * 4        # x + mask
                            + 2 * N_PAD * 4        # scale + bias
                            + B * N_PAD * 4),      # output
            transcendentals=0),
    )

    @jax.jit
    def run(x, mask):
        y_pad = fn(x, mask, w_q, scale, b_pad)
        return y_pad[:, :N]

    return run


if __name__ == "__main__":
    key = jax.random.PRNGKey(0)
    kx, kw, kb, kd = jax.random.split(key, 4)

    # Deterministic synthetic parameters (PyTorch Linear shapes: W (1000,1280), b (1000,))
    bound = 1.0 / np.sqrt(K)
    w = jax.random.uniform(kw, (N, K), jnp.float32, -bound, bound)
    bias = jax.random.uniform(kb, (N,), jnp.float32, -bound, bound)
    x = jax.random.normal(kx, (B, K), jnp.float32)

    run = make_dropout_linear(w, bias)

    # --- eval-mode path (dropout = identity mask): check vs plain-JAX f32 reference.
    #     Tolerance covers the per-channel int8 weight quantization (~few e-3 abs).
    ones_mask = jnp.ones((B, K), jnp.float32)
    y_eval = jax.block_until_ready(run(x, ones_mask))
    y_ref = x @ w.T + bias[None, :]
    np.testing.assert_allclose(np.asarray(y_eval), np.asarray(y_ref),
                               rtol=2e-2, atol=2e-2)

    # --- training-mode path: Bernoulli keep-mask scaled by 1/keep_prob (torch training
    #     semantics; RNG stream differs from torch).
    keep = jax.random.bernoulli(kd, p=KEEP_PROB, shape=(B, K))
    mask = keep.astype(jnp.float32) / KEEP_PROB
    y_train = jax.block_until_ready(run(x, mask))
    y_train_ref = (x * mask) @ w.T + bias[None, :]
    np.testing.assert_allclose(np.asarray(y_train), np.asarray(y_train_ref),
                               rtol=2e-2, atol=2e-2)
    assert y_train.shape == (B, N)
    assert bool(jnp.all(jnp.isfinite(y_train)))

    print("KERNEL_OK")
</pallas_src>

<mosaic_0001>
module attributes {stable_mosaic.version = 11 : i64} {
  func.func @dropout_linear_kernel(%arg0: i32, %arg1: memref<1x1280xf32, #tpu.memory_space<vmem>>, %arg2: memref<1x1280xf32, #tpu.memory_space<vmem>>, %arg3: memref<1280x1024xi8, #tpu.memory_space<vmem>>, %arg4: memref<1x1024xf32, #tpu.memory_space<vmem>>, %arg5: memref<1x1024xf32, #tpu.memory_space<vmem>>, %arg6: memref<1x1024xf32, #tpu.memory_space<vmem>>) attributes {dimension_semantics = [#tpu.dimension_semantics<parallel>], iteration_bounds = array<i64: 1>, scalar_prefetch = 0 : i64, scratch_operands = 0 : i64, tpu.core_type = #tpu.core_type<tc>, window_params = [{pipeline_mode = #tpu.pipeline_mode<synchronous>, transform_indices = @transform_0, window_bounds = array<i64: 1, 1280>}, {pipeline_mode = #tpu.pipeline_mode<synchronous>, transform_indices = @transform_1, window_bounds = array<i64: 1, 1280>}, {transform_indices = @transform_2, window_bounds = array<i64: 1280, 1024>}, {transform_indices = @transform_3, window_bounds = array<i64: 1, 1024>}, {transform_indices = @transform_4, window_bounds = array<i64: 1, 1024>}, {transform_indices = @transform_5, window_bounds = array<i64: 1, 1024>}]} {
    %c0 = arith.constant 0 : index
    %c0_0 = arith.constant 0 : index
    %0 = vector.load %arg1[%c0, %c0_0] : memref<1x1280xf32, #tpu.memory_space<vmem>>, vector<1x1280xf32>
    %c0_1 = arith.constant 0 : index
    %c0_2 = arith.constant 0 : index
    %1 = vector.load %arg2[%c0_1, %c0_2] : memref<1x1280xf32, #tpu.memory_space<vmem>>, vector<1x1280xf32>
    %2 = arith.mulf %0, %1 : vector<1x1280xf32>
    %c0_3 = arith.constant 0 : index
    %c0_4 = arith.constant 0 : index
    %3 = vector.load %arg3[%c0_3, %c0_4] : memref<1280x1024xi8, #tpu.memory_space<vmem>>, vector<1280x1024xi8>
    %4 = arith.sitofp %3 : vector<1280x1024xi8> to vector<1280x1024xf32>
    %cst = arith.constant dense<0.000000e+00> : vector<1x1024xf32>
    %5 = tpu.matmul %2, %4, %cst {dimension_numbers = #tpu.dot_dimension_numbers<[1], [0], [0], [1], [0, 0, 1, 1], [], []>} : vector<1x1280xf32>, vector<1280x1024xf32>, vector<1x1024xf32> -> vector<1x1024xf32>
    %c0_5 = arith.constant 0 : index
    %c0_6 = arith.constant 0 : index
    %6 = vector.load %arg4[%c0_5, %c0_6] : memref<1x1024xf32, #tpu.memory_space<vmem>>, vector<1x1024xf32>
    %7 = arith.mulf %5, %6 : vector<1x1024xf32>
    %c0_7 = arith.constant 0 : index
    %c0_8 = arith.constant 0 : index
    %8 = vector.load %arg5[%c0_7, %c0_8] : memref<1x1024xf32, #tpu.memory_space<vmem>>, vector<1x1024xf32>
    %9 = arith.addf %7, %8 : vector<1x1024xf32>
    %c0_9 = arith.constant 0 : index
    %c0_10 = arith.constant 0 : index
    %10 = vector.load %arg6[%c0_9, %c0_10] : memref<1x1024xf32, #tpu.memory_space<vmem>>, vector<1x1024xf32>
    tpu.vector_store %arg6[%c0_9, %c0_10], %9 {strides = array<i32>} : memref<1x1024xf32, #tpu.memory_space<vmem>>, vector<1x1024xf32>,
    return
  }
  func.func @transform_0(%arg0: i32) -> (i32, i32) {
    %c0_i32 = arith.constant 0 : i32
    %c0_i32_0 = arith.constant 0 : i32
    %c0_i32_1 = arith.constant 0 : i32
    return %c0_i32, %c0_i32_0 : i32, i32
  }
  func.func @transform_1(%arg0: i32) -> (i32, i32) {
    %c0_i32 = arith.constant 0 : i32
    %c0_i32_0 = arith.constant 0 : i32
    %c0_i32_1 = arith.constant 0 : i32
    return %c0_i32, %c0_i32_0 : i32, i32
  }
  func.func @transform_2(%arg0: i32) -> (i32, i32) {
    %c0_i32 = arith.constant 0 : i32
    %c0_i32_0 = arith.constant 0 : i32
    return %c0_i32, %arg0 : i32, i32
  }
  func.func @transform_3(%arg0: i32) -> (i32, i32) {
    %c0_i32 = arith.constant 0 : i32
    %c0_i32_0 = arith.constant 0 : i32
    return %c0_i32, %arg0 : i32, i32
  }
  func.func @transform_4(%arg0: i32) -> (i32, i32) {
    %c0_i32 = arith.constant 0 : i32
    %c0_i32_0 = arith.constant 0 : i32
    return %c0_i32, %arg0 : i32, i32
  }
  func.func @transform_5(%arg0: i32) -> (i32, i32) {
    %c0_i32 = arith.constant 0 : i32
    %c0_i32_0 = arith.constant 0 : i32
    return %c0_i32, %arg0 : i32, i32
  }
}

</mosaic_0001>

<llo_original>
// kernel: run.1
$region0: #{run.1}
  #allocation0 [shape = 'u32[]', space=smem, size = 0x4, offset = 0x4, fixed_abs, tag = 'smem constant byte address 0x4 - core index']
  #allocation1 [shape = 'u32[144,128]{1,0:T(1,128)}', space=vmem, size = 0x12000, scoped, tag = 'internal scratch']
  %s0 = inlined_call_operand.hbm [shape: f32[1,1280], index: 0, kind: input, shape index: {}]
  %s1 = inlined_call_operand.hbm [shape: f32[1,1280], index: 1, kind: input, shape index: {}]
  %s2 = inlined_call_operand.hbm [shape: s8[1280,1024], index: 2, kind: input, shape index: {}]
  %s3 = inlined_call_operand.hbm [shape: f32[1,1024], index: 3, kind: input, shape index: {}]
  %s4 = inlined_call_operand.hbm [shape: f32[1,1024], index: 4, kind: input, shape index: {}]
  %s5 = inlined_call_operand.hbm [shape: f32[1,1024], index: 5, kind: output, shape index: {}]
  %s6 = sld [smem:[#allocation0]]
  $region50: #{run.1} parent=0
    _
  %s8 = ssub.s32 1, %s6
  %s9 = scalar_select 0, %s8, %s6
  $region1: #{run.1} parent=0
    #allocation2 [shape = 'u8[5120]{0}', space=vmem, size = 0x1400, scoped, tag = 'input window, operand 0, single buffered']
    #allocation3 [shape = 's32[1]{0}', space=sflag, size = 0x4, scoped, tag = 'scoped memory for run.1']
    #allocation4 [shape = 's32[1]{0}', space=sflag, size = 0x4, scoped, tag = 'scoped memory for run.1']
    #allocation5 [shape = 'u8[5120]{0}', space=vmem, size = 0x1400, scoped, tag = 'input window, operand 1, single buffered']
    #allocation6 [shape = 's32[1]{0}', space=sflag, size = 0x4, scoped, tag = 'scoped memory for run.1']
    #allocation7 [shape = 'u8[1310720]{0}', space=vmem, size = 0x140000, scoped, tag = 'input window, operand 2, single buffered']
    #allocation8 [shape = 'u8[4096]{0}', space=vmem, size = 0x1000, scoped, tag = 'input window, operand 3, single buffered']
    #allocation9 [shape = 's32[1]{0}', space=sflag, size = 0x4, scoped, tag = 'scoped memory for run.1']
    #allocation10 [shape = 'u8[4096]{0}', space=vmem, size = 0x1000, scoped, tag = 'input window, operand 4, single buffered']
    #allocation11 [shape = 'u8[4096]{0}', space=vmem, size = 0x1000, scoped, tag = 'output window, operand 0, single buffered']
    %10 = vsyncpa [#allocation3], 0
    %11 = vsyncpa [#allocation6], 0
    %12 = vsyncpa [#allocation9], 0
    %13 = vsyncpa [#allocation4], 0
    // Predicated region
    $region2: #{run.1} parent=1 // pred_check
      _
    $region3: #{run.1} parent=1 // pred_check_branch
      %15 = sbr.rel (0) target = $region5
    $region4: #{run.1} parent=1 // pred_region
      %s17 = ssub.s32 160, 160
      %18 = vsyncadd [#allocation3], %s17
      %s20 = sshll.u32 [#allocation2], 4
      %s21 = int_to_ptr.vmem [resolvable:$true] %s20
      %23 = dma.hbm_to_vmem [thread:$0]  %s0, 160, %s21, [#allocation3]
    $region5: #{run.1} parent=1 // pred_fallthru
      _
    // Predicated region
    $region6: #{run.1} parent=1 // pred_check
      _
    $region7: #{run.1} parent=1 // pred_check_branch
      %25 = sbr.rel (0) target = $region9
    $region8: #{run.1} parent=1 // pred_region
      %s27 = ssub.s32 160, 160
      %28 = vsyncadd [#allocation6], %s27
      %s30 = sshll.u32 [#allocation5], 4
      %s31 = int_to_ptr.vmem [resolvable:$true] %s30
      %33 = dma.hbm_to_vmem [thread:$0]  %s1, 160, %s31, [#allocation6]
    $region9: #{run.1} parent=1 // pred_fallthru
      _
    // Predicated region
    $region10: #{run.1} parent=1 // pred_check
      _
    $region11: #{run.1} parent=1 // pred_check_branch
      %35 = sbr.rel (0) target = $region13
    $region12: #{run.1} parent=1 // pred_region
      %s37 = ssub.s32 40960, 40960
      %38 = vsyncadd [#allocation6], %s37
      %s39 = sshll.u32 [#allocation7], 4
      %s40 = int_to_ptr.vmem [resolvable:$true] %s39
      %45 = dma.hbm_to_vmem [thread:$0]  %s2, 40960, %s40, [#allocation6], 1024, 1024, 64
    $region13: #{run.1} parent=1 // pred_fallthru
      _
    // Predicated region
    $region14: #{run.1} parent=1 // pred_check
      _
    $region15: #{run.1} parent=1 // pred_check_branch
      %47 = sbr.rel (0) target = $region17
    $region16: #{run.1} parent=1 // pred_region
      %s49 = ssub.s32 128, 128
      %50 = vsyncadd [#allocation9], %s49
      %s52 = sshll.u32 [#allocation8], 4
      %s53 = int_to_ptr.vmem [resolvable:$true] %s52
      %55 = dma.hbm_to_vmem [thread:$0]  %s3, 128, %s53, [#allocation9]
    $region17: #{run.1} parent=1 // pred_fallthru
      _
    // Predicated region
    $region18: #{run.1} parent=1 // pred_check
      _
    $region19: #{run.1} parent=1 // pred_check_branch
      %57 = sbr.rel (0) target = $region21
    $region20: #{run.1} parent=1 // pred_region
      %s59 = ssub.s32 128, 128
      %60 = vsyncadd [#allocation9], %s59
      %s62 = sshll.u32 [#allocation10], 4
      %s63 = int_to_ptr.vmem [resolvable:$true] %s62
      %65 = dma.hbm_to_vmem [thread:$0]  %s4, 128, %s63, [#allocation9]
    $region21: #{run.1} parent=1 // pred_fallthru
      _
    // Predicated region
    $region22: #{run.1} parent=1 // pred_check
      _
    $region23: #{run.1} parent=1 // pred_check_branch
      %67 = sbr.rel (0) target = $region25
    $region24: #{run.1} parent=1 // pred_region
      %68 = dma.done [#allocation3], 160
    $region25: #{run.1} parent=1 // pred_fallthru
      _
    // Predicated region
    $region26: #{run.1} parent=1 // pred_check
      _
    $region27: #{run.1} parent=1 // pred_check_branch
      %70 = sbr.rel (0) target = $region29
    $region28: #{run.1} parent=1 // pred_region
      %71 = dma.done [#allocation6], 160
    $region29: #{run.1} parent=1 // pred_fallthru
      _
    // Predicated region
    $region30: #{run.1} parent=1 // pred_check
      _
    $region31: #{run.1} parent=1 // pred_check_branch
      %73 = sbr.rel (0) target = $region33
    $region32: #{run.1} parent=1 // pred_region
      %74 = dma.done [#allocation6], 40960
    $region33: #{run.1} parent=1 // pred_fallthru
      _
    // Predicated region
    $region34: #{run.1} parent=1 // pred_check
      _
    $region35: #{run.1} parent=1 // pred_check_branch
      %76 = sbr.rel (0) target = $region37
    $region36: #{run.1} parent=1 // pred_region
      %77 = dma.done [#allocation9], 128
    $region37: #{run.1} parent=1 // pred_fallthru
      _
    // Predicated region
    $region38: #{run.1} parent=1 // pred_check
      _
    $region39: #{run.1} parent=1 // pred_check_branch
      %79 = sbr.rel (0) target = $region41
    $region40: #{run.1} parent=1 // pred_region
      %80 = dma.done [#allocation9], 128
    $region41: #{run.1} parent=1 // pred_fallthru
      _
    %v81 = vld [vmem:[#allocation2] sm:$0xff]
    %v82 = vld [vmem:[#allocation2 + $0x8] sm:$0x3]
    %v83 = vld [vmem:[#allocation5] sm:$0xff]
    %v84 = vld [vmem:[#allocation5 + $0x8] sm:$0x3]
    %v85 = vmul.f32 %v81, %v83
    %v86 = vmul.f32 %v82, %v84
    %v87 = vld [vmem:[#allocation7] sm:$0xff]
    %v88 = vld [vmem:[#allocation7 + $0x8] sm:$0xff]
    %v89 = vld [vmem:[#allocation7 + $0x10] sm:$0xff]
    %v90 = vld [vmem:[#allocation7 + $0x18] sm:$0xff]
    %v91 = vld [vmem:[#allocation7 + $0x20] sm:$0xff]
    %v92 = vld [vmem:[#allocation7 + $0x28] sm:$0xff]
    %v93 = vld [vmem:[#allocation7 + $0x30] sm:$0xff]
    %v94 = vld [vmem:[#allocation7 + $0x38] sm:$0xff]
    %v95 = vld [vmem:[#allocation7 + $0x40] sm:$0xff]
    %v96 = vld [vmem:[#allocation7 + $0x48] sm:$0xff]
    %v97 = vld [vmem:[#allocation7 + $0x50] sm:$0xff]
    %v98 = vld [vmem:[#allocation7 + $0x58] sm:$0xff]
    %v99 = vld [vmem:[#allocation7 + $0x60] sm:$0xff]
    %v100 = vld [vmem:[#allocation7 + $0x68] sm:$0xff]
    %v101 = vld [vmem:[#allocation7 + $0x70] sm:$0xff]
    %v102 = vld [vmem:[#allocation7 + $0x78] sm:$0xff]
    %v103 = vld [vmem:[#allocation7 + $0x80] sm:$0xff]
    %v104 = vld [vmem:[#allocation7 + $0x88] sm:$0xff]
    %v105 = vld [vmem:[#allocation7 + $0x90] sm:$0xff]
    %v106 = vld [vmem:[#allocation7 + $0x98] sm:$0xff]
    %v107 = vld [vmem:[#allocation7 + $0xa0] sm:$0xff]
    %v108 = vld [vmem:[#allocation7 + $0xa8] sm:$0xff]
    %v109 = vld [vmem:[#allocation7 + $0xb0] sm:$0xff]
    %v110 = vld [vmem:[#allocation7 + $0xb8] sm:$0xff]
    %v111 = vld [vmem:[#allocation7 + $0xc0] sm:$0xff]
    %v112 = vld [vmem:[#allocation7 + $0xc8] sm:$0xff]
    %v113 = vld [vmem:[#allocation7 + $0xd0] sm:$0xff]
    %v114 = vld [vmem:[#allocation7 + $0xd8] sm:$0xff]
    %v115 = vld [vmem:[#allocation7 + $0xe0] sm:$0xff]
    %v116 = vld [vmem:[#allocation7 + $0xe8] sm:$0xff]
    %v117 = vld [vmem:[#allocation7 + $0xf0] sm:$0xff]
    %v118 = vld [vmem:[#allocation7 + $0xf8] sm:$0xff]
    %v119 = vld [vmem:[#allocation7 + $0x100] sm:$0xff]
    %v120 = vld [vmem:[#allocation7 + $0x108] sm:$0xff]
    %v121 = vld [vmem:[#allocation7 + $0x110] sm:$0xff]
    %v122 = vld [vmem:[#allocation7 + $0x118] sm:$0xff]
    %v123 = vld [vmem:[#allocation7 + $0x120] sm:$0xff]
    %v124 = vld [vmem:[#allocation7 + $0x128] sm:$0xff]
    %v125 = vld [vmem:[#allocation7 + $0x130] sm:$0xff]
    %v126 = vld [vmem:[#allocation7 + $0x138] sm:$0xff]
    %v127 = vld [vmem:[#allocation7 + $0x140] sm:$0xff]
    %v128 = vld [vmem:[#allocation7 + $0x148] sm:$0xff]
    %v129 = vld [vmem:[#allocation7 + $0x150] sm:$0xff]
    %v130 = vld [vmem:[#allocation7 + $0x158] sm:$0xff]
    %v131 = vld [vmem:[#allocation7 + $0x160] sm:$0xff]
    %v132 = vld [vmem:[#allocation7 + $0x168] sm:$0xff]
    %v133 = vld [vmem:[#allocation7 + $0x170] sm:$0xff]
    %v134 = vld [vmem:[#allocation7 + $0x178] sm:$0xff]
    %v135 = vld [vmem:[#allocation7 + $0x180] sm:$0xff]
    %v136 = vld [vmem:[#allocation7 + $0x188] sm:$0xff]
    %v137 = vld [vmem:[#allocation7 + $0x190] sm:$0xff]
    %v138 = vld [vmem:[#allocation7 + $0x198] sm:$0xff]
    %v139 = vld [vmem:[#allocation7 + $0x1a0] sm:$0xff]
    %v140 = vld [vmem:[#allocation7 + $0x1a8] sm:$0xff]
    %v141 = vld [vmem:[#allocation7 + $0x1b0] sm:$0xff]
    %v142 = vld [vmem:[#allocation7 + $0x1b8] sm:$0xff]
    %v143 = vld [vmem:[#allocation7 + $0x1c0] sm:$0xff]
    %v144 = vld [vmem:[#allocation7 + $0x1c8] sm:$0xff]
    %v145 = vld [vmem:[#allocation7 + $0x1d0] sm:$0xff]
    %v146 = vld [vmem:[#allocation7 + $0x1d8] sm:$0xff]
    %v147 = vld [vmem:[#allocation7 + $0x1e0] sm:$0xff]
    %v148 = vld [vmem:[#allocation7 + $0x1e8] sm:$0xff]
    %v149 = vld [vmem:[#allocation7 + $0x1f0] sm:$0xff]
    %v150 = vld [vmem:[#allocation7 + $0x1f8] sm:$0xff]
    %v151 = vld [vmem:[#allocation7 + $0x200] sm:$0xff]
    %v152 = vld [vmem:[#allocation7 + $0x208] sm:$0xff]
    %v153 = vld [vmem:[#allocation7 + $0x210] sm:$0xff]
    %v154 = vld [vmem:[#allocation7 + $0x218] sm:$0xff]
    %v155 = vld [vmem:[#allocation7 + $0x220] sm:$0xff]
    %v156 = vld [vmem:[#allocation7 + $0x228] sm:$0xff]
    %v157 = vld [vmem:[#allocation7 + $0x230] sm:$0xff]
    %v158 = vld [vmem:[#allocation7 + $0x238] sm:$0xff]
    %v159 = vld [vmem:[#allocation7 + $0x240] sm:$0xff]
    %v160 = vld [vmem:[#allocation7 + $0x248] sm:$0xff]
    %v161 = vld [vmem:[#allocation7 + $0x250] sm:$0xff]
    %v162 = vld [vmem:[#allocation7 + $0x258] sm:$0xff]
    %v163 = vld [vmem:[#allocation7 + $0x260] sm:$0xff]
    %v164 = vld [vmem:[#allocation7 + $0x268] sm:$0xff]
    %v165 = vld [vmem:[#allocation7 + $0x270] sm:$0xff]
    %v166 = vld [vmem:[#allocation7 + $0x278] sm:$0xff]
    %v167 = vld [vmem:[#allocation7 + $0x280] sm:$0xff]
    %v168 = vld [vmem:[#allocation7 + $0x288] sm:$0xff]
    %v169 = vld [vmem:[#allocation7 + $0x290] sm:$0xff]
    %v170 = vld [vmem:[#allocation7 + $0x298] sm:$0xff]
    %v171 = vld [vmem:[#allocation7 + $0x2a0] sm:$0xff]
    %v172 = vld [vmem:[#allocation7 + $0x2a8] sm:$0xff]
    %v173 = vld [vmem:[#allocation7 + $0x2b0] sm:$0xff]
    %v174 = vld [vmem:[#allocation7 + $0x2b8] sm:$0xff]
    %v175 = vld [vmem:[#allocation7 + $0x2c0] sm:$0xff]
    %v176 = vld [vmem:[#allocation7 + $0x2c8] sm:$0xff]
    %v177 = vld [vmem:[#allocation7 + $0x2d0] sm:$0xff]
    %v178 = vld [vmem:[#allocation7 + $0x2d8] sm:$0xff]
    %v179 = vld [vmem:[#allocation7 + $0x2e0] sm:$0xff]
    %v180 = vld [vmem:[#allocation7 + $0x2e8] sm:$0xff]
    %v181 = vld [vmem:[#allocation7 + $0x2f0] sm:$0xff]
    %v182 = vld [vmem:[#allocation7 + $0x2f8] sm:$0xff]
    %v183 = vld [vmem:[#allocation7 + $0x300] sm:$0xff]
    %v184 = vld [vmem:[#allocation7 + $0x308] sm:$0xff]
    %v185 = vld [vmem:[#allocation7 + $0x310] sm:$0xff]
    %v186 = vld [vmem:[#allocation7 + $0x318] sm:$0xff]
    %v187 = vld [vmem:[#allocation7 + $0x320] sm:$0xff]
    %v188 = vld [vmem:[#allocation7 + $0x328] sm:$0xff]
    %v189 = vld [vmem:[#allocation7 + $0x330] sm:$0xff]
    %v190 = vld [vmem:[#allocation7 + $0x338] sm:$0xff]
    %v191 = vld [vmem:[#allocation7 + $0x340] sm:$0xff]
    %v192 = vld [vmem:[#allocation7 + $0x348] sm:$0xff]
    %v193 = vld [vmem:[#allocation7 + $0x350] sm:$0xff]
    %v194 = vld [vmem:[#allocation7 + $0x358] sm:$0xff]
    %v195 = vld [vmem:[#allocation7 + $0x360] sm:$0xff]
    %v196 = vld [vmem:[#allocation7 + $0x368] sm:$0xff]
    %v197 = vld [vmem:[#allocation7 + $0x370] sm:$0xff]
    %v198 = vld [vmem:[#allocation7 + $0x378] sm:$0xff]
    %v199 = vld [vmem:[#allocation7 + $0x380] sm:$0xff]
    %v200 = vld [vmem:[#allocation7 + $0x388] sm:$0xff]
    %v201 = vld [vmem:[#allocation7 + $0x390] sm:$0xff]
    %v202 = vld [vmem:[#allocation7 + $0x398] sm:$0xff]
    %v203 = vld [vmem:[#allocation7 + $0x3a0] sm:$0xff]
    %v204 = vld [vmem:[#allocation7 + $0x3a8] sm:$0xff]
    %v205 = vld [vmem:[#allocation7 + $0x3b0] sm:$0xff]
    %v206 = vld [vmem:[#allocation7 + $0x3b8] sm:$0xff]
    %v207 = vld [vmem:[#allocation7 + $0x3c0] sm:$0xff]
    %v208 = vld [vmem:[#allocation7 + $0x3c8] sm:$0xff]
    %v209 = vld [vmem:[#allocation7 + $0x3d0] sm:$0xff]
    %v210 = vld [vmem:[#allocation7 + $0x3d8] sm:$0xff]
    %v211 = vld [vmem:[#allocation7 + $0x3e0] sm:$0xff]
    %v212 = vld [vmem:[#allocation7 + $0x3e8] sm:$0xff]
    %v213 = vld [vmem:[#allocation7 + $0x3f0] sm:$0xff]
    %v214 = vld [vmem:[#allocation7 + $0x3f8] sm:$0xff]
    %v215 = vld [vmem:[#allocation7 + $0x400] sm:$0xff]
    %v216 = vld [vmem:[#allocation7 + $0x408] sm:$0xff]
    %v217 = vld [vmem:[#allocation7 + $0x410] sm:$0xff]
    %v218 = vld [vmem:[#allocation7 + $0x418] sm:$0xff]
    %v219 = vld [vmem:[#allocation7 + $0x420] sm:$0xff]
    %v220 = vld [vmem:[#allocation7 + $0x428] sm:$0xff]
    %v221 = vld [vmem:[#allocation7 + $0x430] sm:$0xff]
    %v222 = vld [vmem:[#allocation7 + $0x438] sm:$0xff]
    %v223 = vld [vmem:[#allocation7 + $0x440] sm:$0xff]
    %v224 = vld [vmem:[#allocation7 + $0x448] sm:$0xff]
    %v225 = vld [vmem:[#allocation7 + $0x450] sm:$0xff]
    %v226 = vld [vmem:[#allocation7 + $0x458] sm:$0xff]
    %v227 = vld [vmem:[#allocation7 + $0x460] sm:$0xff]
    %v228 = vld [vmem:[#allocation7 + $0x468] sm:$0xff]
    %v229 = vld [vmem:[#allocation7 + $0x470] sm:$0xff]
    %v230 = vld [vmem:[#allocation7 + $0x478] sm:$0xff]
    %v231 = vld [vmem:[#allocation7 + $0x480] sm:$0xff]
    %v232 = vld [vmem:[#allocation7 + $0x488] sm:$0xff]
    %v233 = vld [vmem:[#allocation7 + $0x490] sm:$0xff]
    %v234 = vld [vmem:[#allocation7 + $0x498] sm:$0xff]
    %v235 = vld [vmem:[#allocation7 + $0x4a0] sm:$0xff]
    %v236 = vld [vmem:[#allocation7 + $0x4a8] sm:$0xff]
    %v237 = vld [vmem:[#allocation7 + $0x4b0] sm:$0xff]
    %v238 = vld [vmem:[#allocation7 + $0x4b8] sm:$0xff]
    %v239 = vld [vmem:[#allocation7 + $0x4c0] sm:$0xff]
    %v240 = vld [vmem:[#allocation7 + $0x4c8] sm:$0xff]
    %v241 = vld [vmem:[#allocation7 + $0x4d0] sm:$0xff]
    %v242 = vld [vmem:[#allocation7 + $0x4d8] sm:$0xff]
    %v243 = vld [vmem:[#allocation7 + $0x4e0] sm:$0xff]
    %v244 = vld [vmem:[#allocation7 + $0x4e8] sm:$0xff]
    %v245 = vld [vmem:[#allocation7 + $0x4f0] sm:$0xff]
    %v246 = vld [vmem:[#allocation7 + $0x4f8] sm:$0xff]
    %v247 = vld [vmem:[#allocation7 + $0x500] sm:$0xff]
    %v248 = vld [vmem:[#allocation7 + $0x508] sm:$0xff]
    %v249 = vld [vmem:[#allocation7 + $0x510] sm:$0xff]
    %v250 = vld [vmem:[#allocation7 + $0x518] sm:$0xff]
    %v251 = vld [vmem:[#allocation7 + $0x520] sm:$0xff]
    %v252 = vld [vmem:[#allocation7 + $0x528] sm:$0xff]
    %v253 = vld [vmem:[#allocation7 + $0x530] sm:$0xff]
    %v254 = vld [vmem:[#allocation7 + $0x538] sm:$0xff]
    %v255 = vld [vmem:[#allocation7 + $0x540] sm:$0xff]
    %v256 = vld [vmem:[#allocation7 + $0x548] sm:$0xff]
    %v257 = vld [vmem:[#allocation7 + $0x550] sm:$0xff]
    %v258 = vld [vmem:[#allocation7 + $0x558] sm:$0xff]
    %v259 = vld [vmem:[#allocation7 + $0x560] sm:$0xff]
    %v260 = vld [vmem:[#allocation7 + $0x568] sm:$0xff]
    %v261 = vld [vmem:[#allocation7 + $0x570] sm:$0xff]
    %v262 = vld [vmem:[#allocation7 + $0x578] sm:$0xff]
    %v263 = vld [vmem:[#allocation7 + $0x580] sm:$0xff]
    %v264 = vld [vmem:[#allocation7 + $0x588] sm:$0xff]
    %v265 = vld [vmem:[#allocation7 + $0x590] sm:$0xff]
    %v266 = vld [vmem:[#allocation7 + $0x598] sm:$0xff]
    %v267 = vld [vmem:[#allocation7 + $0x5a0] sm:$0xff]
    %v268 = vld [vmem:[#allocation7 + $0x5a8] sm:$0xff]
    %v269 = vld [vmem:[#allocation7 + $0x5b0] sm:$0xff]
    %v270 = vld [vmem:[#allocation7 + $0x5b8] sm:$0xff]
    %v271 = vld [vmem:[#allocation7 + $0x5c0] sm:$0xff]
    %v272 = vld [vmem:[#allocation7 + $0x5c8] sm:$0xff]
    %v273 = vld [vmem:[#allocation7 + $0x5d0] sm:$0xff]
    %v274 = vld [vmem:[#allocation7 + $0x5d8] sm:$0xff]
    %v275 = vld [vmem:[#allocation7 + $0x5e0] sm:$0xff]
    %v276 = vld [vmem:[#allocation7 + $0x5e8] sm:$0xff]
    %v277 = vld [vmem:[#allocation7 + $0x5f0] sm:$0xff]
    %v278 = vld [vmem:[#allocation7 + $0x5f8] sm:$0xff]
    %v279 = vld [vmem:[#allocation7 + $0x600] sm:$0xff]
    %v280 = vld [vmem:[#allocation7 + $0x608] sm:$0xff]
    %v281 = vld [vmem:[#allocation7 + $0x610] sm:$0xff]
    %v282 = vld [vmem:[#allocation7 + $0x618] sm:$0xff]
    %v283 = vld [vmem:[#allocation7 + $0x620] sm:$0xff]
    %v284 = vld [vmem:[#allocation7 + $0x628] sm:$0xff]
    %v285 = vld [vmem:[#allocation7 + $0x630] sm:$0xff]
    %v286 = vld [vmem:[#allocation7 + $0x638] sm:$0xff]
    %v287 = vld [vmem:[#allocation7 + $0x640] sm:$0xff]
    %v288 = vld [vmem:[#allocation7 + $0x648] sm:$0xff]
    %v289 = vld [vmem:[#allocation7 + $0x650] sm:$0xff]
    %v290 = vld [vmem:[#allocation7 + $0x658] sm:$0xff]
    %v291 = vld [vmem:[#allocation7 + $0x660] sm:$0xff]
    %v292 = vld [vmem:[#allocation7 + $0x668] sm:$0xff]
    %v293 = vld [vmem:[#allocation7 + $0x670] sm:$0xff]
    %v294 = vld [vmem:[#allocation7 + $0x678] sm:$0xff]
    %v295 = vld [vmem:[#allocation7 + $0x680] sm:$0xff]
    %v296 = vld [vmem:[#allocation7 + $0x688] sm:$0xff]
    %v297 = vld [vmem:[#allocation7 + $0x690] sm:$0xff]
    %v298 = vld [vmem:[#allocation7 + $0x698] sm:$0xff]
    %v299 = vld [vmem:[#allocation7 + $0x6a0] sm:$0xff]
    %v300 = vld [vmem:[#allocation7 + $0x6a8] sm:$0xff]
    %v301 = vld [vmem:[#allocation7 + $0x6b0] sm:$0xff]
    %v302 = vld [vmem:[#allocation7 + $0x6b8] sm:$0xff]
    %v303 = vld [vmem:[#allocation7 + $0x6c0] sm:$0xff]
    %v304 = vld [vmem:[#allocation7 + $0x6c8] sm:$0xff]
    %v305 = vld [vmem:[#allocation7 + $0x6d0] sm:$0xff]
    %v306 = vld [vmem:[#allocation7 + $0x6d8] sm:$0xff]
    %v307 = vld [vmem:[#allocation7 + $0x6e0] sm:$0xff]
    %v308 = vld [vmem:[#allocation7 + $0x6e8] sm:$0xff]
    %v309 = vld [vmem:[#allocation7 + $0x6f0] sm:$0xff]
    %v310 = vld [vmem:[#allocation7 + $0x6f8] sm:$0xff]
    %v311 = vld [vmem:[#allocation7 + $0x700] sm:$0xff]
    %v312 = vld [vmem:[#allocation7 + $0x708] sm:$0xff]
    %v313 = vld [vmem:[#allocation7 + $0x710] sm:$0xff]
    %v314 = vld [vmem:[#allocation7 + $0x718] sm:$0xff]
    %v315 = vld [vmem:[#allocation7 + $0x720] sm:$0xff]
    %v316 = vld [vmem:[#allocation7 + $0x728] sm:$0xff]
    %v317 = vld [vmem:[#allocation7 + $0x730] sm:$0xff]
    %v318 = vld [vmem:[#allocation7 + $0x738] sm:$0xff]
    %v319 = vld [vmem:[#allocation7 + $0x740] sm:$0xff]
    %v320 = vld [vmem:[#allocation7 + $0x748] sm:$0xff]
    %v321 = vld [vmem:[#allocation7 + $0x750] sm:$0xff]
    %v322 = vld [vmem:[#allocation7 + $0x758] sm:$0xff]
    %v323 = vld [vmem:[#allocation7 + $0x760] sm:$0xff]
    %v324 = vld [vmem:[#allocation7 + $0x768] sm:$0xff]
    %v325 = vld [vmem:[#allocation7 + $0x770] sm:$0xff]
    %v326 = vld [vmem:[#allocation7 + $0x778] sm:$0xff]
    %v327 = vld [vmem:[#allocation7 + $0x780] sm:$0xff]
    %v328 = vld [vmem:[#allocation7 + $0x788] sm:$0xff]
    %v329 = vld [vmem:[#allocation7 + $0x790] sm:$0xff]
    %v330 = vld [vmem:[#allocation7 + $0x798] sm:$0xff]
    %v331 = vld [vmem:[#allocation7 + $0x7a0] sm:$0xff]
    %v332 = vld [vmem:[#allocation7 + $0x7a8] sm:$0xff]
    %v333 = vld [vmem:[#allocation7 + $0x7b0] sm:$0xff]
    %v334 = vld [vmem:[#allocation7 + $0x7b8] sm:$0xff]
    %v335 = vld [vmem:[#allocation7 + $0x7c0] sm:$0xff]
    %v336 = vld [vmem:[#allocation7 + $0x7c8] sm:$0xff]
    %v337 = vld [vmem:[#allocation7 + $0x7d0] sm:$0xff]
    %v338 = vld [vmem:[#allocation7 + $0x7d8] sm:$0xff]
    %v339 = vld [vmem:[#allocation7 + $0x7e0] sm:$0xff]
    %v340 = vld [vmem:[#allocation7 + $0x7e8] sm:$0xff]
    %v341 = vld [vmem:[#allocation7 + $0x7f0] sm:$0xff]
    %v342 = vld [vmem:[#allocation7 + $0x7f8] sm:$0xff]
    %v343 = vld [vmem:[#allocation7 + $0x800] sm:$0xff]
    %v344 = vld [vmem:[#allocation7 + $0x808] sm:$0xff]
    %v345 = vld [vmem:[#allocation7 + $0x810] sm:$0xff]
    %v346 = vld [vmem:[#allocation7 + $0x818] sm:$0xff]
    %v347 = vld [vmem:[#allocation7 + $0x820] sm:$0xff]
    %v348 = vld [vmem:[#allocation7 + $0x828] sm:$0xff]
    %v349 = vld [vmem:[#allocation7 + $0x830] sm:$0xff]
    %v350 = vld [vmem:[#allocation7 + $0x838] sm:$0xff]
    %v351 = vld [vmem:[#allocation7 + $0x840] sm:$0xff]
    %v352 = vld [vmem:[#allocation7 + $0x848] sm:$0xff]
    %v353 = vld [vmem:[#allocation7 + $0x850] sm:$0xff]
    %v354 = vld [vmem:[#allocation7 + $0x858] sm:$0xff]
    %v355 = vld [vmem:[#allocation7 + $0x860] sm:$0xff]
    %v356 = vld [vmem:[#allocation7 + $0x868] sm:$0xff]
    %v357 = vld [vmem:[#allocation7 + $0x870] sm:$0xff]
    %v358 = vld [vmem:[#allocation7 + $0x878] sm:$0xff]
    %v359 = vld [vmem:[#allocation7 + $0x880] sm:$0xff]
    %v360 = vld [vmem:[#allocation7 + $0x888] sm:$0xff]
    %v361 = vld [vmem:[#allocation7 + $0x890] sm:$0xff]
    %v362 = vld [vmem:[#allocation7 + $0x898] sm:$0xff]
    %v363 = vld [vmem:[#allocation7 + $0x8a0] sm:$0xff]
    %v364 = vld [vmem:[#allocation7 + $0x8a8] sm:$0xff]
    %v365 = vld [vmem:[#allocation7 + $0x8b0] sm:$0xff]
    %v366 = vld [vmem:[#allocation7 + $0x8b8] sm:$0xff]
    %v367 = vld [vmem:[#allocation7 + $0x8c0] sm:$0xff]
    %v368 = vld [vmem:[#allocation7 + $0x8c8] sm:$0xff]
    %v369 = vld [vmem:[#allocation7 + $0x8d0] sm:$0xff]
    %v370 = vld [vmem:[#allocation7 + $0x8d8] sm:$0xff]
    %v371 = vld [vmem:[#allocation7 + $0x8e0] sm:$0xff]
    %v372 = vld [vmem:[#allocation7 + $0x8e8] sm:$0xff]
    %v373 = vld [vmem:[#allocation7 + $0x8f0] sm:$0xff]
    %v374 = vld [vmem:[#allocation7 + $0x8f8] sm:$0xff]
    %v375 = vld [vmem:[#allocation7 + $0x900] sm:$0xff]
    %v376 = vld [vmem:[#allocation7 + $0x908] sm:$0xff]
    %v377 = vld [vmem:[#allocation7 + $0x910] sm:$0xff]
    %v378 = vld [vmem:[#allocation7 + $0x918] sm:$0xff]
    %v379 = vld [vmem:[#allocation7 + $0x920] sm:$0xff]
    %v380 = vld [vmem:[#allocation7 + $0x928] sm:$0xff]
    %v381 = vld [vmem:[#allocation7 + $0x930] sm:$0xff]
    %v382 = vld [vmem:[#allocation7 + $0x938] sm:$0xff]
    %v383 = vld [vmem:[#allocation7 + $0x940] sm:$0xff]
    %v384 = vld [vmem:[#allocation7 + $0x948] sm:$0xff]
    %v385 = vld [vmem:[#allocation7 + $0x950] sm:$0xff]
    %v386 = vld [vmem:[#allocation7 + $0x958] sm:$0xff]
    %v387 = vld [vmem:[#allocation7 + $0x960] sm:$0xff]
    %v388 = vld [vmem:[#allocation7 + $0x968] sm:$0xff]
    %v389 = vld [vmem:[#allocation7 + $0x970] sm:$0xff]
    %v390 = vld [vmem:[#allocation7 + $0x978] sm:$0xff]
    %v391 = vld [vmem:[#allocation7 + $0x980] sm:$0xff]
    %v392 = vld [vmem:[#allocation7 + $0x988] sm:$0xff]
    %v393 = vld [vmem:[#allocation7 + $0x990] sm:$0xff]
    %v394 = vld [vmem:[#allocation7 + $0x998] sm:$0xff]
    %v395 = vld [vmem:[#allocation7 + $0x9a0] sm:$0xff]
    %v396 = vld [vmem:[#allocation7 + $0x9a8] sm:$0xff]
    %v397 = vld [vmem:[#allocation7 + $0x9b0] sm:$0xff]
    %v398 = vld [vmem:[#allocation7 + $0x9b8] sm:$0xff]
    %v399 = vld [vmem:[#allocation7 + $0x9c0] sm:$0xff]
    %v400 = vld [vmem:[#allocation7 + $0x9c8] sm:$0xff]
    %v401 = vld [vmem:[#allocation7 + $0x9d0] sm:$0xff]
    %v402 = vld [vmem:[#allocation7 + $0x9d8] sm:$0xff]
    %v403 = vld [vmem:[#allocation7 + $0x9e0] sm:$0xff]
    %v404 = vld [vmem:[#allocation7 + $0x9e8] sm:$0xff]
    %v405 = vld [vmem:[#allocation7 + $0x9f0] sm:$0xff]
    %v406 = vld [vmem:[#allocation7 + $0x9f8] sm:$0xff]
    %v407 = vunpack.c.0.s8 %v87
    %v408 = vunpack.c.0.s8 %v88
    %v409 = vunpack.c.0.s8 %v89
    %v410 = vunpack.c.0.s8 %v90
    %v411 = vunpack.c.0.s8 %v91
    %v412 = vunpack.c.0.s8 %v92
    %v413 = vunpack.c.0.s8 %v93
    %v414 = vunpack.c.0.s8 %v94
    %v415 = vunpack.c.1.s8 %v87
    %v416 = vunpack.c.1.s8 %v88
    %v417 = vunpack.c.1.s8 %v89
    %v418 = vunpack.c.1.s8 %v90
    %v419 = vunpack.c.1.s8 %v91
    %v420 = vunpack.c.1.s8 %v92
    %v421 = vunpack.c.1.s8 %v93
    %v422 = vunpack.c.1.s8 %v94
    %v423 = vunpack.c.2.s8 %v87
    %v424 = vunpack.c.2.s8 %v88
    %v425 = vunpack.c.2.s8 %v89
    %v426 = vunpack.c.2.s8 %v90
    %v427 = vunpack.c.2.s8 %v91
    %v428 = vunpack.c.2.s8 %v92
    %v429 = vunpack.c.2.s8 %v93
    %v430 = vunpack.c.2.s8 %v94
    %v431 = vunpack.c.3.s8 %v87
    %v432 = vunpack.c.3.s8 %v88
    %v433 = vunpack.c.3.s8 %v89
    %v434 = vunpack.c.3.s8 %v90
    %v435 = vunpack.c.3.s8 %v91
    %v436 = vunpack.c.3.s8 %v92
    %v437 = vunpack.c.3.s8 %v93
    %v438 = vunpack.c.3.s8 %v94
    %v439 = vunpack.c.0.s8 %v95
    %v440 = vunpack.c.0.s8 %v96
    %v441 = vunpack.c.0.s8 %v97
    %v442 = vunpack.c.0.s8 %v98
    %v443 = vunpack.c.0.s8 %v99
    %v444 = vunpack.c.0.s8 %v100
    %v445 = vunpack.c.0.s8 %v101
    %v446 = vunpack.c.0.s8 %v102
    %v447 = vunpack.c.1.s8 %v95
    %v448 = vunpack.c.1.s8 %v96
    %v449 = vunpack.c.1.s8 %v97
    %v450 = vunpack.c.1.s8 %v98
    %v451 = vunpack.c.1.s8 %v99
    %v452 = vunpack.c.1.s8 %v100
    %v453 = vunpack.c.1.s8 %v101
    %v454 = vunpack.c.1.s8 %v102
    %v455 = vunpack.c.2.s8 %v95
    %v456 = vunpack.c.2.s8 %v96
    %v457 = vunpack.c.2.s8 %v97
    %v458 = vunpack.c.2.s8 %v98
    %v459 = vunpack.c.2.s8 %v99
    %v460 = vunpack.c.2.s8 %v100
    %v461 = vunpack.c.2.s8 %v101
    %v462 = vunpack.c.2.s8 %v102
    %v463 = vunpack.c.3.s8 %v95
    %v464 = vunpack.c.3.s8 %v96
    %v465 = vunpack.c.3.s8 %v97
    %v466 = vunpack.c.3.s8 %v98
    %v467 = vunpack.c.3.s8 %v99
    %v468 = vunpack.c.3.s8 %v100
    %v469 = vunpack.c.3.s8 %v101
    %v470 = vunpack.c.3.s8 %v102
    %v471 = vunpack.c.0.s8 %v103
    %v472 = vunpack.c.0.s8 %v104
    %v473 = vunpack.c.0.s8 %v105
    %v474 = vunpack.c.0.s8 %v106
    %v475 = vunpack.c.0.s8 %v107
    %v476 = vunpack.c.0.s8 %v108
    %v477 = vunpack.c.0.s8 %v109
    %v478 = vunpack.c.0.s8 %v110
    %v479 = vunpack.c.1.s8 %v103
    %v480 = vunpack.c.1.s8 %v104
    %v481 = vunpack.c.1.s8 %v105
    %v482 = vunpack.c.1.s8 %v106
    %v483 = vunpack.c.1.s8 %v107
    %v484 = vunpack.c.1.s8 %v108
    %v485 = vunpack.c.1.s8 %v109
    %v486 = vunpack.c.1.s8 %v110
    %v487 = vunpack.c.2.s8 %v103
    %v488 = vunpack.c.2.s8 %v104
    %v489 = vunpack.c.2.s8 %v105
    %v490 = vunpack.c.2.s8 %v106
    %v491 = vunpack.c.2.s8 %v107
    %v492 = vunpack.c.2.s8 %v108
    %v493 = vunpack.c.2.s8 %v109
    %v494 = vunpack.c.2.s8 %v110
    %v495 = vunpack.c.3.s8 %v103
    %v496 = vunpack.c.3.s8 %v104
    %v497 = vunpack.c.3.s8 %v105
    %v498 = vunpack.c.3.s8 %v106
    %v499 = vunpack.c.3.s8 %v107
    %v500 = vunpack.c.3.s8 %v108
    %v501 = vunpack.c.3.s8 %v109
    %v502 = vunpack.c.3.s8 %v110
    %v503 = vunpack.c.0.s8 %v111
    %v504 = vunpack.c.0.s8 %v112
    %v505 = vunpack.c.0.s8 %v113
    %v506 = vunpack.c.0.s8 %v114
    %v507 = vunpack.c.0.s8 %v115
    %v508 = vunpack.c.0.s8 %v116
    %v509 = vunpack.c.0.s8 %v117
    %v510 = vunpack.c.0.s8 %v118
    %v511 = vunpack.c.1.s8 %v111
    %v512 = vunpack.c.1.s8 %v112
    %v513 = vunpack.c.1.s8 %v113
    %v514 = vunpack.c.1.s8 %v114
    %v515 = vunpack.c.1.s8 %v115
    %v516 = vunpack.c.1.s8 %v116
    %v517 = vunpack.c.1.s8 %v117
    %v518 = vunpack.c.1.s8 %v118
    %v519 = vunpack.c.2.s8 %v111
    %v520 = vunpack.c.2.s8 %v112
    %v521 = vunpack.c.2.s8 %v113
    %v522 = vunpack.c.2.s8 %v114
    %v523 = vunpack.c.2.s8 %v115
    %v524 = vunpack.c.2.s8 %v116
    %v525 = vunpack.c.2.s8 %v117
    %v526 = vunpack.c.2.s8 %v118
    %v527 = vunpack.c.3.s8 %v111
    %v528 = vunpack.c.3.s8 %v112
    %v529 = vunpack.c.3.s8 %v113
    %v530 = vunpack.c.3.s8 %v114
    %v531 = vunpack.c.3.s8 %v115
    %v532 = vunpack.c.3.s8 %v116
    %v533 = vunpack.c.3.s8 %v117
    %v534 = vunpack.c.3.s8 %v118
    %v535 = vunpack.c.0.s8 %v119
    %v536 = vunpack.c.0.s8 %v120
    %v537 = vunpack.c.0.s8 %v121
    %v538 = vunpack.c.0.s8 %v122
    %v539 = vunpack.c.0.s8 %v123
    %v540 = vunpack.c.0.s8 %v124
    %v541 = vunpack.c.0.s8 %v125
    %v542 = vunpack.c.0.s8 %v126
    %v543 = vunpack.c.1.s8 %v119
    %v544 = vunpack.c.1.s8 %v120
    %v545 = vunpack.c.1.s8 %v121
    %v546 = vunpack.c.1.s8 %v122
    %v547 = vunpack.c.1.s8 %v123
    %v548 = vunpack.c.1.s8 %v124
    %v549 = vunpack.c.1.s8 %v125
    %v550 = vunpack.c.1.s8 %v126
    %v551 = vunpack.c.2.s8 %v119
    %v552 = vunpack.c.2.s8 %v120
    %v553 = vunpack.c.2.s8 %v121
    %v554 = vunpack.c.2.s8 %v122
    %v555 = vunpack.c.2.s8 %v123
    %v556 = vunpack.c.2.s8 %v124
    %v557 = vunpack.c.2.s8 %v125
    %v558 = vunpack.c.2.s8 %v126
    %v559 = vunpack.c.3.s8 %v119
    %v560 = vunpack.c.3.s8 %v120
    %v561 = vunpack.c.3.s8 %v121
    %v562 = vunpack.c.3.s8 %v122
    %v563 = vunpack.c.3.s8 %v123
    %v564 = vunpack.c.3.s8 %v124
    %v565 = vunpack.c.3.s8 %v125
    %v566 = vunpack.c.3.s8 %v126
    %v567 = vunpack.c.0.s8 %v127
    %v568 = vunpack.c.0.s8 %v128
    %v569 = vunpack.c.0.s8 %v129
    %v570 = vunpack.c.0.s8 %v130
    %v571 = vunpack.c.0.s8 %v131
    %v572 = vunpack.c.0.s8 %v132
    %v573 = vunpack.c.0.s8 %v133
    %v574 = vunpack.c.0.s8 %v134
    %v575 = vunpack.c.1.s8 %v127
    %v576 = vunpack.c.1.s8 %v128
    %v577 = vunpack.c.1.s8 %v129
    %v578 = vunpack.c.1.s8 %v130
    %v579 = vunpack.c.1.s8 %v131
    %v580 = vunpack.c.1.s8 %v132
    %v581 = vunpack.c.1.s8 %v133
    %v582 = vunpack.c.1.s8 %v134
    %v583 = vunpack.c.2.s8 %v127
    %v584 = vunpack.c.2.s8 %v128
    %v585 = vunpack.c.2.s8 %v129
    %v586 = vunpack.c.2.s8 %v130
    %v587 = vunpack.c.2.s8 %v131
    %v588 = vunpack.c.2.s8 %v132
    %v589 = vunpack.c.2.s8 %v133
    %v590 = vunpack.c.2.s8 %v134
    %v591 = vunpack.c.3.s8 %v127
    %v592 = vunpack.c.3.s8 %v128
    %v593 = vunpack.c.3.s8 %v129
    %v594 = vunpack.c.3.s8 %v130
    %v595 = vunpack.c.3.s8 %v131
    %v596 = vunpack.c.3.s8 %v132
    %v597 = vunpack.c.3.s8 %v133
    %v598 = vunpack.c.3.s8 %v134
    %v599 = vunpack.c.0.s8 %v135
    %v600 = vunpack.c.0.s8 %v136
    %v601 = vunpack.c.0.s8 %v137
    %v602 = vunpack.c.0.s8 %v138
    %v603 = vunpack.c.0.s8 %v139
    %v604 = vunpack.c.0.s8 %v140
    %v605 = vunpack.c.0.s8 %v141
    %v606 = vunpack.c.0.s8 %v142
    %v607 = vunpack.c.1.s8 %v135
    %v608 = vunpack.c.1.s8 %v136
    %v609 = vunpack.c.1.s8 %v137
    %v610 = vunpack.c.1.s8 %v138
    %v611 = vunpack.c.1.s8 %v139
    %v612 = vunpack.c.1.s8 %v140
    %v613 = vunpack.c.1.s8 %v141
    %v614 = vunpack.c.1.s8 %v142
    %v615 = vunpack.c.2.s8 %v135
    %v616 = vunpack.c.2.s8 %v136
    %v617 = vunpack.c.2.s8 %v137
    %v618 = vunpack.c.2.s8 %v138
    %v619 = vunpack.c.2.s8 %v139
    %v620 = vunpack.c.2.s8 %v140
    %v621 = vunpack.c.2.s8 %v141
    %v622 = vunpack.c.2.s8 %v142
    %v623 = vunpack.c.3.s8 %v135
    %v624 = vunpack.c.3.s8 %v136
    %v625 = vunpack.c.3.s8 %v137
    %v626 = vunpack.c.3.s8 %v138
    %v627 = vunpack.c.3.s8 %v139
    %v628 = vunpack.c.3.s8 %v140
    %v629 = vunpack.c.3.s8 %v141
    %v630 = vunpack.c.3.s8 %v142
    %v631 = vunpack.c.0.s8 %v143
    %v632 = vunpack.c.0.s8 %v144
    %v633 = vunpack.c.0.s8 %v145
    %v634 = vunpack.c.0.s8 %v146
    %v635 = vunpack.c.0.s8 %v147
    %v636 = vunpack.c.0.s8 %v148
    %v637 = vunpack.c.0.s8 %v149
    %v638 = vunpack.c.0.s8 %v150
    %v639 = vunpack.c.1.s8 %v143
    %v640 = vunpack.c.1.s8 %v144
    %v641 = vunpack.c.1.s8 %v145
    %v642 = vunpack.c.1.s8 %v146
    %v643 = vunpack.c.1.s8 %v147
    %v644 = vunpack.c.1.s8 %v148
    %v645 = vunpack.c.1.s8 %v149
    %v646 = vunpack.c.1.s8 %v150
    %v647 = vunpack.c.2.s8 %v143
    %v648 = vunpack.c.2.s8 %v144
    %v649 = vunpack.c.2.s8 %v145
    %v650 = vunpack.c.2.s8 %v146
    %v651 = vunpack.c.2.s8 %v147
    %v652 = vunpack.c.2.s8 %v148
    %v653 = vunpack.c.2.s8 %v149
    %v654 = vunpack.c.2.s8 %v150
    %v655 = vunpack.c.3.s8 %v143
    %v656 = vunpack.c.3.s8 %v144
    %v657 = vunpack.c.3.s8 %v145
    %v658 = vunpack.c.3.s8 %v146
    %v659 = vunpack.c.3.s8 %v147
    %v660 = vunpack.c.3.s8 %v148
    %v661 = vunpack.c.3.s8 %v149
    %v662 = vunpack.c.3.s8 %v150
    %v663 = vunpack.c.0.s8 %v151
    %v664 = vunpack.c.0.s8 %v152
    %v665 = vunpack.c.0.s8 %v153
    %v666 = vunpack.c.0.s8 %v154
    %v667 = vunpack.c.0.s8 %v155
    %v668 = vunpack.c.0.s8 %v156
    %v669 = vunpack.c.0.s8 %v157
    %v670 = vunpack.c.0.s8 %v158
    %v671 = vunpack.c.1.s8 %v151
    %v672 = vunpack.c.1.s8 %v152
    %v673 = vunpack.c.1.s8 %v153
    %v674 = vunpack.c.1.s8 %v154
    %v675 = vunpack.c.1.s8 %v155
    %v676 = vunpack.c.1.s8 %v156
    %v677 = vunpack.c.1.s8 %v157
    %v678 = vunpack.c.1.s8 %v158
    %v679 = vunpack.c.2.s8 %v151
    %v680 = vunpack.c.2.s8 %v152
    %v681 = vunpack.c.2.s8 %v153
    %v682 = vunpack.c.2.s8 %v154
    %v683 = vunpack.c.2.s8 %v155
    %v684 = vunpack.c.2.s8 %v156
    %v685 = vunpack.c.2.s8 %v157
    %v686 = vunpack.c.2.s8 %v158
    %v687 = vunpack.c.3.s8 %v151
    %v688 = vunpack.c.3.s8 %v152
    %v689 = vunpack.c.3.s8 %v153
    %v690 = vunpack.c.3.s8 %v154
    %v691 = vunpack.c.3.s8 %v155
    %v692 = vunpack.c.3.s8 %v156
    %v693 = vunpack.c.3.s8 %v157
    %v694 = vunpack.c.3.s8 %v158
    %v695 = vunpack.c.0.s8 %v159
    %v696 = vunpack.c.0.s8 %v160
    %v697 = vunpack.c.0.s8 %v161
    %v698 = vunpack.c.0.s8 %v162
    %v699 = vunpack.c.0.s8 %v163
    %v700 = vunpack.c.0.s8 %v164
    %v701 = vunpack.c.0.s8 %v165
    %v702 = vunpack.c.0.s8 %v166
    %v703 = vunpack.c.1.s8 %v159
    %v704 = vunpack.c.1.s8 %v160
    %v705 = vunpack.c.1.s8 %v161
    %v706 = vunpack.c.1.s8 %v162
    %v707 = vunpack.c.1.s8 %v163
    %v708 = vunpack.c.1.s8 %v164
    %v709 = vunpack.c.1.s8 %v165
    %v710 = vunpack.c.1.s8 %v166
    %v711 = vunpack.c.2.s8 %v159
    %v712 = vunpack.c.2.s8 %v160
    %v713 = vunpack.c.2.s8 %v161
    %v714 = vunpack.c.2.s8 %v162
    %v715 = vunpack.c.2.s8 %v163
    %v716 = vunpack.c.2.s8 %v164
    %v717 = vunpack.c.2.s8 %v165
    %v718 = vunpack.c.2.s8 %v166
    %v719 = vunpack.c.3.s8 %v159
    %v720 = vunpack.c.3.s8 %v160
    %v721 = vunpack.c.3.s8 %v161
    %v722 = vunpack.c.3.s8 %v162
    %v723 = vunpack.c.3.s8 %v163
    %v724 = vunpack.c.3.s8 %v164
    %v725 = vunpack.c.3.s8 %v165
    %v726 = vunpack.c.3.s8 %v166
    %v727 = vunpack.c.0.s8 %v167
    %v728 = vunpack.c.0.s8 %v168
    %v729 = vunpack.c.0.s8 %v169
    %v730 = vunpack.c.0.s8 %v170
    %v731 = vunpack.c.0.s8 %v171
    %v732 = vunpack.c.0.s8 %v172
    %v733 = vunpack.c.0.s8 %v173
    %v734 = vunpack.c.0.s8 %v174
    %v735 = vunpack.c.1.s8 %v167
    %v736 = vunpack.c.1.s8 %v168
    %v737 = vunpack.c.1.s8 %v169
    %v738 = vunpack.c.1.s8 %v170
    %v739 = vunpack.c.1.s8 %v171
    %v740 = vunpack.c.1.s8 %v172
    %v741 = vunpack.c.1.s8 %v173
    %v742 = vunpack.c.1.s8 %v174
    %v743 = vunpack.c.2.s8 %v167
    %v744 = vunpack.c.2.s8 %v168
    %v745 = vunpack.c.2.s8 %v169
    %v746 = vunpack.c.2.s8 %v170
    %v747 = vunpack.c.2.s8 %v171
    %v748 = vunpack.c.2.s8 %v172
    %v749 = vunpack.c.2.s8 %v173
    %v750 = vunpack.c.2.s8 %v174
    %v751 = vunpack.c.3.s8 %v167
    %v752 = vunpack.c.3.s8 %v168
    %v753 = vunpack.c.3.s8 %v169
    %v754 = vunpack.c.3.s8 %v170
    %v755 = vunpack.c.3.s8 %v171
    %v756 = vunpack.c.3.s8 %v172
    %v757 = vunpack.c.3.s8 %v173
    %v758 = vunpack.c.3.s8 %v174
    %v759 = vunpack.c.0.s8 %v175
    %v760 = vunpack.c.0.s8 %v176
    %v761 = vunpack.c.0.s8 %v177
    %v762 = vunpack.c.0.s8 %v178
    %v763 = vunpack.c.0.s8 %v179
    %v764 = vunpack.c.0.s8 %v180
    %v765 = vunpack.c.0.s8 %v181
    %v766 = vunpack.c.0.s8 %v182
    %v767 = vunpack.c.1.s8 %v175
    %v768 = vunpack.c.1.s8 %v176
    %v769 = vunpack.c.1.s8 %v177
    %v770 = vunpack.c.1.s8 %v178
    %v771 = vunpack.c.1.s8 %v179
    %v772 = vunpack.c.1.s8 %v180
    %v773 = vunpack.c.1.s8 %v181
    %v774 = vunpack.c.1.s8 %v182
    %v775 = vunpack.c.2.s8 %v175
    %v776 = vunpack.c.2.s8 %v176
    %v777 = vunpack.c.2.s8 %v177
    %v778 = vunpack.c.2.s8 %v178
    %v779 = vunpack.c.2.s8 %v179
    %v780 = vunpack.c.2.s8 %v180
    %v781 = vunpack.c.2.s8 %v181
    %v782 = vunpack.c.2.s8 %v182
    %v783 = vunpack.c.3.s8 %v175
    %v784 = vunpack.c.3.s8 %v176
    %v785 = vunpack.c.3.s8 %v177
    %v786 = vunpack.c.3.s8 %v178
    %v787 = vunpack.c.3.s8 %v179
    %v788 = vunpack.c.3.s8 %v180
    %v789 = vunpack.c.3.s8 %v181
    %v790 = vunpack.c.3.s8 %v182
    %v791 = vunpack.c.0.s8 %v183
    %v792 = vunpack.c.0.s8 %v184
    %v793 = vunpack.c.0.s8 %v185
    %v794 = vunpack.c.0.s8 %v186
    %v795 = vunpack.c.0.s8 %v187
    %v796 = vunpack.c.0.s8 %v188
    %v797 = vunpack.c.0.s8 %v189
    %v798 = vunpack.c.0.s8 %v190
    %v799 = vunpack.c.1.s8 %v183
    %v800 = vunpack.c.1.s8 %v184
    %v801 = vunpack.c.1.s8 %v185
    %v802 = vunpack.c.1.s8 %v186
    %v803 = vunpack.c.1.s8 %v187
    %v804 = vunpack.c.1.s8 %v188
    %v805 = vunpack.c.1.s8 %v189
    %v806 = vunpack.c.1.s8 %v190
    %v807 = vunpack.c.2.s8 %v183
    %v808 = vunpack.c.2.s8 %v184
    %v809 = vunpack.c.2.s8 %v185
    %v810 = vunpack.c.2.s8 %v186
    %v811 = vunpack.c.2.s8 %v187
    %v812 = vunpack.c.2.s8 %v188
    %v813 = vunpack.c.2.s8 %v189
    %v814 = vunpack.c.2.s8 %v190
    %v815 = vunpack.c.3.s8 %v183
    %v816 = vunpack.c.3.s8 %v184
    %v817 = vunpack.c.3.s8 %v185
    %v818 = vunpack.c.3.s8 %v186
    %v819 = vunpack.c.3.s8 %v187
    %v820 = vunpack.c.3.s8 %v188
    %v821 = vunpack.c.3.s8 %v189
    %v822 = vunpack.c.3.s8 %v190
    %v823 = vunpack.c.0.s8 %v191
    %v824 = vunpack.c.0.s8 %v192
    %v825 = vunpack.c.0.s8 %v193
    %v826 = vunpack.c.0.s8 %v194
    %v827 = vunpack.c.0.s8 %v195
    %v828 = vunpack.c.0.s8 %v196
    %v829 = vunpack.c.0.s8 %v197
    %v830 = vunpack.c.0.s8 %v198
    %v831 = vunpack.c.1.s8 %v191
    %v832 = vunpack.c.1.s8 %v192
    %v833 = vunpack.c.1.s8 %v193
    %v834 = vunpack.c.1.s8 %v194
    %v835 = vunpack.c.1.s8 %v195
    %v836 = vunpack.c.1.s8 %v196
    %v837 = vunpack.c.1.s8 %v197
    %v838 = vunpack.c.1.s8 %v198
    %v839 = vunpack.c.2.s8 %v191
    %v840 = vunpack.c.2.s8 %v192
    %v841 = vunpack.c.2.s8 %v193
    %v842 = vunpack.c.2.s8 %v194
    %v843 = vunpack.c.2.s8 %v195
    %v844 = vunpack.c.2.s8 %v196
    %v845 = vunpack.c.2.s8 %v197
    %v846 = vunpack.c.2.s8 %v198
    %v847 = vunpack.c.3.s8 %v191
    %v848 = vunpack.c.3.s8 %v192
    %v849 = vunpack.c.3.s8 %v193
    %v850 = vunpack.c.3.s8 %v194
    %v851 = vunpack.c.3.s8 %v195
    %v852 = vunpack.c.3.s8 %v196
    %v853 = vunpack.c.3.s8 %v197
    %v854 = vunpack.c.3.s8 %v198
    %v855 = vunpack.c.0.s8 %v199
    %v856 = vunpack.c.0.s8 %v200
    %v857 = vunpack.c.0.s8 %v201
    %v858 = vunpack.c.0.s8 %v202
    %v859 = vunpack.c.0.s8 %v203
    %v860 = vunpack.c.0.s8 %v204
    %v861 = vunpack.c.0.s8 %v205
    %v862 = vunpack.c.0.s8 %v206
    %v863 = vunpack.c.1.s8 %v199
    %v864 = vunpack.c.1.s8 %v200
    %v865 = vunpack.c.1.s8 %v201
    %v866 = vunpack.c.1.s8 %v202
    %v867 = vunpack.c.1.s8 %v203
    %v868 = vunpack.c.1.s8 %v204
    %v869 = vunpack.c.1.s8 %v205
    %v870 = vunpack.c.1.s8 %v206
    %v871 = vunpack.c.2.s8 %v199
    %v872 = vunpack.c.2.s8 %v200
    %v873 = vunpack.c.2.s8 %v201
    %v874 = vunpack.c.2.s8 %v202
    %v875 = vunpack.c.2.s8 %v203
    %v876 = vunpack.c.2.s8 %v204
    %v877 = vunpack.c.2.s8 %v205
    %v878 = vunpack.c.2.s8 %v206
    %v879 = vunpack.c.3.s8 %v199
    %v880 = vunpack.c.3.s8 %v200
    %v881 = vunpack.c.3.s8 %v201
    %v882 = vunpack.c.3.s8 %v202
    %v883 = vunpack.c.3.s8 %v203
    %v884 = vunpack.c.3.s8 %v204
    %v885 = vunpack.c.3.s8 %v205
    %v886 = vunpack.c.3.s8 %v206
    %v887 = vunpack.c.0.s8 %v207
    %v888 = vunpack.c.0.s8 %v208
    %v889 = vunpack.c.0.s8 %v209
    %v890 = vunpack.c.0.s8 %v210
    %v891 = vunpack.c.0.s8 %v211
    %v892 = vunpack.c.0.s8 %v212
    %v893 = vunpack.c.0.s8 %v213
    %v894 = vunpack.c.0.s8 %v214
    %v895 = vunpack.c.1.s8 %v207
    %v896 = vunpack.c.1.s8 %v208
    %v897 = vunpack.c.1.s8 %v209
    %v898 = vunpack.c.1.s8 %v210
    %v899 = vunpack.c.1.s8 %v211
    %v900 = vunpack.c.1.s8 %v212
    %v901 = vunpack.c.1.s8 %v213
    %v902 = vunpack.c.1.s8 %v214
    %v903 = vunpack.c.2.s8 %v207
    %v904 = vunpack.c.2.s8 %v208
    %v905 = vunpack.c.2.s8 %v209
    %v906 = vunpack.c.2.s8 %v210
    %v907 = vunpack.c.2.s8 %v211
    %v908 = vunpack.c.2.s8 %v212
    %v909 = vunpack.c.2.s8 %v213
    %v910 = vunpack.c.2.s8 %v214
    %v911 = vunpack.c.3.s8 %v207
    %v912 = vunpack.c.3.s8 %v208
    %v913 = vunpack.c.3.s8 %v209
    %v914 = vunpack.c.3.s8 %v210
    %v915 = vunpack.c.3.s8 %v211
    %v916 = vunpack.c.3.s8 %v212
    %v917 = vunpack.c.3.s8 %v213
    %v918 = vunpack.c.3.s8 %v214
    %v919 = vunpack.c.0.s8 %v215
    %v920 = vunpack.c.0.s8 %v216
    %v921 = vunpack.c.0.s8 %v217
    %v922 = vunpack.c.0.s8 %v218
    %v923 = vunpack.c.0.s8 %v219
    %v924 = vunpack.c.0.s8 %v220
    %v925 = vunpack.c.0.s8 %v221
    %v926 = vunpack.c.0.s8 %v222
    %v927 = vunpack.c.1.s8 %v215
    %v928 = vunpack.c.1.s8 %v216
    %v929 = vunpack.c.1.s8 %v217
    %v930 = vunpack.c.1.s8 %v218
    %v931 = vunpack.c.1.s8 %v219
    %v932 = vunpack.c.1.s8 %v220
    %v933 = vunpack.c.1.s8 %v221
    %v934 = vunpack.c.1.s8 %v222
    %v935 = vunpack.c.2.s8 %v215
    %v936 = vunpack.c.2.s8 %v216
    %v937 = vunpack.c.2.s8 %v217
    %v938 = vunpack.c.2.s8 %v218
    %v939 = vunpack.c.2.s8 %v219
    %v940 = vunpack.c.2.s8 %v220
    %v941 = vunpack.c.2.s8 %v221
    %v942 = vunpack.c.2.s8 %v222
    %v943 = vunpack.c.3.s8 %v215
    %v944 = vunpack.c.3.s8 %v216
    %v945 = vunpack.c.3.s8 %v217
    %v946 = vunpack.c.3.s8 %v218
    %v947 = vunpack.c.3.s8 %v219
    %v948 = vunpack.c.3.s8 %v220
    %v949 = vunpack.c.3.s8 %v221
    %v950 = vunpack.c.3.s8 %v222
    %v951 = vunpack.c.0.s8 %v223
    %v952 = vunpack.c.0.s8 %v224
    %v953 = vunpack.c.0.s8 %v225
    %v954 = vunpack.c.0.s8 %v226
    %v955 = vunpack.c.0.s8 %v227
    %v956 = vunpack.c.0.s8 %v228
    %v957 = vunpack.c.0.s8 %v229
    %v958 = vunpack.c.0.s8 %v230
    %v959 = vunpack.c.1.s8 %v223
    %v960 = vunpack.c.1.s8 %v224
    %v961 = vunpack.c.1.s8 %v225
    %v962 = vunpack.c.1.s8 %v226
    %v963 = vunpack.c.1.s8 %v227
    %v964 = vunpack.c.1.s8 %v228
    %v965 = vunpack.c.1.s8 %v229
    %v966 = vunpack.c.1.s8 %v230
    %v967 = vunpack.c.2.s8 %v223
    %v968 = vunpack.c.2.s8 %v224
    %v969 = vunpack.c.2.s8 %v225
    %v970 = vunpack.c.2.s8 %v226
    %v971 = vunpack.c.2.s8 %v227
    %v972 = vunpack.c.2.s8 %v228
    %v973 = vunpack.c.2.s8 %v229
    %v974 = vunpack.c.2.s8 %v230
    %v975 = vunpack.c.3.s8 %v223
    %v976 = vunpack.c.3.s8 %v224
    %v977 = vunpack.c.3.s8 %v225
    %v978 = vunpack.c.3.s8 %v226
    %v979 = vunpack.c.3.s8 %v227
    %v980 = vunpack.c.3.s8 %v228
    %v981 = vunpack.c.3.s8 %v229
    %v982 = vunpack.c.3.s8 %v230
    %v983 = vunpack.c.0.s8 %v231
    %v984 = vunpack.c.0.s8 %v232
    %v985 = vunpack.c.0.s8 %v233
    %v986 = vunpack.c.0.s8 %v234
    %v987 = vunpack.c.0.s8 %v235
    %v988 = vunpack.c.0.s8 %v236
    %v989 = vunpack.c.0.s8 %v237
    %v990 = vunpack.c.0.s8 %v238
    %v991 = vunpack.c.1.s8 %v231
    %v992 = vunpack.c.1.s8 %v232
    %v993 = vunpack.c.1.s8 %v233
    %v994 = vunpack.c.1.s8 %v234
    %v995 = vunpack.c.1.s8 %v235
    %v996 = vunpack.c.1.s8 %v236
    %v997 = vunpack.c.1.s8 %v237
    %v998 = vunpack.c.1.s8 %v238
    %v999 = vunpack.c.2.s8 %v231
    %v1000 = vunpack.c.2.s8 %v232
    %v1001 = vunpack.c.2.s8 %v233
    %v1002 = vunpack.c.2.s8 %v234
    %v1003 = vunpack.c.2.s8 %v235
    %v1004 = vunpack.c.2.s8 %v236
    %v1005 = vunpack.c.2.s8 %v237
    %v1006 = vunpack.c.2.s8 %v238
    %v1007 = vunpack.c.3.s8 %v231
    %v1008 = vunpack.c.3.s8 %v232
    %v1009 = vunpack.c.3.s8 %v233
    %v1010 = vunpack.c.3.s8 %v234
    %v1011 = vunpack.c.3.s8 %v235
    %v1012 = vunpack.c.3.s8 %v236
    %v1013 = vunpack.c.3.s8 %v237
    %v1014 = vunpack.c.3.s8 %v238
    %v1015 = vunpack.c.0.s8 %v239
    %v1016 = vunpack.c.0.s8 %v240
    %v1017 = vunpack.c.0.s8 %v241
    %v1018 = vunpack.c.0.s8 %v242
    %v1019 = vunpack.c.0.s8 %v243
    %v1020 = vunpack.c.0.s8 %v244
    %v1021 = vunpack.c.0.s8 %v245
    %v1022 = vunpack.c.0.s8 %v246
    %v1023 = vunpack.c.1.s8 %v239
    %v1024 = vunpack.c.1.s8 %v240
    %v1025 = vunpack.c.1.s8 %v241
    %v1026 = vunpack.c.1.s8 %v242
    %v1027 = vunpack.c.1.s8 %v243
    %v1028 = vunpack.c.1.s8 %v244
    %v1029 = vunpack.c.1.s8 %v245
    %v1030 = vunpack.c.1.s8 %v246
    %v1031 = vunpack.c.2.s8 %v239
    %v1032 = vunpack.c.2.s8 %v240
    %v1033 = vunpack.c.2.s8 %v241
    %v1034 = vunpack.c.2.s8 %v242
    %v1035 = vunpack.c.2.s8 %v243
    %v1036 = vunpack.c.2.s8 %v244
    %v1037 = vunpack.c.2.s8 %v245
    %v1038 = vunpack.c.2.s8 %v246
    %v1039 = vunpack.c.3.s8 %v239
    %v1040 = vunpack.c.3.s8 %v240
    %v1041 = vunpack.c.3.s8 %v241
    %v1042 = vunpack.c.3.s8 %v242
    %v1043 = vunpack.c.3.s8 %v243
    %v1044 = vunpack.c.3.s8 %v244
    %v1045 = vunpack.c.3.s8 %v245
    %v1046 = vunpack.c.3.s8 %v246
    %v1047 = vunpack.c.0.s8 %v247
    %v1048 = vunpack.c.0.s8 %v248
    %v1049 = vunpack.c.0.s8 %v249
    %v1050 = vunpack.c.0.s8 %v250
    %v1051 = vunpack.c.0.s8 %v251
    %v1052 = vunpack.c.0.s8 %v252
    %v1053 = vunpack.c.0.s8 %v253
    %v1054 = vunpack.c.0.s8 %v254
    %v1055 = vunpack.c.1.s8 %v247
    %v1056 = vunpack.c.1.s8 %v248
    %v1057 = vunpack.c.1.s8 %v249
    %v1058 = vunpack.c.1.s8 %v250
    %v1059 = vunpack.c.1.s8 %v251
    %v1060 = vunpack.c.1.s8 %v252
    %v1061 = vunpack.c.1.s8 %v253
    %v1062 = vunpack.c.1.s8 %v254
    %v1063 = vunpack.c.2.s8 %v247
    %v1064 = vunpack.c.2.s8 %v248
    %v1065 = vunpack.c.2.s8 %v249
    %v1066 = vunpack.c.2.s8 %v250
    %v1067 = vunpack.c.2.s8 %v251
    %v1068 = vunpack.c.2.s8 %v252
    %v1069 = vunpack.c.2.s8 %v253
    %v1070 = vunpack.c.2.s8 %v254
    %v1071 = vunpack.c.3.s8 %v247
    %v1072 = vunpack.c.3.s8 %v248
    %v1073 = vunpack.c.3.s8 %v249
    %v1074 = vunpack.c.3.s8 %v250
    %v1075 = vunpack.c.3.s8 %v251
    %v1076 = vunpack.c.3.s8 %v252
    %v1077 = vunpack.c.3.s8 %v253
    %v1078 = vunpack.c.3.s8 %v254
    %v1079 = vunpack.c.0.s8 %v255
    %v1080 = vunpack.c.0.s8 %v256
    %v1081 = vunpack.c.0.s8 %v257
    %v1082 = vunpack.c.0.s8 %v258
    %v1083 = vunpack.c.0.s8 %v259
    %v1084 = vunpack.c.0.s8 %v260
    %v1085 = vunpack.c.0.s8 %v261
    %v1086 = vunpack.c.0.s8 %v262
    %v1087 = vunpack.c.1.s8 %v255
    %v1088 = vunpack.c.1.s8 %v256
    %v1089 = vunpack.c.1.s8 %v257
    %v1090 = vunpack.c.1.s8 %v258
    %v1091 = vunpack.c.1.s8 %v259
    %v1092 = vunpack.c.1.s8 %v260
    %v1093 = vunpack.c.1.s8 %v261
    %v1094 = vunpack.c.1.s8 %v262
    %v1095 = vunpack.c.2.s8 %v255
    %v1096 = vunpack.c.2.s8 %v256
    %v1097 = vunpack.c.2.s8 %v257
    %v1098 = vunpack.c.2.s8 %v258
    %v1099 = vunpack.c.2.s8 %v259
    %v1100 = vunpack.c.2.s8 %v260
    %v1101 = vunpack.c.2.s8 %v261
    %v1102 = vunpack.c.2.s8 %v262
    %v1103 = vunpack.c.3.s8 %v255
    %v1104 = vunpack.c.3.s8 %v256
    %v1105 = vunpack.c.3.s8 %v257
    %v1106 = vunpack.c.3.s8 %v258
    %v1107 = vunpack.c.3.s8 %v259
    %v1108 = vunpack.c.3.s8 %v260
    %v1109 = vunpack.c.3.s8 %v261
    %v1110 = vunpack.c.3.s8 %v262
    %v1111 = vunpack.c.0.s8 %v263
    %v1112 = vunpack.c.0.s8 %v264
    %v1113 = vunpack.c.0.s8 %v265
    %v1114 = vunpack.c.0.s8 %v266
    %v1115 = vunpack.c.0.s8 %v267
    %v1116 = vunpack.c.0.s8 %v268
    %v1117 = vunpack.c.0.s8 %v269
    %v1118 = vunpack.c.0.s8 %v270
    %v1119 = vunpack.c.1.s8 %v263
    %v1120 = vunpack.c.1.s8 %v264
    %v1121 = vunpack.c.1.s8 %v265
    %v1122 = vunpack.c.1.s8 %v266
    %v1123 = vunpack.c.1.s8 %v267
    %v1124 = vunpack.c.1.s8 %v268
    %v1125 = vunpack.c.1.s8 %v269
    %v1126 = vunpack.c.1.s8 %v270
    %v1127 = vunpack.c.2.s8 %v263
    %v1128 = vunpack.c.2.s8 %v264
    %v1129 = vunpack.c.2.s8 %v265
    %v1130 = vunpack.c.2.s8 %v266
    %v1131 = vunpack.c.2.s8 %v267
    %v1132 = vunpack.c.2.s8 %v268
    %v1133 = vunpack.c.2.s8 %v269
    %v1134 = vunpack.c.2.s8 %v270
    %v1135 = vunpack.c.3.s8 %v263
    %v1136 = vunpack.c.3.s8 %v264
    %v1137 = vunpack.c.3.s8 %v265
    %v1138 = vunpack.c.3.s8 %v266
    %v1139 = vunpack.c.3.s8 %v267
    %v1140 = vunpack.c.3.s8 %v268
    %v1141 = vunpack.c.3.s8 %v269
    %v1142 = vunpack.c.3.s8 %v270
    %v1143 = vunpack.c.0.s8 %v271
    %v1144 = vunpack.c.0.s8 %v272
    %v1145 = vunpack.c.0.s8 %v273
    %v1146 = vunpack.c.0.s8 %v274
    %v1147 = vunpack.c.0.s8 %v275
    %v1148 = vunpack.c.0.s8 %v276
    %v1149 = vunpack.c.0.s8 %v277
    %v1150 = vunpack.c.0.s8 %v278
    %v1151 = vunpack.c.1.s8 %v271
    %v1152 = vunpack.c.1.s8 %v272
    %v1153 = vunpack.c.1.s8 %v273
    %v1154 = vunpack.c.1.s8 %v274
    %v1155 = vunpack.c.1.s8 %v275
    %v1156 = vunpack.c.1.s8 %v276
    %v1157 = vunpack.c.1.s8 %v277
    %v1158 = vunpack.c.1.s8 %v278
    %v1159 = vunpack.c.2.s8 %v271
    %v1160 = vunpack.c.2.s8 %v272
    %v1161 = vunpack.c.2.s8 %v273
    %v1162 = vunpack.c.2.s8 %v274
    %v1163 = vunpack.c.2.s8 %v275
    %v1164 = vunpack.c.2.s8 %v276
    %v1165 = vunpack.c.2.s8 %v277
    %v1166 = vunpack.c.2.s8 %v278
    %v1167 = vunpack.c.3.s8 %v271
    %v1168 = vunpack.c.3.s8 %v272
    %v1169 = vunpack.c.3.s8 %v273
    %v1170 = vunpack.c.3.s8 %v274
    %v1171 = vunpack.c.3.s8 %v275
    %v1172 = vunpack.c.3.s8 %v276
    %v1173 = vunpack.c.3.s8 %v277
    %v1174 = vunpack.c.3.s8 %v278
    %v1175 = vunpack.c.0.s8 %v279
    %v1176 = vunpack.c.0.s8 %v280
    %v1177 = vunpack.c.0.s8 %v281
    %v1178 = vunpack.c.0.s8 %v282
    %v1179 = vunpack.c.0.s8 %v283
    %v1180 = vunpack.c.0.s8 %v284
    %v1181 = vunpack.c.0.s8 %v285
    %v1182 = vunpack.c.0.s8 %v286
    %v1183 = vunpack.c.1.s8 %v279
    %v1184 = vunpack.c.1.s8 %v280
    %v1185 = vunpack.c.1.s8 %v281
    %v1186 = vunpack.c.1.s8 %v282
    %v1187 = vunpack.c.1.s8 %v283
    %v1188 = vunpack.c.1.s8 %v284
    %v1189 = vunpack.c.1.s8 %v285
    %v1190 = vunpack.c.1.s8 %v286
    %v1191 = vunpack.c.2.s8 %v279
    %v1192 = vunpack.c.2.s8 %v280
    %v1193 = vunpack.c.2.s8 %v281
    %v1194 = vunpack.c.2.s8 %v282
    %v1195 = vunpack.c.2.s8 %v283
    %v1196 = vunpack.c.2.s8 %v284
    %v1197 = vunpack.c.2.s8 %v285
    %v1198 = vunpack.c.2.s8 %v286
    %v1199 = vunpack.c.3.s8 %v279
    %v1200 = vunpack.c.3.s8 %v280
    %v1201 = vunpack.c.3.s8 %v281
    %v1202 = vunpack.c.3.s8 %v282
    %v1203 = vunpack.c.3.s8 %v283
    %v1204 = vunpack.c.3.s8 %v284
    %v1205 = vunpack.c.3.s8 %v285
    %v1206 = vunpack.c.3.s8 %v286
    %v1207 = vunpack.c.0.s8 %v287
    %v1208 = vunpack.c.0.s8 %v288
    %v1209 = vunpack.c.0.s8 %v289
    %v1210 = vunpack.c.0.s8 %v290
    %v1211 = vunpack.c.0.s8 %v291
    %v1212 = vunpack.c.0.s8 %v292
    %v1213 = vunpack.c.0.s8 %v293
    %v1214 = vunpack.c.0.s8 %v294
    %v1215 = vunpack.c.1.s8 %v287
    %v1216 = vunpack.c.1.s8 %v288
    %v1217 = vunpack.c.1.s8 %v289
    %v1218 = vunpack.c.1.s8 %v290
    %v1219 = vunpack.c.1.s8 %v291
    %v1220 = vunpack.c.1.s8 %v292
    %v1221 = vunpack.c.1.s8 %v293
    %v1222 = vunpack.c.1.s8 %v294
    %v1223 = vunpack.c.2.s8 %v287
    %v1224 = vunpack.c.2.s8 %v288
    %v1225 = vunpack.c.2.s8 %v289
    %v1226 = vunpack.c.2.s8 %v290
    %v1227 = vunpack.c.2.s8 %v291
    %v1228 = vunpack.c.2.s8 %v292
    %v1229 = vunpack.c.2.s8 %v293
    %v1230 = vunpack.c.2.s8 %v294
    %v1231 = vunpack.c.3.s8 %v287
    %v1232 = vunpack.c.3.s8 %v288
    %v1233 = vunpack.c.3.s8 %v289
    %v1234 = vunpack.c.3.s8 %v290
    %v1235 = vunpack.c.3.s8 %v291
    %v1236 = vunpack.c.3.s8 %v292
    %v1237 = vunpack.c.3.s8 %v293
    %v1238 = vunpack.c.3.s8 %v294
    %v1239 = vunpack.c.0.s8 %v295
    %v1240 = vunpack.c.0.s8 %v296
    %v1241 = vunpack.c.0.s8 %v297
    %v1242 = vunpack.c.0.s8 %v298
    %v1243 = vunpack.c.0.s8 %v299
    %v1244 = vunpack.c.0.s8 %v300
    %v1245 = vunpack.c.0.s8 %v301
    %v1246 = vunpack.c.0.s8 %v302
    %v1247 = vunpack.c.1.s8 %v295
    %v1248 = vunpack.c.1.s8 %v296
    %v1249 = vunpack.c.1.s8 %v297
    %v1250 = vunpack.c.1.s8 %v298
    %v1251 = vunpack.c.1.s8 %v299
    %v1252 = vunpack.c.1.s8 %v300
    %v1253 = vunpack.c.1.s8 %v301
    %v1254 = vunpack.c.1.s8 %v302
    %v1255 = vunpack.c.2.s8 %v295
    %v1256 = vunpack.c.2.s8 %v296
    %v1257 = vunpack.c.2.s8 %v297
    %v1258 = vunpack.c.2.s8 %v298
    %v1259 = vunpack.c.2.s8 %v299
    %v1260 = vunpack.c.2.s8 %v300
    %v1261 = vunpack.c.2.s8 %v301
    %v1262 = vunpack.c.2.s8 %v302
    %v1263 = vunpack.c.3.s8 %v295
    %v1264 = vunpack.c.3.s8 %v296
    %v1265 = vunpack.c.3.s8 %v297
    %v1266 = vunpack.c.3.s8 %v298
    %v1267 = vunpack.c.3.s8 %v299
    %v1268 = vunpack.c.3.s8 %v300
    %v1269 = vunpack.c.3.s8 %v301
    %v1270 = vunpack.c.3.s8 %v302
    %v1271 = vunpack.c.0.s8 %v303
    %v1272 = vunpack.c.0.s8 %v304
    %v1273 = vunpack.c.0.s8 %v305
    %v1274 = vunpack.c.0.s8 %v306
    %v1275 = vunpack.c.0.s8 %v307
    %v1276 = vunpack.c.0.s8 %v308
    %v1277 = vunpack.c.0.s8 %v309
    %v1278 = vunpack.c.0.s8 %v310
    %v1279 = vunpack.c.1.s8 %v303
    %v1280 = vunpack.c.1.s8 %v304
    %v1281 = vunpack.c.1.s8 %v305
    %v1282 = vunpack.c.1.s8 %v306
    %v1283 = vunpack.c.1.s8 %v307
    %v1284 = vunpack.c.1.s8 %v308
    %v1285 = vunpack.c.1.s8 %v309
    %v1286 = vunpack.c.1.s8 %v310
    %v1287 = vunpack.c.2.s8 %v303
    %v1288 = vunpack.c.2.s8 %v304
    %v1289 = vunpack.c.2.s8 %v305
    %v1290 = vunpack.c.2.s8 %v306
    %v1291 = vunpack.c.2.s8 %v307
    %v1292 = vunpack.c.2.s8 %v308
    %v1293 = vunpack.c.2.s8 %v309
    %v1294 = vunpack.c.2.s8 %v310
    %v1295 = vunpack.c.3.s8 %v303
    %v1296 = vunpack.c.3.s8 %v304
    %v1297 = vunpack.c.3.s8 %v305
    %v1298 = vunpack.c.3.s8 %v306
    %v1299 = vunpack.c.3.s8 %v307
    %v1300 = vunpack.c.3.s8 %v308
    %v1301 = vunpack.c.3.s8 %v309
    %v1302 = vunpack.c.3.s8 %v310
    %v1303 = vunpack.c.0.s8 %v311
    %v1304 = vunpack.c.0.s8 %v312
    %v1305 = vunpack.c.0.s8 %v313
    %v1306 = vunpack.c.0.s8 %v314
    %v1307 = vunpack.c.0.s8 %v315
    %v1308 = vunpack.c.0.s8 %v316
    %v1309 = vunpack.c.0.s8 %v317
    %v1310 = vunpack.c.0.s8 %v318
    %v1311 = vunpack.c.1.s8 %v311
    %v1312 = vunpack.c.1.s8 %v312
    %v1313 = vunpack.c.1.s8 %v313
    %v1314 = vunpack.c.1.s8 %v314
    %v1315 = vunpack.c.1.s8 %v315
    %v1316 = vunpack.c.1.s8 %v316
    %v1317 = vunpack.c.1.s8 %v317
    %v1318 = vunpack.c.1.s8 %v318
    %v1319 = vunpack.c.2.s8 %v311
    %v1320 = vunpack.c.2.s8 %v312
    %v1321 = vunpack.c.2.s8 %v313
    %v1322 = vunpack.c.2.s8 %v314
    %v1323 = vunpack.c.2.s8 %v315
    %v1324 = vunpack.c.2.s8 %v316
    %v1325 = vunpack.c.2.s8 %v317
    %v1326 = vunpack.c.2.s8 %v318
    %v1327 = vunpack.c.3.s8 %v311
    %v1328 = vunpack.c.3.s8 %v312
    %v1329 = vunpack.c.3.s8 %v313
    %v1330 = vunpack.c.3.s8 %v314
    %v1331 = vunpack.c.3.s8 %v315
    %v1332 = vunpack.c.3.s8 %v316
    %v1333 = vunpack.c.3.s8 %v317
    %v1334 = vunpack.c.3.s8 %v318
    %v1335 = vunpack.c.0.s8 %v319
    %v1336 = vunpack.c.0.s8 %v320
    %v1337 = vunpack.c.0.s8 %v321
    %v1338 = vunpack.c.0.s8 %v322
    %v1339 = vunpack.c.0.s8 %v323
    %v1340 = vunpack.c.0.s8 %v324
    %v1341 = vunpack.c.0.s8 %v325
    %v1342 = vunpack.c.0.s8 %v326
    %v1343 = vunpack.c.1.s8 %v319
    %v1344 = vunpack.c.1.s8 %v320
    %v1345 = vunpack.c.1.s8 %v321
    %v1346 = vunpack.c.1.s8 %v322
    %v1347 = vunpack.c.1.s8 %v323
    %v1348 = vunpack.c.1.s8 %v324
    %v1349 = vunpack.c.1.s8 %v325
    %v1350 = vunpack.c.1.s8 %v326
    %v1351 = vunpack.c.2.s8 %v319
    %v1352 = vunpack.c.2.s8 %v320
    %v1353 = vunpack.c.2.s8 %v321
    %v1354 = vunpack.c.2.s8 %v322
    %v1355 = vunpack.c.2.s8 %v323
    %v1356 = vunpack.c.2.s8 %v324
    %v1357 = vunpack.c.2.s8 %v325
    %v1358 = vunpack.c.2.s8 %v326
    %v1359 = vunpack.c.3.s8 %v319
    %v1360 = vunpack.c.3.s8 %v320
    %v1361 = vunpack.c.3.s8 %v321
    %v1362 = vunpack.c.3.s8 %v322
    %v1363 = vunpack.c.3.s8 %v323
    %v1364 = vunpack.c.3.s8 %v324
    %v1365 = vunpack.c.3.s8 %v325
    %v1366 = vunpack.c.3.s8 %v326
    %v1367 = vunpack.c.0.s8 %v327
    %v1368 = vunpack.c.0.s8 %v328
    %v1369 = vunpack.c.0.s8 %v329
    %v1370 = vunpack.c.0.s8 %v330
    %v1371 = vunpack.c.0.s8 %v331
    %v1372 = vunpack.c.0.s8 %v332
    %v1373 = vunpack.c.0.s8 %v333
    %v1374 = vunpack.c.0.s8 %v334
    %v1375 = vunpack.c.1.s8 %v327
    %v1376 = vunpack.c.1.s8 %v328
    %v1377 = vunpack.c.1.s8 %v329
    %v1378 = vunpack.c.1.s8 %v330
    %v1379 = vunpack.c.1.s8 %v331
    %v1380 = vunpack.c.1.s8 %v332
    %v1381 = vunpack.c.1.s8 %v333
    %v1382 = vunpack.c.1.s8 %v334
    %v1383 = vunpack.c.2.s8 %v327
    %v1384 = vunpack.c.2.s8 %v328
    %v1385 = vunpack.c.2.s8 %v329
    %v1386 = vunpack.c.2.s8 %v330
    %v1387 = vunpack.c.2.s8 %v331
    %v1388 = vunpack.c.2.s8 %v332
    %v1389 = vunpack.c.2.s8 %v333
    %v1390 = vunpack.c.2.s8 %v334
    %v1391 = vunpack.c.3.s8 %v327
    %v1392 = vunpack.c.3.s8 %v328
    %v1393 = vunpack.c.3.s8 %v329
    %v1394 = vunpack.c.3.s8 %v330
    %v1395 = vunpack.c.3.s8 %v331
    %v1396 = vunpack.c.3.s8 %v332
    %v1397 = vunpack.c.3.s8 %v333
    %v1398 = vunpack.c.3.s8 %v334
    %v1399 = vunpack.c.0.s8 %v335
    %v1400 = vunpack.c.0.s8 %v336
    %v1401 = vunpack.c.0.s8 %v337
    %v1402 = vunpack.c.0.s8 %v338
    %v1403 = vunpack.c.0.s8 %v339
    %v1404 = vunpack.c.0.s8 %v340
    %v1405 = vunpack.c.0.s8 %v341
    %v1406 = vunpack.c.0.s8 %v342
    %v1407 = vunpack.c.1.s8 %v335
    %v1408 = vunpack.c.1.s8 %v336
    %v1409 = vunpack.c.1.s8 %v337
    %v1410 = vunpack.c.1.s8 %v338
    %v1411 = vunpack.c.1.s8 %v339
    %v1412 = vunpack.c.1.s8 %v340
    %v1413 = vunpack.c.1.s8 %v341
    %v1414 = vunpack.c.1.s8 %v342
    %v1415 = vunpack.c.2.s8 %v335
    %v1416 = vunpack.c.2.s8 %v336
    %v1417 = vunpack.c.2.s8 %v337
    %v1418 = vunpack.c.2.s8 %v338
    %v1419 = vunpack.c.2.s8 %v339
    %v1420 = vunpack.c.2.s8 %v340
    %v1421 = vunpack.c.2.s8 %v341
    %v1422 = vunpack.c.2.s8 %v342
    %v1423 = vunpack.c.3.s8 %v335
    %v1424 = vunpack.c.3.s8 %v336
    %v1425 = vunpack.c.3.s8 %v337
    %v1426 = vunpack.c.3.s8 %v338
    %v1427 = vunpack.c.3.s8 %v339
    %v1428 = vunpack.c.3.s8 %v340
    %v1429 = vunpack.c.3.s8 %v341
    %v1430 = vunpack.c.3.s8 %v342
    %v1431 = vunpack.c.0.s8 %v343
    %v1432 = vunpack.c.0.s8 %v344
    %v1433 = vunpack.c.0.s8 %v345
    %v1434 = vunpack.c.0.s8 %v346
    %v1435 = vunpack.c.0.s8 %v347
    %v1436 = vunpack.c.0.s8 %v348
    %v1437 = vunpack.c.0.s8 %v349
    %v1438 = vunpack.c.0.s8 %v350
    %v1439 = vunpack.c.1.s8 %v343
    %v1440 = vunpack.c.1.s8 %v344
    %v1441 = vunpack.c.1.s8 %v345
    %v1442 = vunpack.c.1.s8 %v346
    %v1443 = vunpack.c.1.s8 %v347
    %v1444 = vunpack.c.1.s8 %v348
    %v1445 = vunpack.c.1.s8 %v349
    %v1446 = vunpack.c.1.s8 %v350
    %v1447 = vunpack.c.2.s8 %v343
    %v1448 = vunpack.c.2.s8 %v344
    %v1449 = vunpack.c.2.s8 %v345
    %v1450 = vunpack.c.2.s8 %v346
    %v1451 = vunpack.c.2.s8 %v347
    %v1452 = vunpack.c.2.s8 %v348
    %v1453 = vunpack.c.2.s8 %v349
    %v1454 = vunpack.c.2.s8 %v350
    %v1455 = vunpack.c.3.s8 %v343
    %v1456 = vunpack.c.3.s8 %v344
    %v1457 = vunpack.c.3.s8 %v345
    %v1458 = vunpack.c.3.s8 %v346
    %v1459 = vunpack.c.3.s8 %v347
    %v1460 = vunpack.c.3.s8 %v348
    %v1461 = vunpack.c.3.s8 %v349
    %v1462 = vunpack.c.3.s8 %v350
    %v1463 = vunpack.c.0.s8 %v351
    %v1464 = vunpack.c.0.s8 %v352
    %v1465 = vunpack.c.0.s8 %v353
    %v1466 = vunpack.c.0.s8 %v354
    %v1467 = vunpack.c.0.s8 %v355
    %v1468 = vunpack.c.0.s8 %v356
    %v1469 = vunpack.c.0.s8 %v357
    %v1470 = vunpack.c.0.s8 %v358
    %v1471 = vunpack.c.1.s8 %v351
    %v1472 = vunpack.c.1.s8 %v352
    %v1473 = vunpack.c.1.s8 %v353
    %v1474 = vunpack.c.1.s8 %v354
    %v1475 = vunpack.c.1.s8 %v355
    %v1476 = vunpack.c.1.s8 %v356
    %v1477 = vunpack.c.1.s8 %v357
    %v1478 = vunpack.c.1.s8 %v358
    %v1479 = vunpack.c.2.s8 %v351
    %v1480 = vunpack.c.2.s8 %v352
    %v1481 = vunpack.c.2.s8 %v353
    %v1482 = vunpack.c.2.s8 %v354
    %v1483 = vunpack.c.2.s8 %v355
    %v1484 = vunpack.c.2.s8 %v356
    %v1485 = vunpack.c.2.s8 %v357
    %v1486 = vunpack.c.2.s8 %v358
    %v1487 = vunpack.c.3.s8 %v351
    %v1488 = vunpack.c.3.s8 %v352
    %v1489 = vunpack.c.3.s8 %v353
    %v1490 = vunpack.c.3.s8 %v354
    %v1491 = vunpack.c.3.s8 %v355
    %v1492 = vunpack.c.3.s8 %v356
    %v1493 = vunpack.c.3.s8 %v357
    %v1494 = vunpack.c.3.s8 %v358
    %v1495 = vunpack.c.0.s8 %v359
    %v1496 = vunpack.c.0.s8 %v360
    %v1497 = vunpack.c.0.s8 %v361
    %v1498 = vunpack.c.0.s8 %v362
    %v1499 = vunpack.c.0.s8 %v363
    %v1500 = vunpack.c.0.s8 %v364
    %v1501 = vunpack.c.0.s8 %v365
    %v1502 = vunpack.c.0.s8 %v366
    %v1503 = vunpack.c.1.s8 %v359
    %v1504 = vunpack.c.1.s8 %v360
    %v1505 = vunpack.c.1.s8 %v361
    %v1506 = vunpack.c.1.s8 %v362
    %v1507 = vunpack.c.1.s8 %v363
    %v1508 = vunpack.c.1.s8 %v364
    %v1509 = vunpack.c.1.s8 %v365
    %v1510 = vunpack.c.1.s8 %v366
    %v1511 = vunpack.c.2.s8 %v359
    %v1512 = vunpack.c.2.s8 %v360
    %v1513 = vunpack.c.2.s8 %v361
    %v1514 = vunpack.c.2.s8 %v362
    %v1515 = vunpack.c.2.s8 %v363
    %v1516 = vunpack.c.2.s8 %v364
    %v1517 = vunpack.c.2.s8 %v365
    %v1518 = vunpack.c.2.s8 %v366
    %v1519 = vunpack.c.3.s8 %v359
    %v1520 = vunpack.c.3.s8 %v360
    %v1521 = vunpack.c.3.s8 %v361
    %v1522 = vunpack.c.3.s8 %v362
    %v1523 = vunpack.c.3.s8 %v363
    %v1524 = vunpack.c.3.s8 %v364
    %v1525 = vunpack.c.3.s8 %v365
    %v1526 = vunpack.c.3.s8 %v366
    %v1527 = vunpack.c.0.s8 %v367
    %v1528 = vunpack.c.0.s8 %v368
    %v1529 = vunpack.c.0.s8 %v369
    %v1530 = vunpack.c.0.s8 %v370
    %v1531 = vunpack.c.0.s8 %v371
    %v1532 = vunpack.c.0.s8 %v372
    %v1533 = vunpack.c.0.s8 %v373
    %v1534 = vunpack.c.0.s8 %v374
    %v1535 = vunpack.c.1.s8 %v367
    %v1536 = vunpack.c.1.s8 %v368
    %v1537 = vunpack.c.1.s8 %v369
    %v1538 = vunpack.c.1.s8 %v370
    %v1539 = vunpack.c.1.s8 %v371
    %v1540 = vunpack.c.1.s8 %v372
    %v1541 = vunpack.c.1.s8 %v373
    %v1542 = vunpack.c.1.s8 %v374
    %v1543 = vunpack.c.2.s8 %v367
    %v1544 = vunpack.c.2.s8 %v368
    %v1545 = vunpack.c.2.s8 %v369
    %v1546 = vunpack.c.2.s8 %v370
    %v1547 = vunpack.c.2.s8 %v371
    %v1548 = vunpack.c.2.s8 %v372
    %v1549 = vunpack.c.2.s8 %v373
    %v1550 = vunpack.c.2.s8 %v374
    %v1551 = vunpack.c.3.s8 %v367
    %v1552 = vunpack.c.3.s8 %v368
    %v1553 = vunpack.c.3.s8 %v369
    %v1554 = vunpack.c.3.s8 %v370
    %v1555 = vunpack.c.3.s8 %v371
    %v1556 = vunpack.c.3.s8 %v372
    %v1557 = vunpack.c.3.s8 %v373
    %v1558 = vunpack.c.3.s8 %v374
    %v1559 = vunpack.c.0.s8 %v375
    %v1560 = vunpack.c.0.s8 %v376
    %v1561 = vunpack.c.0.s8 %v377
    %v1562 = vunpack.c.0.s8 %v378
    %v1563 = vunpack.c.0.s8 %v379
    %v1564 = vunpack.c.0.s8 %v380
    %v1565 = vunpack.c.0.s8 %v381
    %v1566 = vunpack.c.0.s8 %v382
    %v1567 = vunpack.c.1.s8 %v375
    %v1568 = vunpack.c.1.s8 %v376
    %v1569 = vunpack.c.1.s8 %v377
    %v1570 = vunpack.c.1.s8 %v378
    %v1571 = vunpack.c.1.s8 %v379
    %v1572 = vunpack.c.1.s8 %v380
    %v1573 = vunpack.c.1.s8 %v381
    %v1574 = vunpack.c.1.s8 %v382
    %v1575 = vunpack.c.2.s8 %v375
    %v1576 = vunpack.c.2.s8 %v376
    %v1577 = vunpack.c.2.s8 %v377
    %v1578 = vunpack.c.2.s8 %v378
    %v1579 = vunpack.c.2.s8 %v379
    %v1580 = vunpack.c.2.s8 %v380
    %v1581 = vunpack.c.2.s8 %v381
    %v1582 = vunpack.c.2.s8 %v382
    %v1583 = vunpack.c.3.s8 %v375
    %v1584 = vunpack.c.3.s8 %v376
    %v1585 = vunpack.c.3.s8 %v377
    %v1586 = vunpack.c.3.s8 %v378
    %v1587 = vunpack.c.3.s8 %v379
    %v1588 = vunpack.c.3.s8 %v380
    %v1589 = vunpack.c.3.s8 %v381
    %v1590 = vunpack.c.3.s8 %v382
    %v1591 = vunpack.c.0.s8 %v383
    %v1592 = vunpack.c.0.s8 %v384
    %v1593 = vunpack.c.0.s8 %v385
    %v1594 = vunpack.c.0.s8 %v386
    %v1595 = vunpack.c.0.s8 %v387
    %v1596 = vunpack.c.0.s8 %v388
    %v1597 = vunpack.c.0.s8 %v389
    %v1598 = vunpack.c.0.s8 %v390
    %v1599 = vunpack.c.1.s8 %v383
    %v1600 = vunpack.c.1.s8 %v384
    %v1601 = vunpack.c.1.s8 %v385
    %v1602 = vunpack.c.1.s8 %v386
    %v1603 = vunpack.c.1.s8 %v387
    %v1604 = vunpack.c.1.s8 %v388
    %v1605 = vunpack.c.1.s8 %v389
    %v1606 = vunpack.c.1.s8 %v390
    %v1607 = vunpack.c.2.s8 %v383
    %v1608 = vunpack.c.2.s8 %v384
    %v1609 = vunpack.c.2.s8 %v385
    %v1610 = vunpack.c.2.s8 %v386
    %v1611 = vunpack.c.2.s8 %v387
    %v1612 = vunpack.c.2.s8 %v388
    %v1613 = vunpack.c.2.s8 %v389
    %v1614 = vunpack.c.2.s8 %v390
    %v1615 = vunpack.c.3.s8 %v383
    %v1616 = vunpack.c.3.s8 %v384
    %v1617 = vunpack.c.3.s8 %v385
    %v1618 = vunpack.c.3.s8 %v386
    %v1619 = vunpack.c.3.s8 %v387
    %v1620 = vunpack.c.3.s8 %v388
    %v1621 = vunpack.c.3.s8 %v389
    %v1622 = vunpack.c.3.s8 %v390
    %v1623 = vunpack.c.0.s8 %v391
    %v1624 = vunpack.c.0.s8 %v392
    %v1625 = vunpack.c.0.s8 %v393
    %v1626 = vunpack.c.0.s8 %v394
    %v1627 = vunpack.c.0.s8 %v395
    %v1628 = vunpack.c.0.s8 %v396
    %v1629 = vunpack.c.0.s8 %v397
    %v1630 = vunpack.c.0.s8 %v398
    %v1631 = vunpack.c.1.s8 %v391
    %v1632 = vunpack.c.1.s8 %v392
    %v1633 = vunpack.c.1.s8 %v393
    %v1634 = vunpack.c.1.s8 %v394
    %v1635 = vunpack.c.1.s8 %v395
    %v1636 = vunpack.c.1.s8 %v396
    %v1637 = vunpack.c.1.s8 %v397
    %v1638 = vunpack.c.1.s8 %v398
    %v1639 = vunpack.c.2.s8 %v391
    %v1640 = vunpack.c.2.s8 %v392
    %v1641 = vunpack.c.2.s8 %v393
    %v1642 = vunpack.c.2.s8 %v394
    %v1643 = vunpack.c.2.s8 %v395
    %v1644 = vunpack.c.2.s8 %v396
    %v1645 = vunpack.c.2.s8 %v397
    %v1646 = vunpack.c.2.s8 %v398
    %v1647 = vunpack.c.3.s8 %v391
    %v1648 = vunpack.c.3.s8 %v392
    %v1649 = vunpack.c.3.s8 %v393
    %v1650 = vunpack.c.3.s8 %v394
    %v1651 = vunpack.c.3.s8 %v395
    %v1652 = vunpack.c.3.s8 %v396
    %v1653 = vunpack.c.3.s8 %v397
    %v1654 = vunpack.c.3.s8 %v398
    %v1655 = vunpack.c.0.s8 %v399
    %v1656 = vunpack.c.0.s8 %v400
    %v1657 = vunpack.c.0.s8 %v401
    %v1658 = vunpack.c.0.s8 %v402
    %v1659 = vunpack.c.0.s8 %v403
    %v1660 = vunpack.c.0.s8 %v404
    %v1661 = vunpack.c.0.s8 %v405
    %v1662 = vunpack.c.0.s8 %v406
    %v1663 = vunpack.c.1.s8 %v399
    %v1664 = vunpack.c.1.s8 %v400
    %v1665 = vunpack.c.1.s8 %v401
    %v1666 = vunpack.c.1.s8 %v402
    %v1667 = vunpack.c.1.s8 %v403
    %v1668 = vunpack.c.1.s8 %v404
    %v1669 = vunpack.c.1.s8 %v405
    %v1670 = vunpack.c.1.s8 %v406
    %v1671 = vunpack.c.2.s8 %v399
    %v1672 = vunpack.c.2.s8 %v400
    %v1673 = vunpack.c.2.s8 %v401
    %v1674 = vunpack.c.2.s8 %v402
    %v1675 = vunpack.c.2.s8 %v403
    %v1676 = vunpack.c.2.s8 %v404
    %v1677 = vunpack.c.2.s8 %v405
    %v1678 = vunpack.c.2.s8 %v406
    %v1679 = vunpack.c.3.s8 %v399
    %v1680 = vunpack.c.3.s8 %v400
    %v1681 = vunpack.c.3.s8 %v401
    %v1682 = vunpack.c.3.s8 %v402
    %v1683 = vunpack.c.3.s8 %v403
    %v1684 = vunpack.c.3.s8 %v404
    %v1685 = vunpack.c.3.s8 %v405
    %v1686 = vunpack.c.3.s8 %v406
    %v1687 = vcvt.s32.f32 %v407
    %v1688 = vcvt.s32.f32 %v408
    %v1689 = vcvt.s32.f32 %v409
    %v1690 = vcvt.s32.f32 %v410
    %v1691 = vcvt.s32.f32 %v411
    %v1692 = vcvt.s32.f32 %v412
    %v1693 = vcvt.s32.f32 %v413
    %v1694 = vcvt.s32.f32 %v414
    %v1695 = vcvt.s32.f32 %v415
    %v1696 = vcvt.s32.f32 %v416
    %v1697 = vcvt.s32.f32 %v417
    %v1698 = vcvt.s32.f32 %v418
    %v1699 = vcvt.s32.f32 %v419
    %v1700 = vcvt.s32.f32 %v420
    %v1701 = vcvt.s32.f32 %v421
    %v1702 = vcvt.s32.f32 %v422
    %v1703 = vcvt.s32.f32 %v423
    %v1704 = vcvt.s32.f32 %v424
    %v1705 = vcvt.s32.f32 %v425
    %v1706 = vcvt.s32.f32 %v426
    %v1707 = vcvt.s32.f32 %v427
    %v1708 = vcvt.s32.f32 %v428
    %v1709 = vcvt.s32.f32 %v429
    %v1710 = vcvt.s32.f32 %v430
    %v1711 = vcvt.s32.f32 %v431
    %v1712 = vcvt.s32.f32 %v432
    %v1713 = vcvt.s32.f32 %v433
    %v1714 = vcvt.s32.f32 %v434
    %v1715 = vcvt.s32.f32 %v435
    %v1716 = vcvt.s32.f32 %v436
    %v1717 = vcvt.s32.f32 %v437
    %v1718 = vcvt.s32.f32 %v438
    %v1719 = vcvt.s32.f32 %v439
    %v1720 = vcvt.s32.f32 %v440
    %v1721 = vcvt.s32.f32 %v441
    %v1722 = vcvt.s32.f32 %v442
    %v1723 = vcvt.s32.f32 %v443
    %v1724 = vcvt.s32.f32 %v444
    %v1725 = vcvt.s32.f32 %v445
    %v1726 = vcvt.s32.f32 %v446
    %v1727 = vcvt.s32.f32 %v447
    %v1728 = vcvt.s32.f32 %v448
    %v1729 = vcvt.s32.f32 %v449
    %v1730 = vcvt.s32.f32 %v450
    %v1731 = vcvt.s32.f32 %v451
    %v1732 = vcvt.s32.f32 %v452
    %v1733 = vcvt.s32.f32 %v453
    %v1734 = vcvt.s32.f32 %v454
    %v1735 = vcvt.s32.f32 %v455
    %v1736 = vcvt.s32.f32 %v456
    %v1737 = vcvt.s32.f32 %v457
    %v1738 = vcvt.s32.f32 %v458
    %v1739 = vcvt.s32.f32 %v459
    %v1740 = vcvt.s32.f32 %v460
    %v1741 = vcvt.s32.f32 %v461
    %v1742 = vcvt.s32.f32 %v462
    %v1743 = vcvt.s32.f32 %v463
    %v1744 = vcvt.s32.f32 %v464
    %v1745 = vcvt.s32.f32 %v465
    %v1746 = vcvt.s32.f32 %v466
    %v1747 = vcvt.s32.f32 %v467
    %v1748 = vcvt.s32.f32 %v468
    %v1749 = vcvt.s32.f32 %v469
    %v1750 = vcvt.s32.f32 %v470
    %v1751 = vcvt.s32.f32 %v471
    %v1752 = vcvt.s32.f32 %v472
    %v1753 = vcvt.s32.f32 %v473
    %v1754 = vcvt.s32.f32 %v474
    %v1755 = vcvt.s32.f32 %v475
    %v1756 = vcvt.s32.f32 %v476
    %v1757 = vcvt.s32.f32 %v477
    %v1758 = vcvt.s32.f32 %v478
    %v1759 = vcvt.s32.f32 %v479
    %v1760 = vcvt.s32.f32 %v480
    %v1761 = vcvt.s32.f32 %v481
    %v1762 = vcvt.s32.f32 %v482
    %v1763 = vcvt.s32.f32 %v483
    %v1764 = vcvt.s32.f32 %v484
    %v1765 = vcvt.s32.f32 %v485
    %v1766 = vcvt.s32.f32 %v486
    %v1767 = vcvt.s32.f32 %v487
    %v1768 = vcvt.s32.f32 %v488
    %v1769 = vcvt.s32.f32 %v489
    %v1770 = vcvt.s32.f32 %v490
    %v1771 = vcvt.s32.f32 %v491
    %v1772 = vcvt.s32.f32 %v492
    %v1773 = vcvt.s32.f32 %v493
    %v1774 = vcvt.s32.f32 %v494
    %v1775 = vcvt.s32.f32 %v495
    %v1776 = vcvt.s32.f32 %v496
    %v1777 = vcvt.s32.f32 %v497
    %v1778 = vcvt.s32.f32 %v498
    %v1779 = vcvt.s32.f32 %v499
    %v1780 = vcvt.s32.f32 %v500
    %v1781 = vcvt.s32.f32 %v501
    %v1782 = vcvt.s32.f32 %v502
    %v1783 = vcvt.s32.f32 %v503
    %v1784 = vcvt.s32.f32 %v504
    %v1785 = vcvt.s32.f32 %v505
    %v1786 = vcvt.s32.f32 %v506
    %v1787 = vcvt.s32.f32 %v507
    %v1788 = vcvt.s32.f32 %v508
    %v1789 = vcvt.s32.f32 %v509
    %v1790 = vcvt.s32.f32 %v510
    %v1791 = vcvt.s32.f32 %v511
    %v1792 = vcvt.s32.f32 %v512
    %v1793 = vcvt.s32.f32 %v513
    %v1794 = vcvt.s32.f32 %v514
    %v1795 = vcvt.s32.f32 %v515
    %v1796 = vcvt.s32.f32 %v516
    %v1797 = vcvt.s32.f32 %v517
    %v1798 = vcvt.s32.f32 %v518
    %v1799 = vcvt.s32.f32 %v519
    %v1800 = vcvt.s32.f32 %v520
    %v1801 = vcvt.s32.f32 %v521
    %v1802 = vcvt.s32.f32 %v522
    %v1803 = vcvt.s32.f32 %v523
    %v1804 = vcvt.s32.f32 %v524
    %v1805 = vcvt.s32.f32 %v525
    %v1806 = vcvt.s32.f32 %v526
    %v1807 = vcvt.s32.f32 %v527
    %v1808 = vcvt.s32.f32 %v528
    %v1809 = vcvt.s32.f32 %v529
    %v1810 = vcvt.s32.f32 %v530
    %v1811 = vcvt.s32.f32 %v531
    %v1812 = vcvt.s32.f32 %v532
    %v1813 = vcvt.s32.f32 %v533
    %v1814 = vcvt.s32.f32 %v534
    %v1815 = vcvt.s32.f32 %v535
    %v1816 = vcvt.s32.f32 %v536
    %v1817 = vcvt.s32.f32 %v537
    %v1818 = vcvt.s32.f32 %v538
    %v1819 = vcvt.s32.f32 %v539
    %v1820 = vcvt.s32.f32 %v540
    %v1821 = vcvt.s32.f32 %v541
    %v1822 = vcvt.s32.f32 %v542
    %v1823 = vcvt.s32.f32 %v543
    %v1824 = vcvt.s32.f32 %v544
    %v1825 = vcvt.s32.f32 %v545
    %v1826 = vcvt.s32.f32 %v546
    %v1827 = vcvt.s32.f32 %v547
    %v1828 = vcvt.s32.f32 %v548
    %v1829 = vcvt.s32.f32 %v549
    %v1830 = vcvt.s32.f32 %v550
    %v1831 = vcvt.s32.f32 %v551
    %v1832 = vcvt.s32.f32 %v552
    %v1833 = vcvt.s32.f32 %v553
    %v1834 = vcvt.s32.f32 %v554
    %v1835 = vcvt.s32.f32 %v555
    %v1836 = vcvt.s32.f32 %v556
    %v1837 = vcvt.s32.f32 %v557
    %v1838 = vcvt.s32.f32 %v558
    %v1839 = vcvt.s32.f32 %v559
    %v1840 = vcvt.s32.f32 %v560
    %v1841 = vcvt.s32.f32 %v561
    %v1842 = vcvt.s32.f32 %v562
    %v1843 = vcvt.s32.f32 %v563
    %v1844 = vcvt.s32.f32 %v564
    %v1845 = vcvt.s32.f32 %v565
    %v1846 = vcvt.s32.f32 %v566
    %v1847 = vcvt.s32.f32 %v567
    %v1848 = vcvt.s32.f32 %v568
    %v1849 = vcvt.s32.f32 %v569
    %v1850 = vcvt.s32.f32 %v570
    %v1851 = vcvt.s32.f32 %v571
    %v1852 = vcvt.s32.f32 %v572
    %v1853 = vcvt.s32.f32 %v573
    %v1854 = vcvt.s32.f32 %v574
    %v1855 = vcvt.s32.f32 %v575
    %v1856 = vcvt.s32.f32 %v576
    %v1857 = vcvt.s32.f32 %v577
    %v1858 = vcvt.s32.f32 %v578
    %v1859 = vcvt.s32.f32 %v579
    %v1860 = vcvt.s32.f32 %v580
    %v1861 = vcvt.s32.f32 %v581
    %v1862 = vcvt.s32.f32 %v582
    %v1863 = vcvt.s32.f32 %v583
    %v1864 = vcvt.s32.f32 %v584
    %v1865 = vcvt.s32.f32 %v585
    %v1866 = vcvt.s32.f32 %v586
    %v1867 = vcvt.s32.f32 %v587
    %v1868 = vcvt.s32.f32 %v588
    %v1869 = vcvt.s32.f32 %v589
    %v1870 = vcvt.s32.f32 %v590
    %v1871 = vcvt.s32.f32 %v591
    %v1872 = vcvt.s32.f32 %v592
    %v1873 = vcvt.s32.f32 %v593
    %v1874 = vcvt.s32.f32 %v594
    %v1875 = vcvt.s32.f32 %v595
    %v1876 = vcvt.s32.f32 %v596
    %v1877 = vcvt.s32.f32 %v597
    %v1878 = vcvt.s32.f32 %v598
    %v1879 = vcvt.s32.f32 %v599
    %v1880 = vcvt.s32.f32 %v600
    %v1881 = vcvt.s32.f32 %v601
    %v1882 = vcvt.s32.f32 %v602
    %v1883 = vcvt.s32.f32 %v603
    %v1884 = vcvt.s32.f32 %v604
    %v1885 = vcvt.s32.f32 %v605
    %v1886 = vcvt.s32.f32 %v606
    %v1887 = vcvt.s32.f32 %v607
    %v1888 = vcvt.s32.f32 %v608
    %v1889 = vcvt.s32.f32 %v609
    %v1890 = vcvt.s32.f32 %v610
    %v1891 = vcvt.s32.f32 %v611
    %v1892 = vcvt.s32.f32 %v612
    %v1893 = vcvt.s32.f32 %v613
    %v1894 = vcvt.s32.f32 %v614
    %v1895 = vcvt.s32.f32 %v615
    %v1896 = vcvt.s32.f32 %v616
    %v1897 = vcvt.s32.f32 %v617
    %v1898 = vcvt.s32.f32 %v618
    %v1899 = vcvt.s32.f32 %v619
    %v1900 = vcvt.s32.f32 %v620
    %v1901 = vcvt.s32.f32 %v621
    %v1902 = vcvt.s32.f32 %v622
    %v1903 = vcvt.s32.f32 %v623
    %v1904 = vcvt.s32.f32 %v624
    %v1905 = vcvt.s32.f32 %v625
    %v1906 = vcvt.s32.f32 %v626
    %v1907 = vcvt.s32.f32 %v627
    %v1908 = vcvt.s32.f32 %v628
    %v1909 = vcvt.s32.f32 %v629
    %v1910 = vcvt.s32.f32 %v630
    %v1911 = vcvt.s32.f32 %v631
    %v1912 = vcvt.s32.f32 %v632
    %v1913 = vcvt.s32.f32 %v633
    %v1914 = vcvt.s32.f32 %v634
    %v1915 = vcvt.s32.f32 %v635
    %v1916 = vcvt.s32.f32 %v636
    %v1917 = vcvt.s32.f32 %v637
    %v1918 = vcvt.s32.f32 %v638
    %v1919 = vcvt.s32.f32 %v639
    %v1920 = vcvt.s32.f32 %v640
    %v1921 = vcvt.s32.f32 %v641
    %v1922 = vcvt.s32.f32 %v642
    %v1923 = vcvt.s32.f32 %v643
    %v1924 = vcvt.s32.f32 %v644
    %v1925 = vcvt.s32.f32 %v645
    %v1926 = vcvt.s32.f32 %v646
    %v1927 = vcvt.s32.f32 %v647
    %v1928 = vcvt.s32.f32 %v648
    %v1929 = vcvt.s32.f32 %v649
    %v1930 = vcvt.s32.f32 %v650
    %v1931 = vcvt.s32.f32 %v651
    %v1932 = vcvt.s32.f32 %v652
    %v1933 = vcvt.s32.f32 %v653
    %v1934 = vcvt.s32.f32 %v654
    %v1935 = vcvt.s32.f32 %v655
    %v1936 = vcvt.s32.f32 %v656
    %v1937 = vcvt.s32.f32 %v657
    %v1938 = vcvt.s32.f32 %v658
    %v1939 = vcvt.s32.f32 %v659
    %v1940 = vcvt.s32.f32 %v660
    %v1941 = vcvt.s32.f32 %v661
    %v1942 = vcvt.s32.f32 %v662
    %v1943 = vcvt.s32.f32 %v663
    %v1944 = vcvt.s32.f32 %v664
    %v1945 = vcvt.s32.f32 %v665
    %v1946 = vcvt.s32.f32 %v666
    %v1947 = vcvt.s32.f32 %v667
    %v1948 = vcvt.s32.f32 %v668
    %v1949 = vcvt.s32.f32 %v669
    %v1950 = vcvt.s32.f32 %v670
    %v1951 = vcvt.s32.f32 %v671
    %v1952 = vcvt.s32.f32 %v672
    %v1953 = vcvt.s32.f32 %v673
    %v1954 = vcvt.s32.f32 %v674
    %v1955 = vcvt.s32.f32 %v675
    %v1956 = vcvt.s32.f32 %v676
    %v1957 = vcvt.s32.f32 %v677
    %v1958 = vcvt.s32.f32 %v678
    %v1959 = vcvt.s32.f32 %v679
    %v1960 = vcvt.s32.f32 %v680
    %v1961 = vcvt.s32.f32 %v681
    %v1962 = vcvt.s32.f32 %v682
    %v1963 = vcvt.s32.f32 %v683
    %v1964 = vcvt.s32.f32 %v684
    %v1965 = vcvt.s32.f32 %v685
    %v1966 = vcvt.s32.f32 %v686
    %v1967 = vcvt.s32.f32 %v687
    %v1968 = vcvt.s32.f32 %v688
    %v1969 = vcvt.s32.f32 %v689
    %v1970 = vcvt.s32.f32 %v690
    %v1971 = vcvt.s32.f32 %v691
    %v1972 = vcvt.s32.f32 %v692
    %v1973 = vcvt.s32.f32 %v693
    %v1974 = vcvt.s32.f32 %v694
    %v1975 = vcvt.s32.f32 %v695
    %v1976 = vcvt.s32.f32 %v696
    %v1977 = vcvt.s32.f32 %v697
    %v1978 = vcvt.s32.f32 %v698
    %v1979 = vcvt.s32.f32 %v699
    %v1980 = vcvt.s32.f32 %v700
    %v1981 = vcvt.s32.f32 %v701
    %v1982 = vcvt.s32.f32 %v702
    %v1983 = vcvt.s32.f32 %v703
    %v1984 = vcvt.s32.f32 %v704
    %v1985 = vcvt.s32.f32 %v705
    %v1986 = vcvt.s32.f32 %v706
    %v1987 = vcvt.s32.f32 %v707
    %v1988 = vcvt.s32.f32 %v708
    %v1989 = vcvt.s32.f32 %v709
    %v1990 = vcvt.s32.f32 %v710
    %v1991 = vcvt.s32.f32 %v711
    %v1992 = vcvt.s32.f32 %v712
    %v1993 = vcvt.s32.f32 %v713
    %v1994 = vcvt.s32.f32 %v714
    %v1995 = vcvt.s32.f32 %v715
    %v1996 = vcvt.s32.f32 %v716
    %v1997 = vcvt.s32.f32 %v717
    %v1998 = vcvt.s32.f32 %v718
    %v1999 = vcvt.s32.f32 %v719
    %v2000 = vcvt.s32.f32 %v720
    %v2001 = vcvt.s32.f32 %v721
    %v2002 = vcvt.s32.f32 %v722
    %v2003 = vcvt.s32.f32 %v723
    %v2004 = vcvt.s32.f32 %v724
    %v2005 = vcvt.s32.f32 %v725
    %v2006 = vcvt.s32.f32 %v726
    %v2007 = vcvt.s32.f32 %v727
    %v2008 = vcvt.s32.f32 %v728
    %v2009 = vcvt.s32.f32 %v729
    %v2010 = vcvt.s32.f32 %v730
    %v2011 = vcvt.s32.f32 %v731
    %v2012 = vcvt.s32.f32 %v732
    %v2013 = vcvt.s32.f32 %v733
    %v2014 = vcvt.s32.f32 %v734
    %v2015 = vcvt.s32.f32 %v735
    %v2016 = vcvt.s32.f32 %v736
    %v2017 = vcvt.s32.f32 %v737
    %v2018 = vcvt.s32.f32 %v738
    %v2019 = vcvt.s32.f32 %v739
    %v2020 = vcvt.s32.f32 %v740
    %v2021 = vcvt.s32.f32 %v741
    %v2022 = vcvt.s32.f32 %v742
    %v2023 = vcvt.s32.f32 %v743
    %v2024 = vcvt.s32.f32 %v744
    %v2025 = vcvt.s32.f32 %v745
    %v2026 = vcvt.s32.f32 %v746
    %v2027 = vcvt.s32.f32 %v747
    %v2028 = vcvt.s32.f32 %v748
    %v2029 = vcvt.s32.f32 %v749
    %v2030 = vcvt.s32.f32 %v750
    %v2031 = vcvt.s32.f32 %v751
    %v2032 = vcvt.s32.f32 %v752
    %v2033 = vcvt.s32.f32 %v753
    %v2034 = vcvt.s32.f32 %v754
    %v2035 = vcvt.s32.f32 %v755
    %v2036 = vcvt.s32.f32 %v756
    %v2037 = vcvt.s32.f32 %v757
    %v2038 = vcvt.s32.f32 %v758
    %v2039 = vcvt.s32.f32 %v759
    %v2040 = vcvt.s32.f32 %v760
    %v2041 = vcvt.s32.f32 %v761
    %v2042 = vcvt.s32.f32 %v762
    %v2043 = vcvt.s32.f32 %v763
    %v2044 = vcvt.s32.f32 %v764
    %v2045 = vcvt.s32.f32 %v765
    %v2046 = vcvt.s32.f32 %v766
    %v2047 = vcvt.s32.f32 %v767
    %v2048 = vcvt.s32.f32 %v768
    %v2049 = vcvt.s32.f32 %v769
    %v2050 = vcvt.s32.f32 %v770
    %v2051 = vcvt.s32.f32 %v771
    %v2052 = vcvt.s32.f32 %v772
    %v2053 = vcvt.s32.f32 %v773
    %v2054 = vcvt.s32.f32 %v774
    %v2055 = vcvt.s32.f32 %v775
    %v2056 = vcvt.s32.f32 %v776
    %v2057 = vcvt.s32.f32 %v777
    %v2058 = vcvt.s32.f32 %v778
    %v2059 = vcvt.s32.f32 %v779
    %v2060 = vcvt.s32.f32 %v780
    %v2061 = vcvt.s32.f32 %v781
    %v2062 = vcvt.s32.f32 %v782
    %v2063 = vcvt.s32.f32 %v783
    %v2064 = vcvt.s32.f32 %v784
    %v2065 = vcvt.s32.f32 %v785
    %v2066 = vcvt.s32.f32 %v786
    %v2067 = vcvt.s32.f32 %v787
    %v2068 = vcvt.s32.f32 %v788
    %v2069 = vcvt.s32.f32 %v789
    %v2070 = vcvt.s32.f32 %v790
    %v2071 = vcvt.s32.f32 %v791
    %v2072 = vcvt.s32.f32 %v792
    %v2073 = vcvt.s32.f32 %v793
    %v2074 = vcvt.s32.f32 %v794
    %v2075 = vcvt.s32.f32 %v795
    %v2076 = vcvt.s32.f32 %v796
    %v2077 = vcvt.s32.f32 %v797
    %v2078 = vcvt.s32.f32 %v798
    %v2079 = vcvt.s32.f32 %v799
    %v2080 = vcvt.s32.f32 %v800
    %v2081 = vcvt.s32.f32 %v801
    %v2082 = vcvt.s32.f32 %v802
    %v2083 = vcvt.s32.f32 %v803
    %v2084 = vcvt.s32.f32 %v804
    %v2085 = vcvt.s32.f32 %v805
    %v2086 = vcvt.s32.f32 %v806
    %v2087 = vcvt.s32.f32 %v807
    %v2088 = vcvt.s32.f32 %v808
    %v2089 = vcvt.s32.f32 %v809
    %v2090 = vcvt.s32.f32 %v810
    %v2091 = vcvt.s32.f32 %v811
    %v2092 = vcvt.s32.f32 %v812
    %v2093 = vcvt.s32.f32 %v813
    %v2094 = vcvt.s32.f32 %v814
    %v2095 = vcvt.s32.f32 %v815
    %v2096 = vcvt.s32.f32 %v816
    %v2097 = vcvt.s32.f32 %v817
    %v2098 = vcvt.s32.f32 %v818
    %v2099 = vcvt.s32.f32 %v819
    %v2100 = vcvt.s32.f32 %v820
    %v2101 = vcvt.s32.f32 %v821
    %v2102 = vcvt.s32.f32 %v822
    %v2103 = vcvt.s32.f32 %v823
    %v2104 = vcvt.s32.f32 %v824
    %v2105 = vcvt.s32.f32 %v825
    %v2106 = vcvt.s32.f32 %v826
    %v2107 = vcvt.s32.f32 %v827
    %v2108 = vcvt.s32.f32 %v828
    %v2109 = vcvt.s32.f32 %v829
    %v2110 = vcvt.s32.f32 %v830
    %v2111 = vcvt.s32.f32 %v831
    %v2112 = vcvt.s32.f32 %v832
    %v2113 = vcvt.s32.f32 %v833
    %v2114 = vcvt.s32.f32 %v834
    %v2115 = vcvt.s32.f32 %v835
    %v2116 = vcvt.s32.f32 %v836
    %v2117 = vcvt.s32.f32 %v837
    %v2118 = vcvt.s32.f32 %v838
    %v2119 = vcvt.s32.f32 %v839
    %v2120 = vcvt.s32.f32 %v840
    %v2121 = vcvt.s32.f32 %v841
    %v2122 = vcvt.s32.f32 %v842
    %v2123 = vcvt.s32.f32 %v843
    %v2124 = vcvt.s32.f32 %v844
    %v2125 = vcvt.s32.f32 %v845
    %v2126 = vcvt.s32.f32 %v846
    %v2127 = vcvt.s32.f32 %v847
    %v2128 = vcvt.s32.f32 %v848
    %v2129 = vcvt.s32.f32 %v849
    %v2130 = vcvt.s32.f32 %v850
    %v2131 = vcvt.s32.f32 %v851
    %v2132 = vcvt.s32.f32 %v852
    %v2133 = vcvt.s32.f32 %v853
    %v2134 = vcvt.s32.f32 %v854
    %v2135 = vcvt.s32.f32 %v855
    %v2136 = vcvt.s32.f32 %v856
    %v2137 = vcvt.s32.f32 %v857
    %v2138 = vcvt.s32.f32 %v858
    %v2139 = vcvt.s32.f32 %v859
    %v2140 = vcvt.s32.f32 %v860
    %v2141 = vcvt.s32.f32 %v861
    %v2142 = vcvt.s32.f32 %v862
    %v2143 = vcvt.s32.f32 %v863
    %v2144 = vcvt.s32.f32 %v864
    %v2145 = vcvt.s32.f32 %v865
    %v2146 = vcvt.s32.f32 %v866
    %v2147 = vcvt.s32.f32 %v867
    %v2148 = vcvt.s32.f32 %v868
    %v2149 = vcvt.s32.f32 %v869
    %v2150 = vcvt.s32.f32 %v870
    %v2151 = vcvt.s32.f32 %v871
    %v2152 = vcvt.s32.f32 %v872
    %v2153 = vcvt.s32.f32 %v873
    %v2154 = vcvt.s32.f32 %v874
    %v2155 = vcvt.s32.f32 %v875
    %v2156 = vcvt.s32.f32 %v876
    %v2157 = vcvt.s32.f32 %v877
    %v2158 = vcvt.s32.f32 %v878
    %v2159 = vcvt.s32.f32 %v879
    %v2160 = vcvt.s32.f32 %v880
    %v2161 = vcvt.s32.f32 %v881
    %v2162 = vcvt.s32.f32 %v882
    %v2163 = vcvt.s32.f32 %v883
    %v2164 = vcvt.s32.f32 %v884
    %v2165 = vcvt.s32.f32 %v885
    %v2166 = vcvt.s32.f32 %v886
    %v2167 = vcvt.s32.f32 %v887
    %v2168 = vcvt.s32.f32 %v888
    %v2169 = vcvt.s32.f32 %v889
    %v2170 = vcvt.s32.f32 %v890
    %v2171 = vcvt.s32.f32 %v891
    %v2172 = vcvt.s32.f32 %v892
    %v2173 = vcvt.s32.f32 %v893
    %v2174 = vcvt.s32.f32 %v894
    %v2175 = vcvt.s32.f32 %v895
    %v2176 = vcvt.s32.f32 %v896
    %v2177 = vcvt.s32.f32 %v897
    %v2178 = vcvt.s32.f32 %v898
    %v2179 = vcvt.s32.f32 %v899
    %v2180 = vcvt.s32.f32 %v900
    %v2181 = vcvt.s32.f32 %v901
    %v2182 = vcvt.s32.f32 %v902
    %v2183 = vcvt.s32.f32 %v903
    %v2184 = vcvt.s32.f32 %v904
    %v2185 = vcvt.s32.f32 %v905
    %v2186 = vcvt.s32.f32 %v906
    %v2187 = vcvt.s32.f32 %v907
    %v2188 = vcvt.s32.f32 %v908
    %v2189 = vcvt.s32.f32 %v909
    %v2190 = vcvt.s32.f32 %v910
    %v2191 = vcvt.s32.f32 %v911
    %v2192 = vcvt.s32.f32 %v912
    %v2193 = vcvt.s32.f32 %v913
    %v2194 = vcvt.s32.f32 %v914
    %v2195 = vcvt.s32.f32 %v915
    %v2196 = vcvt.s32.f32 %v916
    %v2197 = vcvt.s32.f32 %v917
    %v2198 = vcvt.s32.f32 %v918
    %v2199 = vcvt.s32.f32 %v919
    %v2200 = vcvt.s32.f32 %v920
    %v2201 = vcvt.s32.f32 %v921
    %v2202 = vcvt.s32.f32 %v922
    %v2203 = vcvt.s32.f32 %v923
    %v2204 = vcvt.s32.f32 %v924
    %v2205 = vcvt.s32.f32 %v925
    %v2206 = vcvt.s32.f32 %v926
    %v2207 = vcvt.s32.f32 %v927
    %v2208 = vcvt.s32.f32 %v928
    %v2209 = vcvt.s32.f32 %v929
    %v2210 = vcvt.s32.f32 %v930
    %v2211 = vcvt.s32.f32 %v931
    %v2212 = vcvt.s32.f32 %v932
    %v2213 = vcvt.s32.f32 %v933
    %v2214 = vcvt.s32.f32 %v934
    %v2215 = vcvt.s32.f32 %v935
    %v2216 = vcvt.s32.f32 %v936
    %v2217 = vcvt.s32.f32 %v937
    %v2218 = vcvt.s32.f32 %v938
    %v2219 = vcvt.s32.f32 %v939
    %v2220 = vcvt.s32.f32 %v940
    %v2221 = vcvt.s32.f32 %v941
    %v2222 = vcvt.s32.f32 %v942
    %v2223 = vcvt.s32.f32 %v943
    %v2224 = vcvt.s32.f32 %v944
    %v2225 = vcvt.s32.f32 %v945
    %v2226 = vcvt.s32.f32 %v946
    %v2227 = vcvt.s32.f32 %v947
    %v2228 = vcvt.s32.f32 %v948
    %v2229 = vcvt.s32.f32 %v949
    %v2230 = vcvt.s32.f32 %v950
    %v2231 = vcvt.s32.f32 %v951
    %v2232 = vcvt.s32.f32 %v952
    %v2233 = vcvt.s32.f32 %v953
    %v2234 = vcvt.s32.f32 %v954
    %v2235 = vcvt.s32.f32 %v955
    %v2236 = vcvt.s32.f32 %v956
    %v2237 = vcvt.s32.f32 %v957
    %v2238 = vcvt.s32.f32 %v958
    %v2239 = vcvt.s32.f32 %v959
    %v2240 = vcvt.s32.f32 %v960
    %v2241 = vcvt.s32.f32 %v961
    %v2242 = vcvt.s32.f32 %v962
    %v2243 = vcvt.s32.f32 %v963
    %v2244 = vcvt.s32.f32 %v964
    %v2245 = vcvt.s32.f32 %v965
    %v2246 = vcvt.s32.f32 %v966
    %v2247 = vcvt.s32.f32 %v967
    %v2248 = vcvt.s32.f32 %v968
    %v2249 = vcvt.s32.f32 %v969
    %v2250 = vcvt.s32.f32 %v970
    %v2251 = vcvt.s32.f32 %v971
    %v2252 = vcvt.s32.f32 %v972
    %v2253 = vcvt.s32.f32 %v973
    %v2254 = vcvt.s32.f32 %v974
    %v2255 = vcvt.s32.f32 %v975
    %v2256 = vcvt.s32.f32 %v976
    %v2257 = vcvt.s32.f32 %v977
    %v2258 = vcvt.s32.f32 %v978
    %v2259 = vcvt.s32.f32 %v979
    %v2260 = vcvt.s32.f32 %v980
    %v2261 = vcvt.s32.f32 %v981
    %v2262 = vcvt.s32.f32 %v982
    %v2263 = vcvt.s32.f32 %v983
    %v2264 = vcvt.s32.f32 %v984
    %v2265 = vcvt.s32.f32 %v985
    %v2266 = vcvt.s32.f32 %v986
    %v2267 = vcvt.s32.f32 %v987
    %v2268 = vcvt.s32.f32 %v988
    %v2269 = vcvt.s32.f32 %v989
    %v2270 = vcvt.s32.f32 %v990
    %v2271 = vcvt.s32.f32 %v991
    %v2272 = vcvt.s32.f32 %v992
    %v2273 = vcvt.s32.f32 %v993
    %v2274 = vcvt.s32.f32 %v994
    %v2275 = vcvt.s32.f32 %v995
    %v2276 = vcvt.s32.f32 %v996
    %v2277 = vcvt.s32.f32 %v997
    %v2278 = vcvt.s32.f32 %v998
    %v2279 = vcvt.s32.f32 %v999
    %v2280 = vcvt.s32.f32 %v1000
    %v2281 = vcvt.s32.f32 %v1001
    %v2282 = vcvt.s32.f32 %v1002
    %v2283 = vcvt.s32.f32 %v1003
    %v2284 = vcvt.s32.f32 %v1004
    %v2285 = vcvt.s32.f32 %v1005
    %v2286 = vcvt.s32.f32 %v1006
    %v2287 = vcvt.s32.f32 %v1007
    %v2288 = vcvt.s32.f32 %v1008
    %v2289 = vcvt.s32.f32 %v1009
    %v2290 = vcvt.s32.f32 %v1010
    %v2291 = vcvt.s32.f32 %v1011
    %v2292 = vcvt.s32.f32 %v1012
    %v2293 = vcvt.s32.f32 %v1013
    %v2294 = vcvt.s32.f32 %v1014
    %v2295 = vcvt.s32.f32 %v1015
    %v2296 = vcvt.s32.f32 %v1016
    %v2297 = vcvt.s32.f32 %v1017
    %v2298 = vcvt.s32.f32 %v1018
    %v2299 = vcvt.s32.f32 %v1019
    %v2300 = vcvt.s32.f32 %v1020
    %v2301 = vcvt.s32.f32 %v1021
    %v2302 = vcvt.s32.f32 %v1022
    %v2303 = vcvt.s32.f32 %v1023
    %v2304 = vcvt.s32.f32 %v1024
    %v2305 = vcvt.s32.f32 %v1025
    %v2306 = vcvt.s32.f32 %v1026
    %v2307 = vcvt.s32.f32 %v1027
    %v2308 = vcvt.s32.f32 %v1028
    %v2309 = vcvt.s32.f32 %v1029
    %v2310 = vcvt.s32.f32 %v1030
    %v2311 = vcvt.s32.f32 %v1031
    %v2312 = vcvt.s32.f32 %v1032
    %v2313 = vcvt.s32.f32 %v1033
    %v2314 = vcvt.s32.f32 %v1034
    %v2315 = vcvt.s32.f32 %v1035
    %v2316 = vcvt.s32.f32 %v1036
    %v2317 = vcvt.s32.f32 %v1037
    %v2318 = vcvt.s32.f32 %v1038
    %v2319 = vcvt.s32.f32 %v1039
    %v2320 = vcvt.s32.f32 %v1040
    %v2321 = vcvt.s32.f32 %v1041
    %v2322 = vcvt.s32.f32 %v1042
    %v2323 = vcvt.s32.f32 %v1043
    %v2324 = vcvt.s32.f32 %v1044
    %v2325 = vcvt.s32.f32 %v1045
    %v2326 = vcvt.s32.f32 %v1046
    %v2327 = vcvt.s32.f32 %v1047
    %v2328 = vcvt.s32.f32 %v1048
    %v2329 = vcvt.s32.f32 %v1049
    %v2330 = vcvt.s32.f32 %v1050
    %v2331 = vcvt.s32.f32 %v1051
    %v2332 = vcvt.s32.f32 %v1052
    %v2333 = vcvt.s32.f32 %v1053
    %v2334 = vcvt.s32.f32 %v1054
    %v2335 = vcvt.s32.f32 %v1055
    %v2336 = vcvt.s32.f32 %v1056
    %v2337 = vcvt.s32.f32 %v1057
    %v2338 = vcvt.s32.f32 %v1058
    %v2339 = vcvt.s32.f32 %v1059
    %v2340 = vcvt.s32.f32 %v1060
    %v2341 = vcvt.s32.f32 %v1061
    %v2342 = vcvt.s32.f32 %v1062
    %v2343 = vcvt.s32.f32 %v1063
    %v2344 = vcvt.s32.f32 %v1064
    %v2345 = vcvt.s32.f32 %v1065
    %v2346 = vcvt.s32.f32 %v1066
    %v2347 = vcvt.s32.f32 %v1067
    %v2348 = vcvt.s32.f32 %v1068
    %v2349 = vcvt.s32.f32 %v1069
    %v2350 = vcvt.s32.f32 %v1070
    %v2351 = vcvt.s32.f32 %v1071
    %v2352 = vcvt.s32.f32 %v1072
    %v2353 = vcvt.s32.f32 %v1073
    %v2354 = vcvt.s32.f32 %v1074
    %v2355 = vcvt.s32.f32 %v1075
    %v2356 = vcvt.s32.f32 %v1076
    %v2357 = vcvt.s32.f32 %v1077
    %v2358 = vcvt.s32.f32 %v1078
    %v2359 = vcvt.s32.f32 %v1079
    %v2360 = vcvt.s32.f32 %v1080
    %v2361 = vcvt.s32.f32 %v1081
    %v2362 = vcvt.s32.f32 %v1082
    %v2363 = vcvt.s32.f32 %v1083
    %v2364 = vcvt.s32.f32 %v1084
    %v2365 = vcvt.s32.f32 %v1085
    %v2366 = vcvt.s32.f32 %v1086
    %v2367 = vcvt.s32.f32 %v1087
    %v2368 = vcvt.s32.f32 %v1088
    %v2369 = vcvt.s32.f32 %v1089
    %v2370 = vcvt.s32.f32 %v1090
    %v2371 = vcvt.s32.f32 %v1091
    %v2372 = vcvt.s32.f32 %v1092
    %v2373 = vcvt.s32.f32 %v1093
    %v2374 = vcvt.s32.f32 %v1094
    %v2375 = vcvt.s32.f32 %v1095
    %v2376 = vcvt.s32.f32 %v1096
    %v2377 = vcvt.s32.f32 %v1097
    %v2378 = vcvt.s32.f32 %v1098
    %v2379 = vcvt.s32.f32 %v1099
    %v2380 = vcvt.s32.f32 %v1100
    %v2381 = vcvt.s32.f32 %v1101
    %v2382 = vcvt.s32.f32 %v1102
    %v2383 = vcvt.s32.f32 %v1103
    %v2384 = vcvt.s32.f32 %v1104
    %v2385 = vcvt.s32.f32 %v1105
    %v2386 = vcvt.s32.f32 %v1106
    %v2387 = vcvt.s32.f32 %v1107
    %v2388 = vcvt.s32.f32 %v1108
    %v2389 = vcvt.s32.f32 %v1109
    %v2390 = vcvt.s32.f32 %v1110
    %v2391 = vcvt.s32.f32 %v1111
    %v2392 = vcvt.s32.f32 %v1112
    %v2393 = vcvt.s32.f32 %v1113
    %v2394 = vcvt.s32.f32 %v1114
    %v2395 = vcvt.s32.f32 %v1115
    %v2396 = vcvt.s32.f32 %v1116
    %v2397 = vcvt.s32.f32 %v1117
    %v2398 = vcvt.s32.f32 %v1118
    %v2399 = vcvt.s32.f32 %v1119
    %v2400 = vcvt.s32.f32 %v1120
    %v2401 = vcvt.s32.f32 %v1121
    %v2402 = vcvt.s32.f32 %v1122
    %v2403 = vcvt.s32.f32 %v1123
    %v2404 = vcvt.s32.f32 %v1124
    %v2405 = vcvt.s32.f32 %v1125
    %v2406 = vcvt.s32.f32 %v1126
    %v2407 = vcvt.s32.f32 %v1127
    %v2408 = vcvt.s32.f32 %v1128
    %v2409 = vcvt.s32.f32 %v1129
    %v2410 = vcvt.s32.f32 %v1130
    %v2411 = vcvt.s32.f32 %v1131
    %v2412 = vcvt.s32.f32 %v1132
    %v2413 = vcvt.s32.f32 %v1133
    %v2414 = vcvt.s32.f32 %v1134
    %v2415 = vcvt.s32.f32 %v1135
    %v2416 = vcvt.s32.f32 %v1136
    %v2417 = vcvt.s32.f32 %v1137
    %v2418 = vcvt.s32.f32 %v1138
    %v2419 = vcvt.s32.f32 %v1139
    %v2420 = vcvt.s32.f32 %v1140
    %v2421 = vcvt.s32.f32 %v1141
    %v2422 = vcvt.s32.f32 %v1142
    %v2423 = vcvt.s32.f32 %v1143
    %v2424 = vcvt.s32.f32 %v1144
    %v2425 = vcvt.s32.f32 %v1145
    %v2426 = vcvt.s32.f32 %v1146
    %v2427 = vcvt.s32.f32 %v1147
    %v2428 = vcvt.s32.f32 %v1148
    %v2429 = vcvt.s32.f32 %v1149
    %v2430 = vcvt.s32.f32 %v1150
    %v2431 = vcvt.s32.f32 %v1151
    %v2432 = vcvt.s32.f32 %v1152
    %v2433 = vcvt.s32.f32 %v1153
    %v2434 = vcvt.s32.f32 %v1154
    %v2435 = vcvt.s32.f32 %v1155
    %v2436 = vcvt.s32.f32 %v1156
    %v2437 = vcvt.s32.f32 %v1157
    %v2438 = vcvt.s32.f32 %v1158
    %v2439 = vcvt.s32.f32 %v1159
    %v2440 = vcvt.s32.f32 %v1160
    %v2441 = vcvt.s32.f32 %v1161
    %v2442 = vcvt.s32.f32 %v1162
    %v2443 = vcvt.s32.f32 %v1163
    %v2444 = vcvt.s32.f32 %v1164
    %v2445 = vcvt.s32.f32 %v1165
    %v2446 = vcvt.s32.f32 %v1166
    %v2447 = vcvt.s32.f32 %v1167
    %v2448 = vcvt.s32.f32 %v1168
    %v2449 = vcvt.s32.f32 %v1169
    %v2450 = vcvt.s32.f32 %v1170
    %v2451 = vcvt.s32.f32 %v1171
    %v2452 = vcvt.s32.f32 %v1172
    %v2453 = vcvt.s32.f32 %v1173
    %v2454 = vcvt.s32.f32 %v1174
    %v2455 = vcvt.s32.f32 %v1175
    %v2456 = vcvt.s32.f32 %v1176
    %v2457 = vcvt.s32.f32 %v1177
    %v2458 = vcvt.s32.f32 %v1178
    %v2459 = vcvt.s32.f32 %v1179
    %v2460 = vcvt.s32.f32 %v1180
    %v2461 = vcvt.s32.f32 %v1181
    %v2462 = vcvt.s32.f32 %v1182
    %v2463 = vcvt.s32.f32 %v1183
    %v2464 = vcvt.s32.f32 %v1184
    %v2465 = vcvt.s32.f32 %v1185
    %v2466 = vcvt.s32.f32 %v1186
    %v2467 = vcvt.s32.f32 %v1187
    %v2468 = vcvt.s32.f32 %v1188
    %v2469 = vcvt.s32.f32 %v1189
    %v2470 = vcvt.s32.f32 %v1190
    %v2471 = vcvt.s32.f32 %v1191
    %v2472 = vcvt.s32.f32 %v1192
    %v2473 = vcvt.s32.f32 %v1193
    %v2474 = vcvt.s32.f32 %v1194
    %v2475 = vcvt.s32.f32 %v1195
    %v2476 = vcvt.s32.f32 %v1196
    %v2477 = vcvt.s32.f32 %v1197
    %v2478 = vcvt.s32.f32 %v1198
    %v2479 = vcvt.s32.f32 %v1199
    %v2480 = vcvt.s32.f32 %v1200
    %v2481 = vcvt.s32.f32 %v1201
    %v2482 = vcvt.s32.f32 %v1202
    %v2483 = vcvt.s32.f32 %v1203
    %v2484 = vcvt.s32.f32 %v1204
    %v2485 = vcvt.s32.f32 %v1205
    %v2486 = vcvt.s32.f32 %v1206
    %v2487 = vcvt.s32.f32 %v1207
    %v2488 = vcvt.s32.f32 %v1208
    %v2489 = vcvt.s32.f32 %v1209
    %v2490 = vcvt.s32.f32 %v1210
    %v2491 = vcvt.s32.f32 %v1211
    %v2492 = vcvt.s32.f32 %v1212
    %v2493 = vcvt.s32.f32 %v1213
    %v2494 = vcvt.s32.f32 %v1214
    %v2495 = vcvt.s32.f32 %v1215
    %v2496 = vcvt.s32.f32 %v1216
    %v2497 = vcvt.s32.f32 %v1217
    %v2498 = vcvt.s32.f32 %v1218
    %v2499 = vcvt.s32.f32 %v1219
    %v2500 = vcvt.s32.f32 %v1220
    %v2501 = vcvt.s32.f32 %v1221
    %v2502 = vcvt.s32.f32 %v1222
    %v2503 = vcvt.s32.f32 %v1223
    %v2504 = vcvt.s32.f32 %v1224
    %v2505 = vcvt.s32.f32 %v1225
    %v2506 = vcvt.s32.f32 %v1226
    %v2507 = vcvt.s32.f32 %v1227
    %v2508 = vcvt.s32.f32 %v1228
    %v2509 = vcvt.s32.f32 %v1229
    %v2510 = vcvt.s32.f32 %v1230
    %v2511 = vcvt.s32.f32 %v1231
    %v2512 = vcvt.s32.f32 %v1232
    %v2513 = vcvt.s32.f32 %v1233
    %v2514 = vcvt.s32.f32 %v1234
    %v2515 = vcvt.s32.f32 %v1235
    %v2516 = vcvt.s32.f32 %v1236
    %v2517 = vcvt.s32.f32 %v1237
    %v2518 = vcvt.s32.f32 %v1238
    %v2519 = vcvt.s32.f32 %v1239
    %v2520 = vcvt.s32.f32 %v1240
    %v2521 = vcvt.s32.f32 %v1241
    %v2522 = vcvt.s32.f32 %v1242
    %v2523 = vcvt.s32.f32 %v1243
    %v2524 = vcvt.s32.f32 %v1244
    %v2525 = vcvt.s32.f32 %v1245
    %v2526 = vcvt.s32.f32 %v1246
    %v2527 = vcvt.s32.f32 %v1247
    %v2528 = vcvt.s32.f32 %v1248
    %v2529 = vcvt.s32.f32 %v1249
    %v2530 = vcvt.s32.f32 %v1250
    %v2531 = vcvt.s32.f32 %v1251
    %v2532 = vcvt.s32.f32 %v1252
    %v2533 = vcvt.s32.f32 %v1253
    %v2534 = vcvt.s32.f32 %v1254
    %v2535 = vcvt.s32.f32 %v1255
    %v2536 = vcvt.s32.f32 %v1256
    %v2537 = vcvt.s32.f32 %v1257
    %v2538 = vcvt.s32.f32 %v1258
    %v2539 = vcvt.s32.f32 %v1259
    %v2540 = vcvt.s32.f32 %v1260
    %v2541 = vcvt.s32.f32 %v1261
    %v2542 = vcvt.s32.f32 %v1262
    %v2543 = vcvt.s32.f32 %v1263
    %v2544 = vcvt.s32.f32 %v1264
    %v2545 = vcvt.s32.f32 %v1265
    %v2546 = vcvt.s32.f32 %v1266
    %v2547 = vcvt.s32.f32 %v1267
    %v2548 = vcvt.s32.f32 %v1268
    %v2549 = vcvt.s32.f32 %v1269
    %v2550 = vcvt.s32.f32 %v1270
    %v2551 = vcvt.s32.f32 %v1271
    %v2552 = vcvt.s32.f32 %v1272
    %v2553 = vcvt.s32.f32 %v1273
    %v2554 = vcvt.s32.f32 %v1274
    %v2555 = vcvt.s32.f32 %v1275
    %v2556 = vcvt.s32.f32 %v1276
    %v2557 = vcvt.s32.f32 %v1277
    %v2558 = vcvt.s32.f32 %v1278
    %v2559 = vcvt.s32.f32 %v1279
    %v2560 = vcvt.s32.f32 %v1280
    %v2561 = vcvt.s32.f32 %v1281
    %v2562 = vcvt.s32.f32 %v1282
    %v2563 = vcvt.s32.f32 %v1283
    %v2564 = vcvt.s32.f32 %v1284
    %v2565 = vcvt.s32.f32 %v1285
    %v2566 = vcvt.s32.f32 %v1286
    %v2567 = vcvt.s32.f32 %v1287
    %v2568 = vcvt.s32.f32 %v1288
    %v2569 = vcvt.s32.f32 %v1289
    %v2570 = vcvt.s32.f32 %v1290
    %v2571 = vcvt.s32.f32 %v1291
    %v2572 = vcvt.s32.f32 %v1292
    %v2573 = vcvt.s32.f32 %v1293
    %v2574 = vcvt.s32.f32 %v1294
    %v2575 = vcvt.s32.f32 %v1295
    %v2576 = vcvt.s32.f32 %v1296
    %v2577 = vcvt.s32.f32 %v1297
    %v2578 = vcvt.s32.f32 %v1298
    %v2579 = vcvt.s32.f32 %v1299
    %v2580 = vcvt.s32.f32 %v1300
    %v2581 = vcvt.s32.f32 %v1301
    %v2582 = vcvt.s32.f32 %v1302
    %v2583 = vcvt.s32.f32 %v1303
    %v2584 = vcvt.s32.f32 %v1304
    %v2585 = vcvt.s32.f32 %v1305
    %v2586 = vcvt.s32.f32 %v1306
    %v2587 = vcvt.s32.f32 %v1307
    %v2588 = vcvt.s32.f32 %v1308
    %v2589 = vcvt.s32.f32 %v1309
    %v2590 = vcvt.s32.f32 %v1310
    %v2591 = vcvt.s32.f32 %v1311
    %v2592 = vcvt.s32.f32 %v1312
    %v2593 = vcvt.s32.f32 %v1313
    %v2594 = vcvt.s32.f32 %v1314
    %v2595 = vcvt.s32.f32 %v1315
    %v2596 = vcvt.s32.f32 %v1316
    %v2597 = vcvt.s32.f32 %v1317
    %v2598 = vcvt.s32.f32 %v1318
    %v2599 = vcvt.s32.f32 %v1319
    %v2600 = vcvt.s32.f32 %v1320
    %v2601 = vcvt.s32.f32 %v1321
    %v2602 = vcvt.s32.f32 %v1322
    %v2603 = vcvt.s32.f32 %v1323
    %v2604 = vcvt.s32.f32 %v1324
    %v2605 = vcvt.s32.f32 %v1325
    %v2606 = vcvt.s32.f32 %v1326
    %v2607 = vcvt.s32.f32 %v1327
    %v2608 = vcvt.s32.f32 %v1328
    %v2609 = vcvt.s32.f32 %v1329
    %v2610 = vcvt.s32.f32 %v1330
    %v2611 = vcvt.s32.f32 %v1331
    %v2612 = vcvt.s32.f32 %v1332
    %v2613 = vcvt.s32.f32 %v1333
    %v2614 = vcvt.s32.f32 %v1334
    %v2615 = vcvt.s32.f32 %v1335
    %v2616 = vcvt.s32.f32 %v1336
    %v2617 = vcvt.s32.f32 %v1337
    %v2618 = vcvt.s32.f32 %v1338
    %v2619 = vcvt.s32.f32 %v1339
    %v2620 = vcvt.s32.f32 %v1340
    %v2621 = vcvt.s32.f32 %v1341
    %v2622 = vcvt.s32.f32 %v1342
    %v2623 = vcvt.s32.f32 %v1343
    %v2624 = vcvt.s32.f32 %v1344
    %v2625 = vcvt.s32.f32 %v1345
    %v2626 = vcvt.s32.f32 %v1346
    %v2627 = vcvt.s32.f32 %v1347
    %v2628 = vcvt.s32.f32 %v1348
    %v2629 = vcvt.s32.f32 %v1349
    %v2630 = vcvt.s32.f32 %v1350
    %v2631 = vcvt.s32.f32 %v1351
    %v2632 = vcvt.s32.f32 %v1352
    %v2633 = vcvt.s32.f32 %v1353
    %v2634 = vcvt.s32.f32 %v1354
    %v2635 = vcvt.s32.f32 %v1355
    %v2636 = vcvt.s32.f32 %v1356
    %v2637 = vcvt.s32.f32 %v1357
    %v2638 = vcvt.s32.f32 %v1358
    %v2639 = vcvt.s32.f32 %v1359
    %v2640 = vcvt.s32.f32 %v1360
    %v2641 = vcvt.s32.f32 %v1361
    %v2642 = vcvt.s32.f32 %v1362
    %v2643 = vcvt.s32.f32 %v1363
    %v2644 = vcvt.s32.f32 %v1364
    %v2645 = vcvt.s32.f32 %v1365
    %v2646 = vcvt.s32.f32 %v1366
    %v2647 = vcvt.s32.f32 %v1367
    %v2648 = vcvt.s32.f32 %v1368
    %v2649 = vcvt.s32.f32 %v1369
    %v2650 = vcvt.s32.f32 %v1370
    %v2651 = vcvt.s32.f32 %v1371
    %v2652 = vcvt.s32.f32 %v1372
    %v2653 = vcvt.s32.f32 %v1373
    %v2654 = vcvt.s32.f32 %v1374
    %v2655 = vcvt.s32.f32 %v1375
    %v2656 = vcvt.s32.f32 %v1376
    %v2657 = vcvt.s32.f32 %v1377
    %v2658 = vcvt.s32.f32 %v1378
    %v2659 = vcvt.s32.f32 %v1379
    %v2660 = vcvt.s32.f32 %v1380
    %v2661 = vcvt.s32.f32 %v1381
    %v2662 = vcvt.s32.f32 %v1382
    %v2663 = vcvt.s32.f32 %v1383
    %v2664 = vcvt.s32.f32 %v1384
    %v2665 = vcvt.s32.f32 %v1385
    %v2666 = vcvt.s32.f32 %v1386
    %v2667 = vcvt.s32.f32 %v1387
    %v2668 = vcvt.s32.f32 %v1388
    %v2669 = vcvt.s32.f32 %v1389
    %v2670 = vcvt.s32.f32 %v1390
    %v2671 = vcvt.s32.f32 %v1391
    %v2672 = vcvt.s32.f32 %v1392
    %v2673 = vcvt.s32.f32 %v1393
    %v2674 = vcvt.s32.f32 %v1394
    %v2675 = vcvt.s32.f32 %v1395
    %v2676 = vcvt.s32.f32 %v1396
    %v2677 = vcvt.s32.f32 %v1397
    %v2678 = vcvt.s32.f32 %v1398
    %v2679 = vcvt.s32.f32 %v1399
    %v2680 = vcvt.s32.f32 %v1400
    %v2681 = vcvt.s32.f32 %v1401
    %v2682 = vcvt.s32.f32 %v1402
    %v2683 = vcvt.s32.f32 %v1403
    %v2684 = vcvt.s32.f32 %v1404
    %v2685 = vcvt.s32.f32 %v1405
    %v2686 = vcvt.s32.f32 %v1406
    %v2687 = vcvt.s32.f32 %v1407
    %v2688 = vcvt.s32.f32 %v1408
    %v2689 = vcvt.s32.f32 %v1409
    %v2690 = vcvt.s32.f32 %v1410
    %v2691 = vcvt.s32.f32 %v1411
    %v2692 = vcvt.s32.f32 %v1412
    %v2693 = vcvt.s32.f32 %v1413
    %v2694 = vcvt.s32.f32 %v1414
    %v2695 = vcvt.s32.f32 %v1415
    %v2696 = vcvt.s32.f32 %v1416
    %v2697 = vcvt.s32.f32 %v1417
    %v2698 = vcvt.s32.f32 %v1418
    %v2699 = vcvt.s32.f32 %v1419
    %v2700 = vcvt.s32.f32 %v1420
    %v2701 = vcvt.s32.f32 %v1421
    %v2702 = vcvt.s32.f32 %v1422
    %v2703 = vcvt.s32.f32 %v1423
    %v2704 = vcvt.s32.f32 %v1424
    %v2705 = vcvt.s32.f32 %v1425
    %v2706 = vcvt.s32.f32 %v1426
    %v2707 = vcvt.s32.f32 %v1427
    %v2708 = vcvt.s32.f32 %v1428
    %v2709 = vcvt.s32.f32 %v1429
    %v2710 = vcvt.s32.f32 %v1430
    %v2711 = vcvt.s32.f32 %v1431
    %v2712 = vcvt.s32.f32 %v1432
    %v2713 = vcvt.s32.f32 %v1433
    %v2714 = vcvt.s32.f32 %v1434
    %v2715 = vcvt.s32.f32 %v1435
    %v2716 = vcvt.s32.f32 %v1436
    %v2717 = vcvt.s32.f32 %v1437
    %v2718 = vcvt.s32.f32 %v1438
    %v2719 = vcvt.s32.f32 %v1439
    %v2720 = vcvt.s32.f32 %v1440
    %v2721 = vcvt.s32.f32 %v1441
    %v2722 = vcvt.s32.f32 %v1442
    %v2723 = vcvt.s32.f32 %v1443
    %v2724 = vcvt.s32.f32 %v1444
    %v2725 = vcvt.s32.f32 %v1445
    %v2726 = vcvt.s32.f32 %v1446
    %v2727 = vcvt.s32.f32 %v1447
    %v2728 = vcvt.s32.f32 %v1448
    %v2729 = vcvt.s32.f32 %v1449
    %v2730 = vcvt.s32.f32 %v1450
    %v2731 = vcvt.s32.f32 %v1451
    %v2732 = vcvt.s32.f32 %v1452
    %v2733 = vcvt.s32.f32 %v1453
    %v2734 = vcvt.s32.f32 %v1454
    %v2735 = vcvt.s32.f32 %v1455
    %v2736 = vcvt.s32.f32 %v1456
    %v2737 = vcvt.s32.f32 %v1457
    %v2738 = vcvt.s32.f32 %v1458
    %v2739 = vcvt.s32.f32 %v1459
    %v2740 = vcvt.s32.f32 %v1460
    %v2741 = vcvt.s32.f32 %v1461
    %v2742 = vcvt.s32.f32 %v1462
    %v2743 = vcvt.s32.f32 %v1463
    %v2744 = vcvt.s32.f32 %v1464
    %v2745 = vcvt.s32.f32 %v1465
    %v2746 = vcvt.s32.f32 %v1466
    %v2747 = vcvt.s32.f32 %v1467
    %v2748 = vcvt.s32.f32 %v1468
    %v2749 = vcvt.s32.f32 %v1469
    %v2750 = vcvt.s32.f32 %v1470
    %v2751 = vcvt.s32.f32 %v1471
    %v2752 = vcvt.s32.f32 %v1472
    %v2753 = vcvt.s32.f32 %v1473
    %v2754 = vcvt.s32.f32 %v1474
    %v2755 = vcvt.s32.f32 %v1475
    %v2756 = vcvt.s32.f32 %v1476
    %v2757 = vcvt.s32.f32 %v1477
    %v2758 = vcvt.s32.f32 %v1478
    %v2759 = vcvt.s32.f32 %v1479
    %v2760 = vcvt.s32.f32 %v1480
    %v2761 = vcvt.s32.f32 %v1481
    %v2762 = vcvt.s32.f32 %v1482
    %v2763 = vcvt.s32.f32 %v1483
    %v2764 = vcvt.s32.f32 %v1484
    %v2765 = vcvt.s32.f32 %v1485
    %v2766 = vcvt.s32.f32 %v1486
    %v2767 = vcvt.s32.f32 %v1487
    %v2768 = vcvt.s32.f32 %v1488
    %v2769 = vcvt.s32.f32 %v1489
    %v2770 = vcvt.s32.f32 %v1490
    %v2771 = vcvt.s32.f32 %v1491
    %v2772 = vcvt.s32.f32 %v1492
    %v2773 = vcvt.s32.f32 %v1493
    %v2774 = vcvt.s32.f32 %v1494
    %v2775 = vcvt.s32.f32 %v1495
    %v2776 = vcvt.s32.f32 %v1496
    %v2777 = vcvt.s32.f32 %v1497
    %v2778 = vcvt.s32.f32 %v1498
    %v2779 = vcvt.s32.f32 %v1499
    %v2780 = vcvt.s32.f32 %v1500
    %v2781 = vcvt.s32.f32 %v1501
    %v2782 = vcvt.s32.f32 %v1502
    %v2783 = vcvt.s32.f32 %v1503
    %v2784 = vcvt.s32.f32 %v1504
    %v2785 = vcvt.s32.f32 %v1505
    %v2786 = vcvt.s32.f32 %v1506
    %v2787 = vcvt.s32.f32 %v1507
    %v2788 = vcvt.s32.f32 %v1508
    %v2789 = vcvt.s32.f32 %v1509
    %v2790 = vcvt.s32.f32 %v1510
    %v2791 = vcvt.s32.f32 %v1511
    %v2792 = vcvt.s32.f32 %v1512
    %v2793 = vcvt.s32.f32 %v1513
    %v2794 = vcvt.s32.f32 %v1514
    %v2795 = vcvt.s32.f32 %v1515
    %v2796 = vcvt.s32.f32 %v1516
    %v2797 = vcvt.s32.f32 %v1517
    %v2798 = vcvt.s32.f32 %v1518
    %v2799 = vcvt.s32.f32 %v1519
    %v2800 = vcvt.s32.f32 %v1520
    %v2801 = vcvt.s32.f32 %v1521
    %v2802 = vcvt.s32.f32 %v1522
    %v2803 = vcvt.s32.f32 %v1523
    %v2804 = vcvt.s32.f32 %v1524
    %v2805 = vcvt.s32.f32 %v1525
    %v2806 = vcvt.s32.f32 %v1526
    %v2807 = vcvt.s32.f32 %v1527
    %v2808 = vcvt.s32.f32 %v1528
    %v2809 = vcvt.s32.f32 %v1529
    %v2810 = vcvt.s32.f32 %v1530
    %v2811 = vcvt.s32.f32 %v1531
    %v2812 = vcvt.s32.f32 %v1532
    %v2813 = vcvt.s32.f32 %v1533
    %v2814 = vcvt.s32.f32 %v1534
    %v2815 = vcvt.s32.f32 %v1535
    %v2816 = vcvt.s32.f32 %v1536
    %v2817 = vcvt.s32.f32 %v1537
    %v2818 = vcvt.s32.f32 %v1538
    %v2819 = vcvt.s32.f32 %v1539
    %v2820 = vcvt.s32.f32 %v1540
    %v2821 = vcvt.s32.f32 %v1541
    %v2822 = vcvt.s32.f32 %v1542
    %v2823 = vcvt.s32.f32 %v1543
    %v2824 = vcvt.s32.f32 %v1544
    %v2825 = vcvt.s32.f32 %v1545
    %v2826 = vcvt.s32.f32 %v1546
    %v2827 = vcvt.s32.f32 %v1547
    %v2828 = vcvt.s32.f32 %v1548
    %v2829 = vcvt.s32.f32 %v1549
    %v2830 = vcvt.s32.f32 %v1550
    %v2831 = vcvt.s32.f32 %v1551
    %v2832 = vcvt.s32.f32 %v1552
    %v2833 = vcvt.s32.f32 %v1553
    %v2834 = vcvt.s32.f32 %v1554
    %v2835 = vcvt.s32.f32 %v1555
    %v2836 = vcvt.s32.f32 %v1556
    %v2837 = vcvt.s32.f32 %v1557
    %v2838 = vcvt.s32.f32 %v1558
    %v2839 = vcvt.s32.f32 %v1559
    %v2840 = vcvt.s32.f32 %v1560
    %v2841 = vcvt.s32.f32 %v1561
    %v2842 = vcvt.s32.f32 %v1562
    %v2843 = vcvt.s32.f32 %v1563
    %v2844 = vcvt.s32.f32 %v1564
    %v2845 = vcvt.s32.f32 %v1565
    %v2846 = vcvt.s32.f32 %v1566
    %v2847 = vcvt.s32.f32 %v1567
    %v2848 = vcvt.s32.f32 %v1568
    %v2849 = vcvt.s32.f32 %v1569
    %v2850 = vcvt.s32.f32 %v1570
    %v2851 = vcvt.s32.f32 %v1571
    %v2852 = vcvt.s32.f32 %v1572
    %v2853 = vcvt.s32.f32 %v1573
    %v2854 = vcvt.s32.f32 %v1574
    %v2855 = vcvt.s32.f32 %v1575
    %v2856 = vcvt.s32.f32 %v1576
    %v2857 = vcvt.s32.f32 %v1577
    %v2858 = vcvt.s32.f32 %v1578
    %v2859 = vcvt.s32.f32 %v1579
    %v2860 = vcvt.s32.f32 %v1580
    %v2861 = vcvt.s32.f32 %v1581
    %v2862 = vcvt.s32.f32 %v1582
    %v2863 = vcvt.s32.f32 %v1583
    %v2864 = vcvt.s32.f32 %v1584
    %v2865 = vcvt.s32.f32 %v1585
    %v2866 = vcvt.s32.f32 %v1586
    %v2867 = vcvt.s32.f32 %v1587
    %v2868 = vcvt.s32.f32 %v1588
    %v2869 = vcvt.s32.f32 %v1589
    %v2870 = vcvt.s32.f32 %v1590
    %v2871 = vcvt.s32.f32 %v1591
    %v2872 = vcvt.s32.f32 %v1592
    %v2873 = vcvt.s32.f32 %v1593
    %v2874 = vcvt.s32.f32 %v1594
    %v2875 = vcvt.s32.f32 %v1595
    %v2876 = vcvt.s32.f32 %v1596
    %v2877 = vcvt.s32.f32 %v1597
    %v2878 = vcvt.s32.f32 %v1598
    %v2879 = vcvt.s32.f32 %v1599
    %v2880 = vcvt.s32.f32 %v1600
    %v2881 = vcvt.s32.f32 %v1601
    %v2882 = vcvt.s32.f32 %v1602
    %v2883 = vcvt.s32.f32 %v1603
    %v2884 = vcvt.s32.f32 %v1604
    %v2885 = vcvt.s32.f32 %v1605
    %v2886 = vcvt.s32.f32 %v1606
    %v2887 = vcvt.s32.f32 %v1607
    %v2888 = vcvt.s32.f32 %v1608
    %v2889 = vcvt.s32.f32 %v1609
    %v2890 = vcvt.s32.f32 %v1610
    %v2891 = vcvt.s32.f32 %v1611
    %v2892 = vcvt.s32.f32 %v1612
    %v2893 = vcvt.s32.f32 %v1613
    %v2894 = vcvt.s32.f32 %v1614
    %v2895 = vcvt.s32.f32 %v1615
    %v2896 = vcvt.s32.f32 %v1616
    %v2897 = vcvt.s32.f32 %v1617
    %v2898 = vcvt.s32.f32 %v1618
    %v2899 = vcvt.s32.f32 %v1619
    %v2900 = vcvt.s32.f32 %v1620
    %v2901 = vcvt.s32.f32 %v1621
    %v2902 = vcvt.s32.f32 %v1622
    %v2903 = vcvt.s32.f32 %v1623
    %v2904 = vcvt.s32.f32 %v1624
    %v2905 = vcvt.s32.f32 %v1625
    %v2906 = vcvt.s32.f32 %v1626
    %v2907 = vcvt.s32.f32 %v1627
    %v2908 = vcvt.s32.f32 %v1628
    %v2909 = vcvt.s32.f32 %v1629
    %v2910 = vcvt.s32.f32 %v1630
    %v2911 = vcvt.s32.f32 %v1631
    %v2912 = vcvt.s32.f32 %v1632
    %v2913 = vcvt.s32.f32 %v1633
    %v2914 = vcvt.s32.f32 %v1634
    %v2915 = vcvt.s32.f32 %v1635
    %v2916 = vcvt.s32.f32 %v1636
    %v2917 = vcvt.s32.f32 %v1637
    %v2918 = vcvt.s32.f32 %v1638
    %v2919 = vcvt.s32.f32 %v1639
    %v2920 = vcvt.s32.f32 %v1640
    %v2921 = vcvt.s32.f32 %v1641
    %v2922 = vcvt.s32.f32 %v1642
    %v2923 = vcvt.s32.f32 %v1643
    %v2924 = vcvt.s32.f32 %v1644
    %v2925 = vcvt.s32.f32 %v1645
    %v2926 = vcvt.s32.f32 %v1646
    %v2927 = vcvt.s32.f32 %v1647
    %v2928 = vcvt.s32.f32 %v1648
    %v2929 = vcvt.s32.f32 %v1649
    %v2930 = vcvt.s32.f32 %v1650
    %v2931 = vcvt.s32.f32 %v1651
    %v2932 = vcvt.s32.f32 %v1652
    %v2933 = vcvt.s32.f32 %v1653
    %v2934 = vcvt.s32.f32 %v1654
    %v2935 = vcvt.s32.f32 %v1655
    %v2936 = vcvt.s32.f32 %v1656
    %v2937 = vcvt.s32.f32 %v1657
    %v2938 = vcvt.s32.f32 %v1658
    %v2939 = vcvt.s32.f32 %v1659
    %v2940 = vcvt.s32.f32 %v1660
    %v2941 = vcvt.s32.f32 %v1661
    %v2942 = vcvt.s32.f32 %v1662
    %v2943 = vcvt.s32.f32 %v1663
    %v2944 = vcvt.s32.f32 %v1664
    %v2945 = vcvt.s32.f32 %v1665
    %v2946 = vcvt.s32.f32 %v1666
    %v2947 = vcvt.s32.f32 %v1667
    %v2948 = vcvt.s32.f32 %v1668
    %v2949 = vcvt.s32.f32 %v1669
    %v2950 = vcvt.s32.f32 %v1670
    %v2951 = vcvt.s32.f32 %v1671
    %v2952 = vcvt.s32.f32 %v1672
    %v2953 = vcvt.s32.f32 %v1673
    %v2954 = vcvt.s32.f32 %v1674
    %v2955 = vcvt.s32.f32 %v1675
    %v2956 = vcvt.s32.f32 %v1676
    %v2957 = vcvt.s32.f32 %v1677
    %v2958 = vcvt.s32.f32 %v1678
    %v2959 = vcvt.s32.f32 %v1679
    %v2960 = vcvt.s32.f32 %v1680
    %v2961 = vcvt.s32.f32 %v1681
    %v2962 = vcvt.s32.f32 %v1682
    %v2963 = vcvt.s32.f32 %v1683
    %v2964 = vcvt.s32.f32 %v1684
    %v2965 = vcvt.s32.f32 %v1685
    %v2966 = vcvt.s32.f32 %v1686
    %v2969 = vlaneseq
    %v2970 = vshrl.u32 %v2969, 7
    %v2971 = vsub.s32 0, %v2970
    %v2972 = vrot.slane %v85, %v2971
    %v2973 = vlaneseq
    %v2974 = vshrl.u32 %v2973, 7
    %v2975 = vsub.s32 1, %v2974
    %v2976 = vrot.slane %v85, %v2975
    %v2977 = vlaneseq
    %v2978 = vshrl.u32 %v2977, 7
    %v2979 = vsub.s32 2, %v2978
    %v2980 = vrot.slane %v85, %v2979
    %v2981 = vlaneseq
    %v2982 = vshrl.u32 %v2981, 7
    %v2983 = vsub.s32 3, %v2982
    %v2984 = vrot.slane %v85, %v2983
    %v2985 = vlaneseq
    %v2986 = vshrl.u32 %v2985, 7
    %v2987 = vsub.s32 4, %v2986
    %v2988 = vrot.slane %v85, %v2987
    %v2989 = vlaneseq
    %v2990 = vshrl.u32 %v2989, 7
    %v2991 = vsub.s32 5, %v2990
    %v2992 = vrot.slane %v85, %v2991
    %v2993 = vlaneseq
    %v2994 = vshrl.u32 %v2993, 7
    %v2995 = vsub.s32 6, %v2994
    %v2996 = vrot.slane %v85, %v2995
    %v2997 = vlaneseq
    %v2998 = vshrl.u32 %v2997, 7
    %v2999 = vsub.s32 7, %v2998
    %v3000 = vrot.slane %v85, %v2999
    %v3001 = vlaneseq
    %v3002 = vshrl.u32 %v3001, 7
    %v3003 = vsub.s32 0, %v3002
    %v3004 = vrot.slane %v86, %v3003
    %v3005 = vlaneseq
    %v3006 = vshrl.u32 %v3005, 7
    %v3007 = vsub.s32 1, %v3006
    %v3008 = vrot.slane %v86, %v3007
    %3019 = vmatprep.subr.mxu0 %v1688
    %3020 = vmatpush1.msra.mxu0 %v1687
    %3021 = vmatprep.subr.mxu0 %v1696
    %3022 = vmatpush1.msra.mxu0 %v1695
    %3023 = vmatprep.subr.mxu0 %v1704
    %3024 = vmatpush1.msra.mxu0 %v1703
    %3025 = vmatprep.subr.mxu0 %v1712
    %3026 = vmatpush1.msra.mxu0 %v1711
    %3027 = vmatprep.subr.mxu0 %v1720
    %3028 = vmatpush1.msra.mxu0 %v1719
    %3029 = vmatprep.subr.mxu0 %v1728
    %3030 = vmatpush1.msra.mxu0 %v1727
    %3031 = vmatprep.subr.mxu0 %v1736
    %3032 = vmatpush1.msra.mxu0 %v1735
    %3033 = vmatprep.subr.mxu0 %v1744
    %3034 = vmatpush1.msra.mxu0 %v1743
    %3035 = vmatprep.subr.mxu0 %v1752
    %3036 = vmatpush1.msra.mxu0 %v1751
    %3037 = vmatprep.subr.mxu0 %v1760
    %3038 = vmatpush1.msra.mxu0 %v1759
    %3039 = vmatprep.subr.mxu0 %v1768
    %3040 = vmatpush1.msra.mxu0 %v1767
    %3041 = vmatprep.subr.mxu0 %v1776
    %3042 = vmatpush1.msra.mxu0 %v1775
    %3043 = vmatprep.subr.mxu0 %v1784
    %3044 = vmatpush1.msra.mxu0 %v1783
    %3045 = vmatprep.subr.mxu0 %v1792
    %3046 = vmatpush1.msra.mxu0 %v1791
    %3047 = vmatprep.subr.mxu0 %v1800
    %3048 = vmatpush1.msra.mxu0 %v1799
    %3049 = vmatprep.subr.mxu0 %v1808
    %3050 = vmatpush1.msra.mxu0 %v1807
    %3051 = vmatprep.subr.mxu0 %v1816
    %3052 = vmatpush1.msra.mxu0 %v1815
    %3053 = vmatprep.subr.mxu0 %v1824
    %3054 = vmatpush1.msra.mxu0 %v1823
    %3055 = vmatprep.subr.mxu0 %v1832
    %3056 = vmatpush1.msra.mxu0 %v1831
    %3057 = vmatprep.subr.mxu0 %v1840
    %3058 = vmatpush1.msra.mxu0 %v1839
    %3059 = vmatprep.subr.mxu0 %v1848
    %3060 = vmatpush1.msra.mxu0 %v1847
    %3061 = vmatprep.subr.mxu0 %v1856
    %3062 = vmatpush1.msra.mxu0 %v1855
    %3063 = vmatprep.subr.mxu0 %v1864
    %3064 = vmatpush1.msra.mxu0 %v1863
    %3065 = vmatprep.subr.mxu0 %v1872
    %3066 = vmatpush1.msra.mxu0 %v1871
    %3067 = vmatprep.subr.mxu0 %v1880
    %3068 = vmatpush1.msra.mxu0 %v1879
    %3069 = vmatprep.subr.mxu0 %v1888
    %3070 = vmatpush1.msra.mxu0 %v1887
    %3071 = vmatprep.subr.mxu0 %v1896
    %3072 = vmatpush1.msra.mxu0 %v1895
    %3073 = vmatprep.subr.mxu0 %v1904
    %3074 = vmatpush1.msra.mxu0 %v1903
    %3075 = vmatprep.subr.mxu0 %v1912
    %3076 = vmatpush1.msra.mxu0 %v1911
    %3077 = vmatprep.subr.mxu0 %v1920
    %3078 = vmatpush1.msra.mxu0 %v1919
    %3079 = vmatprep.subr.mxu0 %v1928
    %3080 = vmatpush1.msra.mxu0 %v1927
    %3081 = vmatprep.subr.mxu0 %v1936
    %3082 = vmatpush1.msra.mxu0 %v1935
    %3083 = vmatprep.mubr.f32.mxu0 %v2976
    %3084 = vmatmul.mubr.f32.gmra.mrb[0].mxu0 %v2972
    %v3085 = vpop.f32.mrb[0].mxu0
    %v3086 = vadd.f32 0.0, %v3085
    %v3087 = vpop.f32.mrb[0].mxu0
    %v3088 = vadd.f32 0.0, %v3087
    %3089 = vdwg.mxu0
    %3090 = vmatprep.subr.mxu0 %v1944
    %3091 = vmatpush1.msra.mxu0 %v1943
    %3092 = vmatprep.subr.mxu0 %v1952
    %3093 = vmatpush1.msra.mxu0 %v1951
    %3094 = vmatprep.subr.mxu0 %v1960
    %3095 = vmatpush1.msra.mxu0 %v1959
    %3096 = vmatprep.subr.mxu0 %v1968
    %3097 = vmatpush1.msra.mxu0 %v1967
    %3098 = vmatprep.subr.mxu0 %v1976
    %3099 = vmatpush1.msra.mxu0 %v1975
    %3100 = vmatprep.subr.mxu0 %v1984
    %3101 = vmatpush1.msra.mxu0 %v1983
    %3102 = vmatprep.subr.mxu0 %v1992
    %3103 = vmatpush1.msra.mxu0 %v1991
    %3104 = vmatprep.subr.mxu0 %v2000
    %3105 = vmatpush1.msra.mxu0 %v1999
    %3106 = vmatprep.subr.mxu0 %v2008
    %3107 = vmatpush1.msra.mxu0 %v2007
    %3108 = vmatprep.subr.mxu0 %v2016
    %3109 = vmatpush1.msra.mxu0 %v2015
    %3110 = vmatprep.subr.mxu0 %v2024
    %3111 = vmatpush1.msra.mxu0 %v2023
    %3112 = vmatprep.subr.mxu0 %v2032
    %3113 = vmatpush1.msra.mxu0 %v2031
    %3114 = vmatprep.subr.mxu0 %v2040
    %3115 = vmatpush1.msra.mxu0 %v2039
    %3116 = vmatprep.subr.mxu0 %v2048
    %3117 = vmatpush1.msra.mxu0 %v2047
    %3118 = vmatprep.subr.mxu0 %v2056
    %3119 = vmatpush1.msra.mxu0 %v2055
    %3120 = vmatprep.subr.mxu0 %v2064
    %3121 = vmatpush1.msra.mxu0 %v2063
    %3122 = vmatprep.subr.mxu0 %v2072
    %3123 = vmatpush1.msra.mxu0 %v2071
    %3124 = vmatprep.subr.mxu0 %v2080
    %3125 = vmatpush1.msra.mxu0 %v2079
    %3126 = vmatprep.subr.mxu0 %v2088
    %3127 = vmatpush1.msra.mxu0 %v2087
    %3128 = vmatprep.subr.mxu0 %v2096
    %3129 = vmatpush1.msra.mxu0 %v2095
    %3130 = vmatprep.subr.mxu0 %v2104
    %3131 = vmatpush1.msra.mxu0 %v2103
    %3132 = vmatprep.subr.mxu0 %v2112
    %3133 = vmatpush1.msra.mxu0 %v2111
    %3134 = vmatprep.subr.mxu0 %v2120
    %3135 = vmatpush1.msra.mxu0 %v2119
    %3136 = vmatprep.subr.mxu0 %v2128
    %3137 = vmatpush1.msra.mxu0 %v2127
    %3138 = vmatprep.subr.mxu0 %v2136
    %3139 = vmatpush1.msra.mxu0 %v2135
    %3140 = vmatprep.subr.mxu0 %v2144
    %3141 = vmatpush1.msra.mxu0 %v2143
    %3142 = vmatprep.subr.mxu0 %v2152
    %3143 = vmatpush1.msra.mxu0 %v2151
    %3144 = vmatprep.subr.mxu0 %v2160
    %3145 = vmatpush1.msra.mxu0 %v2159
    %3146 = vmatprep.subr.mxu0 %v2168
    %3147 = vmatpush1.msra.mxu0 %v2167
    %3148 = vmatprep.subr.mxu0 %v2176
    %3149 = vmatpush1.msra.mxu0 %v2175
    %3150 = vmatprep.subr.mxu0 %v2184
    %3151 = vmatpush1.msra.mxu0 %v2183
    %3152 = vmatprep.subr.mxu0 %v2192
    %3153 = vmatpush1.msra.mxu0 %v2191
    %3154 = vmatprep.mubr.f32.mxu0 %v2984
    %3155 = vmatmul.mubr.f32.gmra.mrb[0].mxu0 %v2980
    %v3156 = vpop.f32.mrb[0].mxu0
    %v3157 = vadd.f32 %v3086, %v3156
    %v3158 = vpop.f32.mrb[0].mxu0
    %v3159 = vadd.f32 %v3088, %v3158
    %3160 = vdwg.mxu0
    %3161 = vmatprep.subr.mxu0 %v2200
    %3162 = vmatpush1.msra.mxu0 %v2199
    %3163 = vmatprep.subr.mxu0 %v2208
    %3164 = vmatpush1.msra.mxu0 %v2207
    %3165 = vmatprep.subr.mxu0 %v2216
    %3166 = vmatpush1.msra.mxu0 %v2215
    %3167 = vmatprep.subr.mxu0 %v2224
    %3168 = vmatpush1.msra.mxu0 %v2223
    %3169 = vmatprep.subr.mxu0 %v2232
    %3170 = vmatpush1.msra.mxu0 %v2231
    %3171 = vmatprep.subr.mxu0 %v2240
    %3172 = vmatpush1.msra.mxu0 %v2239
    %3173 = vmatprep.subr.mxu0 %v2248
    %3174 = vmatpush1.msra.mxu0 %v2247
    %3175 = vmatprep.subr.mxu0 %v2256
    %3176 = vmatpush1.msra.mxu0 %v2255
    %3177 = vmatprep.subr.mxu0 %v2264
    %3178 = vmatpush1.msra.mxu0 %v2263
    %3179 = vmatprep.subr.mxu0 %v2272
    %3180 = vmatpush1.msra.mxu0 %v2271
    %3181 = vmatprep.subr.mxu0 %v2280
    %3182 = vmatpush1.msra.mxu0 %v2279
    %3183 = vmatprep.subr.mxu0 %v2288
    %3184 = vmatpush1.msra.mxu0 %v2287
    %3185 = vmatprep.subr.mxu0 %v2296
    %3186 = vmatpush1.msra.mxu0 %v2295
    %3187 = vmatprep.subr.mxu0 %v2304
    %3188 = vmatpush1.msra.mxu0 %v2303
    %3189 = vmatprep.subr.mxu0 %v2312
    %3190 = vmatpush1.msra.mxu0 %v2311
    %3191 = vmatprep.subr.mxu0 %v2320
    %3192 = vmatpush1.msra.mxu0 %v2319
    %3193 = vmatprep.subr.mxu0 %v2328
    %3194 = vmatpush1.msra.mxu0 %v2327
    %3195 = vmatprep.subr.mxu0 %v2336
    %3196 = vmatpush1.msra.mxu0 %v2335
    %3197 = vmatprep.subr.mxu0 %v2344
    %3198 = vmatpush1.msra.mxu0 %v2343
    %3199 = vmatprep.subr.mxu0 %v2352
    %3200 = vmatpush1.msra.mxu0 %v2351
    %3201 = vmatprep.subr.mxu0 %v2360
    %3202 = vmatpush1.msra.mxu0 %v2359
    %3203 = vmatprep.subr.mxu0 %v2368
    %3204 = vmatpush1.msra.mxu0 %v2367
    %3205 = vmatprep.subr.mxu0 %v2376
    %3206 = vmatpush1.msra.mxu0 %v2375
    %3207 = vmatprep.subr.mxu0 %v2384
    %3208 = vmatpush1.msra.mxu0 %v2383
    %3209 = vmatprep.subr.mxu0 %v2392
    %3210 = vmatpush1.msra.mxu0 %v2391
    %3211 = vmatprep.subr.mxu0 %v2400
    %3212 = vmatpush1.msra.mxu0 %v2399
    %3213 = vmatprep.subr.mxu0 %v2408
    %3214 = vmatpush1.msra.mxu0 %v2407
    %3215 = vmatprep.subr.mxu0 %v2416
    %3216 = vmatpush1.msra.mxu0 %v2415
    %3217 = vmatprep.subr.mxu0 %v2424
    %3218 = vmatpush1.msra.mxu0 %v2423
    %3219 = vmatprep.subr.mxu0 %v2432
    %3220 = vmatpush1.msra.mxu0 %v2431
    %3221 = vmatprep.subr.mxu0 %v2440
    %3222 = vmatpush1.msra.mxu0 %v2439
    %3223 = vmatprep.subr.mxu0 %v2448
    %3224 = vmatpush1.msra.mxu0 %v2447
    %3225 = vmatprep.mubr.f32.mxu0 %v2992
    %3226 = vmatmul.mubr.f32.gmra.mrb[0].mxu0 %v2988
    %v3227 = vpop.f32.mrb[0].mxu0
    %v3228 = vadd.f32 %v3157, %v3227
    %v3229 = vpop.f32.mrb[0].mxu0
    %v3230 = vadd.f32 %v3159, %v3229
    %3231 = vdwg.mxu0
    %3232 = vmatprep.subr.mxu0 %v2456
    %3233 = vmatpush1.msra.mxu0 %v2455
    %3234 = vmatprep.subr.mxu0 %v2464
    %3235 = vmatpush1.msra.mxu0 %v2463
    %3236 = vmatprep.subr.mxu0 %v2472
    %3237 = vmatpush1.msra.mxu0 %v2471
    %3238 = vmatprep.subr.mxu0 %v2480
    %3239 = vmatpush1.msra.mxu0 %v2479
    %3240 = vmatprep.subr.mxu0 %v2488
    %3241 = vmatpush1.msra.mxu0 %v2487
    %3242 = vmatprep.subr.mxu0 %v2496
    %3243 = vmatpush1.msra.mxu0 %v2495
    %3244 = vmatprep.subr.mxu0 %v2504
    %3245 = vmatpush1.msra.mxu0 %v2503
    %3246 = vmatprep.subr.mxu0 %v2512
    %3247 = vmatpush1.msra.mxu0 %v2511
    %3248 = vmatprep.subr.mxu0 %v2520
    %3249 = vmatpush1.msra.mxu0 %v2519
    %3250 = vmatprep.subr.mxu0 %v2528
    %3251 = vmatpush1.msra.mxu0 %v2527
    %3252 = vmatprep.subr.mxu0 %v2536
    %3253 = vmatpush1.msra.mxu0 %v2535
    %3254 = vmatprep.subr.mxu0 %v2544
    %3255 = vmatpush1.msra.mxu0 %v2543
    %3256 = vmatprep.subr.mxu0 %v2552
    %3257 = vmatpush1.msra.mxu0 %v2551
    %3258 = vmatprep.subr.mxu0 %v2560
    %3259 = vmatpush1.msra.mxu0 %v2559
    %3260 = vmatprep.subr.mxu0 %v2568
    %3261 = vmatpush1.msra.mxu0 %v2567
    %3262 = vmatprep.subr.mxu0 %v2576
    %3263 = vmatpush1.msra.mxu0 %v2575
    %3264 = vmatprep.subr.mxu0 %v2584
    %3265 = vmatpush1.msra.mxu0 %v2583
    %3266 = vmatprep.subr.mxu0 %v2592
    %3267 = vmatpush1.msra.mxu0 %v2591
    %3268 = vmatprep.subr.mxu0 %v2600
    %3269 = vmatpush1.msra.mxu0 %v2599
    %3270 = vmatprep.subr.mxu0 %v2608
    %3271 = vmatpush1.msra.mxu0 %v2607
    %3272 = vmatprep.subr.mxu0 %v2616
    %3273 = vmatpush1.msra.mxu0 %v2615
    %3274 = vmatprep.subr.mxu0 %v2624
    %3275 = vmatpush1.msra.mxu0 %v2623
    %3276 = vmatprep.subr.mxu0 %v2632
    %3277 = vmatpush1.msra.mxu0 %v2631
    %3278 = vmatprep.subr.mxu0 %v2640
    %3279 = vmatpush1.msra.mxu0 %v2639
    %3280 = vmatprep.subr.mxu0 %v2648
    %3281 = vmatpush1.msra.mxu0 %v2647
    %3282 = vmatprep.subr.mxu0 %v2656
    %3283 = vmatpush1.msra.mxu0 %v2655
    %3284 = vmatprep.subr.mxu0 %v2664
    %3285 = vmatpush1.msra.mxu0 %v2663
    %3286 = vmatprep.subr.mxu0 %v2672
    %3287 = vmatpush1.msra.mxu0 %v2671
    %3288 = vmatprep.subr.mxu0 %v2680
    %3289 = vmatpush1.msra.mxu0 %v2679
    %3290 = vmatprep.subr.mxu0 %v2688
    %3291 = vmatpush1.msra.mxu0 %v2687
    %3292 = vmatprep.subr.mxu0 %v2696
    %3293 = vmatpush1.msra.mxu0 %v2695
    %3294 = vmatprep.subr.mxu0 %v2704
    %3295 = vmatpush1.msra.mxu0 %v2703
    %3296 = vmatprep.mubr.f32.mxu0 %v3000
    %3297 = vmatmul.mubr.f32.gmra.mrb[0].mxu0 %v2996
    %v3298 = vpop.f32.mrb[0].mxu0
    %v3299 = vadd.f32 %v3228, %v3298
    %v3300 = vpop.f32.mrb[0].mxu0
    %v3301 = vadd.f32 %v3230, %v3300
    %3302 = vdwg.mxu0
    %3303 = vmatprep.subr.mxu0 %v2712
    %3304 = vmatpush1.msra.mxu0 %v2711
    %3305 = vmatprep.subr.mxu0 %v2720
    %3306 = vmatpush1.msra.mxu0 %v2719
    %3307 = vmatprep.subr.mxu0 %v2728
    %3308 = vmatpush1.msra.mxu0 %v2727
    %3309 = vmatprep.subr.mxu0 %v2736
    %3310 = vmatpush1.msra.mxu0 %v2735
    %3311 = vmatprep.subr.mxu0 %v2744
    %3312 = vmatpush1.msra.mxu0 %v2743
    %3313 = vmatprep.subr.mxu0 %v2752
    %3314 = vmatpush1.msra.mxu0 %v2751
    %3315 = vmatprep.subr.mxu0 %v2760
    %3316 = vmatpush1.msra.mxu0 %v2759
    %3317 = vmatprep.subr.mxu0 %v2768
    %3318 = vmatpush1.msra.mxu0 %v2767
    %3319 = vmatprep.subr.mxu0 %v2776
    %3320 = vmatpush1.msra.mxu0 %v2775
    %3321 = vmatprep.subr.mxu0 %v2784
    %3322 = vmatpush1.msra.mxu0 %v2783
    %3323 = vmatprep.subr.mxu0 %v2792
    %3324 = vmatpush1.msra.mxu0 %v2791
    %3325 = vmatprep.subr.mxu0 %v2800
    %3326 = vmatpush1.msra.mxu0 %v2799
    %3327 = vmatprep.subr.mxu0 %v2808
    %3328 = vmatpush1.msra.mxu0 %v2807
    %3329 = vmatprep.subr.mxu0 %v2816
    %3330 = vmatpush1.msra.mxu0 %v2815
    %3331 = vmatprep.subr.mxu0 %v2824
    %3332 = vmatpush1.msra.mxu0 %v2823
    %3333 = vmatprep.subr.mxu0 %v2832
    %3334 = vmatpush1.msra.mxu0 %v2831
    %3335 = vmatprep.subr.mxu0 %v2840
    %3336 = vmatpush1.msra.mxu0 %v2839
    %3337 = vmatprep.subr.mxu0 %v2848
    %3338 = vmatpush1.msra.mxu0 %v2847
    %3339 = vmatprep.subr.mxu0 %v2856
    %3340 = vmatpush1.msra.mxu0 %v2855
    %3341 = vmatprep.subr.mxu0 %v2864
    %3342 = vmatpush1.msra.mxu0 %v2863
    %3343 = vmatprep.subr.mxu0 %v2872
    %3344 = vmatpush1.msra.mxu0 %v2871
    %3345 = vmatprep.subr.mxu0 %v2880
    %3346 = vmatpush1.msra.mxu0 %v2879
    %3347 = vmatprep.subr.mxu0 %v2888
    %3348 = vmatpush1.msra.mxu0 %v2887
    %3349 = vmatprep.subr.mxu0 %v2896
    %3350 = vmatpush1.msra.mxu0 %v2895
    %3351 = vmatprep.subr.mxu0 %v2904
    %3352 = vmatpush1.msra.mxu0 %v2903
    %3353 = vmatprep.subr.mxu0 %v2912
    %3354 = vmatpush1.msra.mxu0 %v2911
    %3355 = vmatprep.subr.mxu0 %v2920
    %3356 = vmatpush1.msra.mxu0 %v2919
    %3357 = vmatprep.subr.mxu0 %v2928
    %3358 = vmatpush1.msra.mxu0 %v2927
    %3359 = vmatprep.subr.mxu0 %v2936
    %3360 = vmatpush1.msra.mxu0 %v2935
    %3361 = vmatprep.subr.mxu0 %v2944
    %3362 = vmatpush1.msra.mxu0 %v2943
    %3363 = vmatprep.subr.mxu0 %v2952
    %3364 = vmatpush1.msra.mxu0 %v2951
    %3365 = vmatprep.subr.mxu0 %v2960
    %3366 = vmatpush1.msra.mxu0 %v2959
    %3367 = vmatprep.mubr.f32.mxu0 %v3008
    %3368 = vmatmul.mubr.f32.gmra.mrb[0].mxu0 %v3004
    %v3369 = vpop.f32.mrb[0].mxu0
    %v3370 = vadd.f32 %v3299, %v3369
    %v3371 = vpop.f32.mrb[0].mxu0
    %v3372 = vadd.f32 %v3301, %v3371
    %3373 = vdwg.mxu0
    %3374 = vmatprep.subr.mxu0 %v1690
    %3375 = vmatpush1.msra.mxu0 %v1689
    %3376 = vmatprep.subr.mxu0 %v1698
    %3377 = vmatpush1.msra.mxu0 %v1697
    %3378 = vmatprep.subr.mxu0 %v1706
    %3379 = vmatpush1.msra.mxu0 %v1705
    %3380 = vmatprep.subr.mxu0 %v1714
    %3381 = vmatpush1.msra.mxu0 %v1713
    %3382 = vmatprep.subr.mxu0 %v1722
    %3383 = vmatpush1.msra.mxu0 %v1721
    %3384 = vmatprep.subr.mxu0 %v1730
    %3385 = vmatpush1.msra.mxu0 %v1729
    %3386 = vmatprep.subr.mxu0 %v1738
    %3387 = vmatpush1.msra.mxu0 %v1737
    %3388 = vmatprep.subr.mxu0 %v1746
    %3389 = vmatpush1.msra.mxu0 %v1745
    %3390 = vmatprep.subr.mxu0 %v1754
    %3391 = vmatpush1.msra.mxu0 %v1753
    %3392 = vmatprep.subr.mxu0 %v1762
    %3393 = vmatpush1.msra.mxu0 %v1761
    %3394 = vmatprep.subr.mxu0 %v1770
    %3395 = vmatpush1.msra.mxu0 %v1769
    %3396 = vmatprep.subr.mxu0 %v1778
    %3397 = vmatpush1.msra.mxu0 %v1777
    %3398 = vmatprep.subr.mxu0 %v1786
    %3399 = vmatpush1.msra.mxu0 %v1785
    %3400 = vmatprep.subr.mxu0 %v1794
    %3401 = vmatpush1.msra.mxu0 %v1793
    %3402 = vmatprep.subr.mxu0 %v1802
    %3403 = vmatpush1.msra.mxu0 %v1801
    %3404 = vmatprep.subr.mxu0 %v1810
    %3405 = vmatpush1.msra.mxu0 %v1809
    %3406 = vmatprep.subr.mxu0 %v1818
    %3407 = vmatpush1.msra.mxu0 %v1817
    %3408 = vmatprep.subr.mxu0 %v1826
    %3409 = vmatpush1.msra.mxu0 %v1825
    %3410 = vmatprep.subr.mxu0 %v1834
    %3411 = vmatpush1.msra.mxu0 %v1833
    %3412 = vmatprep.subr.mxu0 %v1842
    %3413 = vmatpush1.msra.mxu0 %v1841
    %3414 = vmatprep.subr.mxu0 %v1850
    %3415 = vmatpush1.msra.mxu0 %v1849
    %3416 = vmatprep.subr.mxu0 %v1858
    %3417 = vmatpush1.msra.mxu0 %v1857
    %3418 = vmatprep.subr.mxu0 %v1866
    %3419 = vmatpush1.msra.mxu0 %v1865
    %3420 = vmatprep.subr.mxu0 %v1874
    %3421 = vmatpush1.msra.mxu0 %v1873
    %3422 = vmatprep.subr.mxu0 %v1882
    %3423 = vmatpush1.msra.mxu0 %v1881
    %3424 = vmatprep.subr.mxu0 %v1890
    %3425 = vmatpush1.msra.mxu0 %v1889
    %3426 = vmatprep.subr.mxu0 %v1898
    %3427 = vmatpush1.msra.mxu0 %v1897
    %3428 = vmatprep.subr.mxu0 %v1906
    %3429 = vmatpush1.msra.mxu0 %v1905
    %3430 = vmatprep.subr.mxu0 %v1914
    %3431 = vmatpush1.msra.mxu0 %v1913
    %3432 = vmatprep.subr.mxu0 %v1922
    %3433 = vmatpush1.msra.mxu0 %v1921
    %3434 = vmatprep.subr.mxu0 %v1930
    %3435 = vmatpush1.msra.mxu0 %v1929
    %3436 = vmatprep.subr.mxu0 %v1938
    %3437 = vmatpush1.msra.mxu0 %v1937
    %3438 = vmatprep.mubr.f32.mxu0 %v2976
    %3439 = vmatmul.mubr.f32.gmra.mrb[0].mxu0 %v2972
    %v3440 = vpop.f32.mrb[0].mxu0
    %v3441 = vadd.f32 0.0, %v3440
    %v3442 = vpop.f32.mrb[0].mxu0
    %v3443 = vadd.f32 0.0, %v3442
    %3444 = vdwg.mxu0
    %3445 = vmatprep.subr.mxu0 %v1946
    %3446 = vmatpush1.msra.mxu0 %v1945
    %3447 = vmatprep.subr.mxu0 %v1954
    %3448 = vmatpush1.msra.mxu0 %v1953
    %3449 = vmatprep.subr.mxu0 %v1962
    %3450 = vmatpush1.msra.mxu0 %v1961
    %3451 = vmatprep.subr.mxu0 %v1970
    %3452 = vmatpush1.msra.mxu0 %v1969
    %3453 = vmatprep.subr.mxu0 %v1978
    %3454 = vmatpush1.msra.mxu0 %v1977
    %3455 = vmatprep.subr.mxu0 %v1986
    %3456 = vmatpush1.msra.mxu0 %v1985
    %3457 = vmatprep.subr.mxu0 %v1994
    %3458 = vmatpush1.msra.mxu0 %v1993
    %3459 = vmatprep.subr.mxu0 %v2002
    %3460 = vmatpush1.msra.mxu0 %v2001
    %3461 = vmatprep.subr.mxu0 %v2010
    %3462 = vmatpush1.msra.mxu0 %v2009
    %3463 = vmatprep.subr.mxu0 %v2018
    %3464 = vmatpush1.msra.mxu0 %v2017
    %3465 = vmatprep.subr.mxu0 %v2026
    %3466 = vmatpush1.msra.mxu0 %v2025
    %3467 = vmatprep.subr.mxu0 %v2034
    %3468 = vmatpush1.msra.mxu0 %v2033
    %3469 = vmatprep.subr.mxu0 %v2042
    %3470 = vmatpush1.msra.mxu0 %v2041
    %3471 = vmatprep.subr.mxu0 %v2050
    %3472 = vmatpush1.msra.mxu0 %v2049
    %3473 = vmatprep.subr.mxu0 %v2058
    %3474 = vmatpush1.msra.mxu0 %v2057
    %3475 = vmatprep.subr.mxu0 %v2066
    %3476 = vmatpush1.msra.mxu0 %v2065
    %3477 = vmatprep.subr.mxu0 %v2074
    %3478 = vmatpush1.msra.mxu0 %v2073
    %3479 = vmatprep.subr.mxu0 %v2082
    %3480 = vmatpush1.msra.mxu0 %v2081
    %3481 = vmatprep.subr.mxu0 %v2090
    %3482 = vmatpush1.msra.mxu0 %v2089
    %3483 = vmatprep.subr.mxu0 %v2098
    %3484 = vmatpush1.msra.mxu0 %v2097
    %3485 = vmatprep.subr.mxu0 %v2106
    %3486 = vmatpush1.msra.mxu0 %v2105
    %3487 = vmatprep.subr.mxu0 %v2114
    %3488 = vmatpush1.msra.mxu0 %v2113
    %3489 = vmatprep.subr.mxu0 %v2122
    %3490 = vmatpush1.msra.mxu0 %v2121
    %3491 = vmatprep.subr.mxu0 %v2130
    %3492 = vmatpush1.msra.mxu0 %v2129
    %3493 = vmatprep.subr.mxu0 %v2138
    %3494 = vmatpush1.msra.mxu0 %v2137
    %3495 = vmatprep.subr.mxu0 %v2146
    %3496 = vmatpush1.msra.mxu0 %v2145
    %3497 = vmatprep.subr.mxu0 %v2154
    %3498 = vmatpush1.msra.mxu0 %v2153
    %3499 = vmatprep.subr.mxu0 %v2162
    %3500 = vmatpush1.msra.mxu0 %v2161
    %3501 = vmatprep.subr.mxu0 %v2170
    %3502 = vmatpush1.msra.mxu0 %v2169
    %3503 = vmatprep.subr.mxu0 %v2178
    %3504 = vmatpush1.msra.mxu0 %v2177
    %3505 = vmatprep.subr.mxu0 %v2186
    %3506 = vmatpush1.msra.mxu0 %v2185
    %3507 = vmatprep.subr.mxu0 %v2194
    %3508 = vmatpush1.msra.mxu0 %v2193
    %3509 = vmatprep.mubr.f32.mxu0 %v2984
    %3510 = vmatmul.mubr.f32.gmra.mrb[0].mxu0 %v2980
    %v3511 = vpop.f32.mrb[0].mxu0
    %v3512 = vadd.f32 %v3441, %v3511
    %v3513 = vpop.f32.mrb[0].mxu0
    %v3514 = vadd.f32 %v3443, %v3513
    %3515 = vdwg.mxu0
    %3516 = vmatprep.subr.mxu0 %v2202
    %3517 = vmatpush1.msra.mxu0 %v2201
    %3518 = vmatprep.subr.mxu0 %v2210
    %3519 = vmatpush1.msra.mxu0 %v2209
    %3520 = vmatprep.subr.mxu0 %v2218
    %3521 = vmatpush1.msra.mxu0 %v2217
    %3522 = vmatprep.subr.mxu0 %v2226
    %3523 = vmatpush1.msra.mxu0 %v2225
    %3524 = vmatprep.subr.mxu0 %v2234
    %3525 = vmatpush1.msra.mxu0 %v2233
    %3526 = vmatprep.subr.mxu0 %v2242
    %3527 = vmatpush1.msra.mxu0 %v2241
    %3528 = vmatprep.subr.mxu0 %v2250
    %3529 = vmatpush1.msra.mxu0 %v2249
    %3530 = vmatprep.subr.mxu0 %v2258
    %3531 = vmatpush1.msra.mxu0 %v2257
    %3532 = vmatprep.subr.mxu0 %v2266
    %3533 = vmatpush1.msra.mxu0 %v2265
    %3534 = vmatprep.subr.mxu0 %v2274
    %3535 = vmatpush1.msra.mxu0 %v2273
    %3536 = vmatprep.subr.mxu0 %v2282
    %3537 = vmatpush1.msra.mxu0 %v2281
    %3538 = vmatprep.subr.mxu0 %v2290
    %3539 = vmatpush1.msra.mxu0 %v2289
    %3540 = vmatprep.subr.mxu0 %v2298
    %3541 = vmatpush1.msra.mxu0 %v2297
    %3542 = vmatprep.subr.mxu0 %v2306
    %3543 = vmatpush1.msra.mxu0 %v2305
    %3544 = vmatprep.subr.mxu0 %v2314
    %3545 = vmatpush1.msra.mxu0 %v2313
    %3546 = vmatprep.subr.mxu0 %v2322
    %3547 = vmatpush1.msra.mxu0 %v2321
    %3548 = vmatprep.subr.mxu0 %v2330
    %3549 = vmatpush1.msra.mxu0 %v2329
    %3550 = vmatprep.subr.mxu0 %v2338
    %3551 = vmatpush1.msra.mxu0 %v2337
    %3552 = vmatprep.subr.mxu0 %v2346
    %3553 = vmatpush1.msra.mxu0 %v2345
    %3554 = vmatprep.subr.mxu0 %v2354
    %3555 = vmatpush1.msra.mxu0 %v2353
    %3556 = vmatprep.subr.mxu0 %v2362
    %3557 = vmatpush1.msra.mxu0 %v2361
    %3558 = vmatprep.subr.mxu0 %v2370
    %3559 = vmatpush1.msra.mxu0 %v2369
    %3560 = vmatprep.subr.mxu0 %v2378
    %3561 = vmatpush1.msra.mxu0 %v2377
    %3562 = vmatprep.subr.mxu0 %v2386
    %3563 = vmatpush1.msra.mxu0 %v2385
    %3564 = vmatprep.subr.mxu0 %v2394
    %3565 = vmatpush1.msra.mxu0 %v2393
    %3566 = vmatprep.subr.mxu0 %v2402
    %3567 = vmatpush1.msra.mxu0 %v2401
    %3568 = vmatprep.subr.mxu0 %v2410
    %3569 = vmatpush1.msra.mxu0 %v2409
    %3570 = vmatprep.subr.mxu0 %v2418
    %3571 = vmatpush1.msra.mxu0 %v2417
    %3572 = vmatprep.subr.mxu0 %v2426
    %3573 = vmatpush1.msra.mxu0 %v2425
    %3574 = vmatprep.subr.mxu0 %v2434
    %3575 = vmatpush1.msra.mxu0 %v2433
    %3576 = vmatprep.subr.mxu0 %v2442
    %3577 = vmatpush1.msra.mxu0 %v2441
    %3578 = vmatprep.subr.mxu0 %v2450
    %3579 = vmatpush1.msra.mxu0 %v2449
    %3580 = vmatprep.mubr.f32.mxu0 %v2992
    %3581 = vmatmul.mubr.f32.gmra.mrb[0].mxu0 %v2988
    %v3582 = vpop.f32.mrb[0].mxu0
    %v3583 = vadd.f32 %v3512, %v3582
    %v3584 = vpop.f32.mrb[0].mxu0
    %v3585 = vadd.f32 %v3514, %v3584
    %3586 = vdwg.mxu0
    %3587 = vmatprep.subr.mxu0 %v2458
    %3588 = vmatpush1.msra.mxu0 %v2457
    %3589 = vmatprep.subr.mxu0 %v2466
    %3590 = vmatpush1.msra.mxu0 %v2465
    %3591 = vmatprep.subr.mxu0 %v2474
    %3592 = vmatpush1.msra.mxu0 %v2473
    %3593 = vmatprep.subr.mxu0 %v2482
    %3594 = vmatpush1.msra.mxu0 %v2481
    %3595 = vmatprep.subr.mxu0 %v2490
    %3596 = vmatpush1.msra.mxu0 %v2489
    %3597 = vmatprep.subr.mxu0 %v2498
    %3598 = vmatpush1.msra.mxu0 %v2497
    %3599 = vmatprep.subr.mxu0 %v2506
    %3600 = vmatpush1.msra.mxu0 %v2505
    %3601 = vmatprep.subr.mxu0 %v2514
    %3602 = vmatpush1.msra.mxu0 %v2513
    %3603 = vmatprep.subr.mxu0 %v2522
    %3604 = vmatpush1.msra.mxu0 %v2521
    %3605 = vmatprep.subr.mxu0 %v2530
    %3606 = vmatpush1.msra.mxu0 %v2529
    %3607 = vmatprep.subr.mxu0 %v2538
    %3608 = vmatpush1.msra.mxu0 %v2537
    %3609 = vmatprep.subr.mxu0 %v2546
    %3610 = vmatpush1.msra.mxu0 %v2545
    %3611 = vmatprep.subr.mxu0 %v2554
    %3612 = vmatpush1.msra.mxu0 %v2553
    %3613 = vmatprep.subr.mxu0 %v2562
    %3614 = vmatpush1.msra.mxu0 %v2561
    %3615 = vmatprep.subr.mxu0 %v2570
    %3616 = vmatpush1.msra.mxu0 %v2569
    %3617 = vmatprep.subr.mxu0 %v2578
    %3618 = vmatpush1.msra.mxu0 %v2577
    %3619 = vmatprep.subr.mxu0 %v2586
    %3620 = vmatpush1.msra.mxu0 %v2585
    %3621 = vmatprep.subr.mxu0 %v2594
    %3622 = vmatpush1.msra.mxu0 %v2593
    %3623 = vmatprep.subr.mxu0 %v2602
    %3624 = vmatpush1.msra.mxu0 %v2601
    %3625 = vmatprep.subr.mxu0 %v2610
    %3626 = vmatpush1.msra.mxu0 %v2609
    %3627 = vmatprep.subr.mxu0 %v2618
    %3628 = vmatpush1.msra.mxu0 %v2617
    %3629 = vmatprep.subr.mxu0 %v2626
    %3630 = vmatpush1.msra.mxu0 %v2625
    %3631 = vmatprep.subr.mxu0 %v2634
    %3632 = vmatpush1.msra.mxu0 %v2633
    %3633 = vmatprep.subr.mxu0 %v2642
    %3634 = vmatpush1.msra.mxu0 %v2641
    %3635 = vmatprep.subr.mxu0 %v2650
    %3636 = vmatpush1.msra.mxu0 %v2649
    %3637 = vmatprep.subr.mxu0 %v2658
    %3638 = vmatpush1.msra.mxu0 %v2657
    %3639 = vmatprep.subr.mxu0 %v2666
    %3640 = vmatpush1.msra.mxu0 %v2665
    %3641 = vmatprep.subr.mxu0 %v2674
    %3642 = vmatpush1.msra.mxu0 %v2673
    %3643 = vmatprep.subr.mxu0 %v2682
    %3644 = vmatpush1.msra.mxu0 %v2681
    %3645 = vmatprep.subr.mxu0 %v2690
    %3646 = vmatpush1.msra.mxu0 %v2689
    %3647 = vmatprep.subr.mxu0 %v2698
    %3648 = vmatpush1.msra.mxu0 %v2697
    %3649 = vmatprep.subr.mxu0 %v2706
    %3650 = vmatpush1.msra.mxu0 %v2705
    %3651 = vmatprep.mubr.f32.mxu0 %v3000
    %3652 = vmatmul.mubr.f32.gmra.mrb[0].mxu0 %v2996
    %v3653 = vpop.f32.mrb[0].mxu0
    %v3654 = vadd.f32 %v3583, %v3653
    %v3655 = vpop.f32.mrb[0].mxu0
    %v3656 = vadd.f32 %v3585, %v3655
    %3657 = vdwg.mxu0
    %3658 = vmatprep.subr.mxu0 %v2714
    %3659 = vmatpush1.msra.mxu0 %v2713
    %3660 = vmatprep.subr.mxu0 %v2722
    %3661 = vmatpush1.msra.mxu0 %v2721
    %3662 = vmatprep.subr.mxu0 %v2730
    %3663 = vmatpush1.msra.mxu0 %v2729
    %3664 = vmatprep.subr.mxu0 %v2738
    %3665 = vmatpush1.msra.mxu0 %v2737
    %3666 = vmatprep.subr.mxu0 %v2746
    %3667 = vmatpush1.msra.mxu0 %v2745
    %3668 = vmatprep.subr.mxu0 %v2754
    %3669 = vmatpush1.msra.mxu0 %v2753
    %3670 = vmatprep.subr.mxu0 %v2762
    %3671 = vmatpush1.msra.mxu0 %v2761
    %3672 = vmatprep.subr.mxu0 %v2770
    %3673 = vmatpush1.msra.mxu0 %v2769
    %3674 = vmatprep.subr.mxu0 %v2778
    %3675 = vmatpush1.msra.mxu0 %v2777
    %3676 = vmatprep.subr.mxu0 %v2786
    %3677 = vmatpush1.msra.mxu0 %v2785
    %3678 = vmatprep.subr.mxu0 %v2794
    %3679 = vmatpush1.msra.mxu0 %v2793
    %3680 = vmatprep.subr.mxu0 %v2802
    %3681 = vmatpush1.msra.mxu0 %v2801
    %3682 = vmatprep.subr.mxu0 %v2810
    %3683 = vmatpush1.msra.mxu0 %v2809
    %3684 = vmatprep.subr.mxu0 %v2818
    %3685 = vmatpush1.msra.mxu0 %v2817
    %3686 = vmatprep.subr.mxu0 %v2826
    %3687 = vmatpush1.msra.mxu0 %v2825
    %3688 = vmatprep.subr.mxu0 %v2834
    %3689 = vmatpush1.msra.mxu0 %v2833
    %3690 = vmatprep.subr.mxu0 %v2842
    %3691 = vmatpush1.msra.mxu0 %v2841
    %3692 = vmatprep.subr.mxu0 %v2850
    %3693 = vmatpush1.msra.mxu0 %v2849
    %3694 = vmatprep.subr.mxu0 %v2858
    %3695 = vmatpush1.msra.mxu0 %v2857
    %3696 = vmatprep.subr.mxu0 %v2866
    %3697 = vmatpush1.msra.mxu0 %v2865
    %3698 = vmatprep.subr.mxu0 %v2874
    %3699 = vmatpush1.msra.mxu0 %v2873
    %3700 = vmatprep.subr.mxu0 %v2882
    %3701 = vmatpush1.msra.mxu0 %v2881
    %3702 = vmatprep.subr.mxu0 %v2890
    %3703 = vmatpush1.msra.mxu0 %v2889
    %3704 = vmatprep.subr.mxu0 %v2898
    %3705 = vmatpush1.msra.mxu0 %v2897
    %3706 = vmatprep.subr.mxu0 %v2906
    %3707 = vmatpush1.msra.mxu0 %v2905
    %3708 = vmatprep.subr.mxu0 %v2914
    %3709 = vmatpush1.msra.mxu0 %v2913
    %3710 = vmatprep.subr.mxu0 %v2922
    %3711 = vmatpush1.msra.mxu0 %v2921
    %3712 = vmatprep.subr.mxu0 %v2930
    %3713 = vmatpush1.msra.mxu0 %v2929
    %3714 = vmatprep.subr.mxu0 %v2938
    %3715 = vmatpush1.msra.mxu0 %v2937
    %3716 = vmatprep.subr.mxu0 %v2946
    %3717 = vmatpush1.msra.mxu0 %v2945
    %3718 = vmatprep.subr.mxu0 %v2954
    %3719 = vmatpush1.msra.mxu0 %v2953
    %3720 = vmatprep.subr.mxu0 %v2962
    %3721 = vmatpush1.msra.mxu0 %v2961
    %3722 = vmatprep.mubr.f32.mxu0 %v3008
    %3723 = vmatmul.mubr.f32.gmra.mrb[0].mxu0 %v3004
    %v3724 = vpop.f32.mrb[0].mxu0
    %v3725 = vadd.f32 %v3654, %v3724
    %v3726 = vpop.f32.mrb[0].mxu0
    %v3727 = vadd.f32 %v3656, %v3726
    %3728 = vdwg.mxu0
    %3729 = vmatprep.subr.mxu0 %v1692
    %3730 = vmatpush1.msra.mxu0 %v1691
    %3731 = vmatprep.subr.mxu0 %v1700
    %3732 = vmatpush1.msra.mxu0 %v1699
    %3733 = vmatprep.subr.mxu0 %v1708
    %3734 = vmatpush1.msra.mxu0 %v1707
    %3735 = vmatprep.subr.mxu0 %v1716
    %3736 = vmatpush1.msra.mxu0 %v1715
    %3737 = vmatprep.subr.mxu0 %v1724
    %3738 = vmatpush1.msra.mxu0 %v1723
    %3739 = vmatprep.subr.mxu0 %v1732
    %3740 = vmatpush1.msra.mxu0 %v1731
    %3741 = vmatprep.subr.mxu0 %v1740
    %3742 = vmatpush1.msra.mxu0 %v1739
    %3743 = vmatprep.subr.mxu0 %v1748
    %3744 = vmatpush1.msra.mxu0 %v1747
    %3745 = vmatprep.subr.mxu0 %v1756
    %3746 = vmatpush1.msra.mxu0 %v1755
    %3747 = vmatprep.subr.mxu0 %v1764
    %3748 = vmatpush1.msra.mxu0 %v1763
    %3749 = vmatprep.subr.mxu0 %v1772
    %3750 = vmatpush1.msra.mxu0 %v1771
    %3751 = vmatprep.subr.mxu0 %v1780
    %3752 = vmatpush1.msra.mxu0 %v1779
    %3753 = vmatprep.subr.mxu0 %v1788
    %3754 = vmatpush1.msra.mxu0 %v1787
    %3755 = vmatprep.subr.mxu0 %v1796
    %3756 = vmatpush1.msra.mxu0 %v1795
    %3757 = vmatprep.subr.mxu0 %v1804
    %3758 = vmatpush1.msra.mxu0 %v1803
    %3759 = vmatprep.subr.mxu0 %v1812
    %3760 = vmatpush1.msra.mxu0 %v1811
    %3761 = vmatprep.subr.mxu0 %v1820
    %3762 = vmatpush1.msra.mxu0 %v1819
    %3763 = vmatprep.subr.mxu0 %v1828
    %3764 = vmatpush1.msra.mxu0 %v1827
    %3765 = vmatprep.subr.mxu0 %v1836
    %3766 = vmatpush1.msra.mxu0 %v1835
    %3767 = vmatprep.subr.mxu0 %v1844
    %3768 = vmatpush1.msra.mxu0 %v1843
    %3769 = vmatprep.subr.mxu0 %v1852
    %3770 = vmatpush1.msra.mxu0 %v1851
    %3771 = vmatprep.subr.mxu0 %v1860
    %3772 = vmatpush1.msra.mxu0 %v1859
    %3773 = vmatprep.subr.mxu0 %v1868
    %3774 = vmatpush1.msra.mxu0 %v1867
    %3775 = vmatprep.subr.mxu0 %v1876
    %3776 = vmatpush1.msra.mxu0 %v1875
    %3777 = vmatprep.subr.mxu0 %v1884
    %3778 = vmatpush1.msra.mxu0 %v1883
    %3779 = vmatprep.subr.mxu0 %v1892
    %3780 = vmatpush1.msra.mxu0 %v1891
    %3781 = vmatprep.subr.mxu0 %v1900
    %3782 = vmatpush1.msra.mxu0 %v1899
    %3783 = vmatprep.subr.mxu0 %v1908
    %3784 = vmatpush1.msra.mxu0 %v1907
    %3785 = vmatprep.subr.mxu0 %v1916
    %3786 = vmatpush1.msra.mxu0 %v1915
    %3787 = vmatprep.subr.mxu0 %v1924
    %3788 = vmatpush1.msra.mxu0 %v1923
    %3789 = vmatprep.subr.mxu0 %v1932
    %3790 = vmatpush1.msra.mxu0 %v1931
    %3791 = vmatprep.subr.mxu0 %v1940
    %3792 = vmatpush1.msra.mxu0 %v1939
    %3793 = vmatprep.mubr.f32.mxu0 %v2976
    %3794 = vmatmul.mubr.f32.gmra.mrb[0].mxu0 %v2972
    %v3795 = vpop.f32.mrb[0].mxu0
    %v3796 = vadd.f32 0.0, %v3795
    %v3797 = vpop.f32.mrb[0].mxu0
    %v3798 = vadd.f32 0.0, %v3797
    %3799 = vdwg.mxu0
    %3800 = vmatprep.subr.mxu0 %v1948
    %3801 = vmatpush1.msra.mxu0 %v1947
    %3802 = vmatprep.subr.mxu0 %v1956
    %3803 = vmatpush1.msra.mxu0 %v1955
    %3804 = vmatprep.subr.mxu0 %v1964
    %3805 = vmatpush1.msra.mxu0 %v1963
    %3806 = vmatprep.subr.mxu0 %v1972
    %3807 = vmatpush1.msra.mxu0 %v1971
    %3808 = vmatprep.subr.mxu0 %v1980
    %3809 = vmatpush1.msra.mxu0 %v1979
    %3810 = vmatprep.subr.mxu0 %v1988
    %3811 = vmatpush1.msra.mxu0 %v1987
    %3812 = vmatprep.subr.mxu0 %v1996
    %3813 = vmatpush1.msra.mxu0 %v1995
    %3814 = vmatprep.subr.mxu0 %v2004
    %3815 = vmatpush1.msra.mxu0 %v2003
    %3816 = vmatprep.subr.mxu0 %v2012
    %3817 = vmatpush1.msra.mxu0 %v2011
    %3818 = vmatprep.subr.mxu0 %v2020
    %3819 = vmatpush1.msra.mxu0 %v2019
    %3820 = vmatprep.subr.mxu0 %v2028
    %3821 = vmatpush1.msra.mxu0 %v2027
    %3822 = vmatprep.subr.mxu0 %v2036
    %3823 = vmatpush1.msra.mxu0 %v2035
    %3824 = vmatprep.subr.mxu0 %v2044
    %3825 = vmatpush1.msra.mxu0 %v2043
    %3826 = vmatprep.subr.mxu0 %v2052
    %3827 = vmatpush1.msra.mxu0 %v2051
    %3828 = vmatprep.subr.mxu0 %v2060
    %3829 = vmatpush1.msra.mxu0 %v2059
    %3830 = vmatprep.subr.mxu0 %v2068
    %3831 = vmatpush1.msra.mxu0 %v2067
    %3832 = vmatprep.subr.mxu0 %v2076
    %3833 = vmatpush1.msra.mxu0 %v2075
    %3834 = vmatprep.subr.mxu0 %v2084
    %3835 = vmatpush1.msra.mxu0 %v2083
    %3836 = vmatprep.subr.mxu0 %v2092
    %3837 = vmatpush1.msra.mxu0 %v2091
    %3838 = vmatprep.subr.mxu0 %v2100
    %3839 = vmatpush1.msra.mxu0 %v2099
    %3840 = vmatprep.subr.mxu0 %v2108
    %3841 = vmatpush1.msra.mxu0 %v2107
    %3842 = vmatprep.subr.mxu0 %v2116
    %3843 = vmatpush1.msra.mxu0 %v2115
    %3844 = vmatprep.subr.mxu0 %v2124
    %3845 = vmatpush1.msra.mxu0 %v2123
    %3846 = vmatprep.subr.mxu0 %v2132
    %3847 = vmatpush1.msra.mxu0 %v2131
    %3848 = vmatprep.subr.mxu0 %v2140
    %3849 = vmatpush1.msra.mxu0 %v2139
    %3850 = vmatprep.subr.mxu0 %v2148
    %3851 = vmatpush1.msra.mxu0 %v2147
    %3852 = vmatprep.subr.mxu0 %v2156
    %3853 = vmatpush1.msra.mxu0 %v2155
    %3854 = vmatprep.subr.mxu0 %v2164
    %3855 = vmatpush1.msra.mxu0 %v2163
    %3856 = vmatprep.subr.mxu0 %v2172
    %3857 = vmatpush1.msra.mxu0 %v2171
    %3858 = vmatprep.subr.mxu0 %v2180
    %3859 = vmatpush1.msra.mxu0 %v2179
    %3860 = vmatprep.subr.mxu0 %v2188
    %3861 = vmatpush1.msra.mxu0 %v2187
    %3862 = vmatprep.subr.mxu0 %v2196
    %3863 = vmatpush1.msra.mxu0 %v2195
    %3864 = vmatprep.mubr.f32.mxu0 %v2984
    %3865 = vmatmul.mubr.f32.gmra.mrb[0].mxu0 %v2980
    %v3866 = vpop.f32.mrb[0].mxu0
    %v3867 = vadd.f32 %v3796, %v3866
    %v3868 = vpop.f32.mrb[0].mxu0
    %v3869 = vadd.f32 %v3798, %v3868
    %3870 = vdwg.mxu0
    %3871 = vmatprep.subr.mxu0 %v2204
    %3872 = vmatpush1.msra.mxu0 %v2203
    %3873 = vmatprep.subr.mxu0 %v2212
    %3874 = vmatpush1.msra.mxu0 %v2211
    %3875 = vmatprep.subr.mxu0 %v2220
    %3876 = vmatpush1.msra.mxu0 %v2219
    %3877 = vmatprep.subr.mxu0 %v2228
    %3878 = vmatpush1.msra.mxu0 %v2227
    %3879 = vmatprep.subr.mxu0 %v2236
    %3880 = vmatpush1.msra.mxu0 %v2235
    %3881 = vmatprep.subr.mxu0 %v2244
    %3882 = vmatpush1.msra.mxu0 %v2243
    %3883 = vmatprep.subr.mxu0 %v2252
    %3884 = vmatpush1.msra.mxu0 %v2251
    %3885 = vmatprep.subr.mxu0 %v2260
    %3886 = vmatpush1.msra.mxu0 %v2259
    %3887 = vmatprep.subr.mxu0 %v2268
    %3888 = vmatpush1.msra.mxu0 %v2267
    %3889 = vmatprep.subr.mxu0 %v2276
    %3890 = vmatpush1.msra.mxu0 %v2275
    %3891 = vmatprep.subr.mxu0 %v2284
    %3892 = vmatpush1.msra.mxu0 %v2283
    %3893 = vmatprep.subr.mxu0 %v2292
    %3894 = vmatpush1.msra.mxu0 %v2291
    %3895 = vmatprep.subr.mxu0 %v2300
    %3896 = vmatpush1.msra.mxu0 %v2299
    %3897 = vmatprep.subr.mxu0 %v2308
    %3898 = vmatpush1.msra.mxu0 %v2307
    %3899 = vmatprep.subr.mxu0 %v2316
    %3900 = vmatpush1.msra.mxu0 %v2315
    %3901 = vmatprep.subr.mxu0 %v2324
    %3902 = vmatpush1.msra.mxu0 %v2323
    %3903 = vmatprep.subr.mxu0 %v2332
    %3904 = vmatpush1.msra.mxu0 %v2331
    %3905 = vmatprep.subr.mxu0 %v2340
    %3906 = vmatpush1.msra.mxu0 %v2339
    %3907 = vmatprep.subr.mxu0 %v2348
    %3908 = vmatpush1.msra.mxu0 %v2347
    %3909 = vmatprep.subr.mxu0 %v2356
    %3910 = vmatpush1.msra.mxu0 %v2355
    %3911 = vmatprep.subr.mxu0 %v2364
    %3912 = vmatpush1.msra.mxu0 %v2363
    %3913 = vmatprep.subr.mxu0 %v2372
    %3914 = vmatpush1.msra.mxu0 %v2371
    %3915 = vmatprep.subr.mxu0 %v2380
    %3916 = vmatpush1.msra.mxu0 %v2379
    %3917 = vmatprep.subr.mxu0 %v2388
    %3918 = vmatpush1.msra.mxu0 %v2387
    %3919 = vmatprep.subr.mxu0 %v2396
    %3920 = vmatpush1.msra.mxu0 %v2395
    %3921 = vmatprep.subr.mxu0 %v2404
    %3922 = vmatpush1.msra.mxu0 %v2403
    %3923 = vmatprep.subr.mxu0 %v2412
    %3924 = vmatpush1.msra.mxu0 %v2411
    %3925 = vmatprep.subr.mxu0 %v2420
    %3926 = vmatpush1.msra.mxu0 %v2419
    %3927 = vmatprep.subr.mxu0 %v2428
    %3928 = vmatpush1.msra.mxu0 %v2427
    %3929 = vmatprep.subr.mxu0 %v2436
    %3930 = vmatpush1.msra.mxu0 %v2435
    %3931 = vmatprep.subr.mxu0 %v2444
    %3932 = vmatpush1.msra.mxu0 %v2443
    %3933 = vmatprep.subr.mxu0 %v2452
    %3934 = vmatpush1.msra.mxu0 %v2451
    %3935 = vmatprep.mubr.f32.mxu0 %v2992
    %3936 = vmatmul.mubr.f32.gmra.mrb[0].mxu0 %v2988
    %v3937 = vpop.f32.mrb[0].mxu0
    %v3938 = vadd.f32 %v3867, %v3937
    %v3939 = vpop.f32.mrb[0].mxu0
    %v3940 = vadd.f32 %v3869, %v3939
    %3941 = vdwg.mxu0
    %3942 = vmatprep.subr.mxu0 %v2460
    %3943 = vmatpush1.msra.mxu0 %v2459
    %3944 = vmatprep.subr.mxu0 %v2468
    %3945 = vmatpush1.msra.mxu0 %v2467
    %3946 = vmatprep.subr.mxu0 %v2476
    %3947 = vmatpush1.msra.mxu0 %v2475
    %3948 = vmatprep.subr.mxu0 %v2484
    %3949 = vmatpush1.msra.mxu0 %v2483
    %3950 = vmatprep.subr.mxu0 %v2492
    %3951 = vmatpush1.msra.mxu0 %v2491
    %3952 = vmatprep.subr.mxu0 %v2500
    %3953 = vmatpush1.msra.mxu0 %v2499
    %3954 = vmatprep.subr.mxu0 %v2508
    %3955 = vmatpush1.msra.mxu0 %v2507
    %3956 = vmatprep.subr.mxu0 %v2516
    %3957 = vmatpush1.msra.mxu0 %v2515
    %3958 = vmatprep.subr.mxu0 %v2524
    %3959 = vmatpush1.msra.mxu0 %v2523
    %3960 = vmatprep.subr.mxu0 %v2532
    %3961 = vmatpush1.msra.mxu0 %v2531
    %3962 = vmatprep.subr.mxu0 %v2540
    %3963 = vmatpush1.msra.mxu0 %v2539
    %3964 = vmatprep.subr.mxu0 %v2548
    %3965 = vmatpush1.msra.mxu0 %v2547
    %3966 = vmatprep.subr.mxu0 %v2556
    %3967 = vmatpush1.msra.mxu0 %v2555
    %3968 = vmatprep.subr.mxu0 %v2564
    %3969 = vmatpush1.msra.mxu0 %v2563
    %3970 = vmatprep.subr.mxu0 %v2572
    %3971 = vmatpush1.msra.mxu0 %v2571
    %3972 = vmatprep.subr.mxu0 %v2580
    %3973 = vmatpush1.msra.mxu0 %v2579
    %3974 = vmatprep.subr.mxu0 %v2588
    %3975 = vmatpush1.msra.mxu0 %v2587
    %3976 = vmatprep.subr.mxu0 %v2596
    %3977 = vmatpush1.msra.mxu0 %v2595
    %3978 = vmatprep.subr.mxu0 %v2604
    %3979 = vmatpush1.msra.mxu0 %v2603
    %3980 = vmatprep.subr.mxu0 %v2612
    %3981 = vmatpush1.msra.mxu0 %v2611
    %3982 = vmatprep.subr.mxu0 %v2620
    %3983 = vmatpush1.msra.mxu0 %v2619
    %3984 = vmatprep.subr.mxu0 %v2628
    %3985 = vmatpush1.msra.mxu0 %v2627
    %3986 = vmatprep.subr.mxu0 %v2636
    %3987 = vmatpush1.msra.mxu0 %v2635
    %3988 = vmatprep.subr.mxu0 %v2644
    %3989 = vmatpush1.msra.mxu0 %v2643
    %3990 = vmatprep.subr.mxu0 %v2652
    %3991 = vmatpush1.msra.mxu0 %v2651
    %3992 = vmatprep.subr.mxu0 %v2660
    %3993 = vmatpush1.msra.mxu0 %v2659
    %3994 = vmatprep.subr.mxu0 %v2668
    %3995 = vmatpush1.msra.mxu0 %v2667
    %3996 = vmatprep.subr.mxu0 %v2676
    %3997 = vmatpush1.msra.mxu0 %v2675
    %3998 = vmatprep.subr.mxu0 %v2684
    %3999 = vmatpush1.msra.mxu0 %v2683
    %4000 = vmatprep.subr.mxu0 %v2692
    %4001 = vmatpush1.msra.mxu0 %v2691
    %4002 = vmatprep.subr.mxu0 %v2700
    %4003 = vmatpush1.msra.mxu0 %v2699
    %4004 = vmatprep.subr.mxu0 %v2708
    %4005 = vmatpush1.msra.mxu0 %v2707
    %4006 = vmatprep.mubr.f32.mxu0 %v3000
    %4007 = vmatmul.mubr.f32.gmra.mrb[0].mxu0 %v2996
    %v4008 = vpop.f32.mrb[0].mxu0
    %v4009 = vadd.f32 %v3938, %v4008
    %v4010 = vpop.f32.mrb[0].mxu0
    %v4011 = vadd.f32 %v3940, %v4010
    %4012 = vdwg.mxu0
    %4013 = vmatprep.subr.mxu0 %v2716
    %4014 = vmatpush1.msra.mxu0 %v2715
    %4015 = vmatprep.subr.mxu0 %v2724
    %4016 = vmatpush1.msra.mxu0 %v2723
    %4017 = vmatprep.subr.mxu0 %v2732
    %4018 = vmatpush1.msra.mxu0 %v2731
    %4019 = vmatprep.subr.mxu0 %v2740
    %4020 = vmatpush1.msra.mxu0 %v2739
    %4021 = vmatprep.subr.mxu0 %v2748
    %4022 = vmatpush1.msra.mxu0 %v2747
    %4023 = vmatprep.subr.mxu0 %v2756
    %4024 = vmatpush1.msra.mxu0 %v2755
    %4025 = vmatprep.subr.mxu0 %v2764
    %4026 = vmatpush1.msra.mxu0 %v2763
    %4027 = vmatprep.subr.mxu0 %v2772
    %4028 = vmatpush1.msra.mxu0 %v2771
    %4029 = vmatprep.subr.mxu0 %v2780
    %4030 = vmatpush1.msra.mxu0 %v2779
    %4031 = vmatprep.subr.mxu0 %v2788
    %4032 = vmatpush1.msra.mxu0 %v2787
    %4033 = vmatprep.subr.mxu0 %v2796
    %4034 = vmatpush1.msra.mxu0 %v2795
    %4035 = vmatprep.subr.mxu0 %v2804
    %4036 = vmatpush1.msra.mxu0 %v2803
    %4037 = vmatprep.subr.mxu0 %v2812
    %4038 = vmatpush1.msra.mxu0 %v2811
    %4039 = vmatprep.subr.mxu0 %v2820
    %4040 = vmatpush1.msra.mxu0 %v2819
    %4041 = vmatprep.subr.mxu0 %v2828
    %4042 = vmatpush1.msra.mxu0 %v2827
    %4043 = vmatprep.subr.mxu0 %v2836
    %4044 = vmatpush1.msra.mxu0 %v2835
    %4045 = vmatprep.subr.mxu0 %v2844
    %4046 = vmatpush1.msra.mxu0 %v2843
    %4047 = vmatprep.subr.mxu0 %v2852
    %4048 = vmatpush1.msra.mxu0 %v2851
    %4049 = vmatprep.subr.mxu0 %v2860
    %4050 = vmatpush1.msra.mxu0 %v2859
    %4051 = vmatprep.subr.mxu0 %v2868
    %4052 = vmatpush1.msra.mxu0 %v2867
    %4053 = vmatprep.subr.mxu0 %v2876
    %4054 = vmatpush1.msra.mxu0 %v2875
    %4055 = vmatprep.subr.mxu0 %v2884
    %4056 = vmatpush1.msra.mxu0 %v2883
    %4057 = vmatprep.subr.mxu0 %v2892
    %4058 = vmatpush1.msra.mxu0 %v2891
    %4059 = vmatprep.subr.mxu0 %v2900
    %4060 = vmatpush1.msra.mxu0 %v2899
    %4061 = vmatprep.subr.mxu0 %v2908
    %4062 = vmatpush1.msra.mxu0 %v2907
    %4063 = vmatprep.subr.mxu0 %v2916
    %4064 = vmatpush1.msra.mxu0 %v2915
    %4065 = vmatprep.subr.mxu0 %v2924
    %4066 = vmatpush1.msra.mxu0 %v2923
    %4067 = vmatprep.subr.mxu0 %v2932
    %4068 = vmatpush1.msra.mxu0 %v2931
    %4069 = vmatprep.subr.mxu0 %v2940
    %4070 = vmatpush1.msra.mxu0 %v2939
    %4071 = vmatprep.subr.mxu0 %v2948
    %4072 = vmatpush1.msra.mxu0 %v2947
    %4073 = vmatprep.subr.mxu0 %v2956
    %4074 = vmatpush1.msra.mxu0 %v2955
    %4075 = vmatprep.subr.mxu0 %v2964
    %4076 = vmatpush1.msra.mxu0 %v2963
    %4077 = vmatprep.mubr.f32.mxu0 %v3008
    %4078 = vmatmul.mubr.f32.gmra.mrb[0].mxu0 %v3004
    %v4079 = vpop.f32.mrb[0].mxu0
    %v4080 = vadd.f32 %v4009, %v4079
    %v4081 = vpop.f32.mrb[0].mxu0
    %v4082 = vadd.f32 %v4011, %v4081
    %4083 = vdwg.mxu0
    %4084 = vmatprep.subr.mxu0 %v1694
    %4085 = vmatpush1.msra.mxu0 %v1693
    %4086 = vmatprep.subr.mxu0 %v1702
    %4087 = vmatpush1.msra.mxu0 %v1701
    %4088 = vmatprep.subr.mxu0 %v1710
    %4089 = vmatpush1.msra.mxu0 %v1709
    %4090 = vmatprep.subr.mxu0 %v1718
    %4091 = vmatpush1.msra.mxu0 %v1717
    %4092 = vmatprep.subr.mxu0 %v1726
    %4093 = vmatpush1.msra.mxu0 %v1725
    %4094 = vmatprep.subr.mxu0 %v1734
    %4095 = vmatpush1.msra.mxu0 %v1733
    %4096 = vmatprep.subr.mxu0 %v1742
    %4097 = vmatpush1.msra.mxu0 %v1741
    %4098 = vmatprep.subr.mxu0 %v1750
    %4099 = vmatpush1.msra.mxu0 %v1749
    %4100 = vmatprep.subr.mxu0 %v1758
    %4101 = vmatpush1.msra.mxu0 %v1757
    %4102 = vmatprep.subr.mxu0 %v1766
    %4103 = vmatpush1.msra.mxu0 %v1765
    %4104 = vmatprep.subr.mxu0 %v1774
    %4105 = vmatpush1.msra.mxu0 %v1773
    %4106 = vmatprep.subr.mxu0 %v1782
    %4107 = vmatpush1.msra.mxu0 %v1781
    %4108 = vmatprep.subr.mxu0 %v1790
    %4109 = vmatpush1.msra.mxu0 %v1789
    %4110 = vmatprep.subr.mxu0 %v1798
    %4111 = vmatpush1.msra.mxu0 %v1797
    %4112 = vmatprep.subr.mxu0 %v1806
    %4113 = vmatpush1.msra.mxu0 %v1805
    %4114 = vmatprep.subr.mxu0 %v1814
    %4115 = vmatpush1.msra.mxu0 %v1813
    %4116 = vmatprep.subr.mxu0 %v1822
    %4117 = vmatpush1.msra.mxu0 %v1821
    %4118 = vmatprep.subr.mxu0 %v1830
    %4119 = vmatpush1.msra.mxu0 %v1829
    %4120 = vmatprep.subr.mxu0 %v1838
    %4121 = vmatpush1.msra.mxu0 %v1837
    %4122 = vmatprep.subr.mxu0 %v1846
    %4123 = vmatpush1.msra.mxu0 %v1845
    %4124 = vmatprep.subr.mxu0 %v1854
    %4125 = vmatpush1.msra.mxu0 %v1853
    %4126 = vmatprep.subr.mxu0 %v1862
    %4127 = vmatpush1.msra.mxu0 %v1861
    %4128 = vmatprep.subr.mxu0 %v1870
    %4129 = vmatpush1.msra.mxu0 %v1869
    %4130 = vmatprep.subr.mxu0 %v1878
    %4131 = vmatpush1.msra.mxu0 %v1877
    %4132 = vmatprep.subr.mxu0 %v1886
    %4133 = vmatpush1.msra.mxu0 %v1885
    %4134 = vmatprep.subr.mxu0 %v1894
    %4135 = vmatpush1.msra.mxu0 %v1893
    %4136 = vmatprep.subr.mxu0 %v1902
    %4137 = vmatpush1.msra.mxu0 %v1901
    %4138 = vmatprep.subr.mxu0 %v1910
    %4139 = vmatpush1.msra.mxu0 %v1909
    %4140 = vmatprep.subr.mxu0 %v1918
    %4141 = vmatpush1.msra.mxu0 %v1917
    %4142 = vmatprep.subr.mxu0 %v1926
    %4143 = vmatpush1.msra.mxu0 %v1925
    %4144 = vmatprep.subr.mxu0 %v1934
    %4145 = vmatpush1.msra.mxu0 %v1933
    %4146 = vmatprep.subr.mxu0 %v1942
    %4147 = vmatpush1.msra.mxu0 %v1941
    %4148 = vmatprep.mubr.f32.mxu0 %v2976
    %4149 = vmatmul.mubr.f32.gmra.mrb[0].mxu0 %v2972
    %v4150 = vpop.f32.mrb[0].mxu0
    %v4151 = vadd.f32 0.0, %v4150
    %v4152 = vpop.f32.mrb[0].mxu0
    %v4153 = vadd.f32 0.0, %v4152
    %4154 = vdwg.mxu0
    %4155 = vmatprep.subr.mxu0 %v1950
    %4156 = vmatpush1.msra.mxu0 %v1949
    %4157 = vmatprep.subr.mxu0 %v1958
    %4158 = vmatpush1.msra.mxu0 %v1957
    %4159 = vmatprep.subr.mxu0 %v1966
    %4160 = vmatpush1.msra.mxu0 %v1965
    %4161 = vmatprep.subr.mxu0 %v1974
    %4162 = vmatpush1.msra.mxu0 %v1973
    %4163 = vmatprep.subr.mxu0 %v1982
    %4164 = vmatpush1.msra.mxu0 %v1981
    %4165 = vmatprep.subr.mxu0 %v1990
    %4166 = vmatpush1.msra.mxu0 %v1989
    %4167 = vmatprep.subr.mxu0 %v1998
    %4168 = vmatpush1.msra.mxu0 %v1997
    %4169 = vmatprep.subr.mxu0 %v2006
    %4170 = vmatpush1.msra.mxu0 %v2005
    %4171 = vmatprep.subr.mxu0 %v2014
    %4172 = vmatpush1.msra.mxu0 %v2013
    %4173 = vmatprep.subr.mxu0 %v2022
    %4174 = vmatpush1.msra.mxu0 %v2021
    %4175 = vmatprep.subr.mxu0 %v2030
    %4176 = vmatpush1.msra.mxu0 %v2029
    %4177 = vmatprep.subr.mxu0 %v2038
    %4178 = vmatpush1.msra.mxu0 %v2037
    %4179 = vmatprep.subr.mxu0 %v2046
    %4180 = vmatpush1.msra.mxu0 %v2045
    %4181 = vmatprep.subr.mxu0 %v2054
    %4182 = vmatpush1.msra.mxu0 %v2053
    %4183 = vmatprep.subr.mxu0 %v2062
    %4184 = vmatpush1.msra.mxu0 %v2061
    %4185 = vmatprep.subr.mxu0 %v2070
    %4186 = vmatpush1.msra.mxu0 %v2069
    %4187 = vmatprep.subr.mxu0 %v2078
    %4188 = vmatpush1.msra.mxu0 %v2077
    %4189 = vmatprep.subr.mxu0 %v2086
    %4190 = vmatpush1.msra.mxu0 %v2085
    %4191 = vmatprep.subr.mxu0 %v2094
    %4192 = vmatpush1.msra.mxu0 %v2093
    %4193 = vmatprep.subr.mxu0 %v2102
    %4194 = vmatpush1.msra.mxu0 %v2101
    %4195 = vmatprep.subr.mxu0 %v2110
    %4196 = vmatpush1.msra.mxu0 %v2109
    %4197 = vmatprep.subr.mxu0 %v2118
    %4198 = vmatpush1.msra.mxu0 %v2117
    %4199 = vmatprep.subr.mxu0 %v2126
    %4200 = vmatpush1.msra.mxu0 %v2125
    %4201 = vmatprep.subr.mxu0 %v2134
    %4202 = vmatpush1.msra.mxu0 %v2133
    %4203 = vmatprep.subr.mxu0 %v2142
    %4204 = vmatpush1.msra.mxu0 %v2141
    %4205 = vmatprep.subr.mxu0 %v2150
    %4206 = vmatpush1.msra.mxu0 %v2149
    %4207 = vmatprep.subr.mxu0 %v2158
    %4208 = vmatpush1.msra.mxu0 %v2157
    %4209 = vmatprep.subr.mxu0 %v2166
    %4210 = vmatpush1.msra.mxu0 %v2165
    %4211 = vmatprep.subr.mxu0 %v2174
    %4212 = vmatpush1.msra.mxu0 %v2173
    %4213 = vmatprep.subr.mxu0 %v2182
    %4214 = vmatpush1.msra.mxu0 %v2181
    %4215 = vmatprep.subr.mxu0 %v2190
    %4216 = vmatpush1.msra.mxu0 %v2189
    %4217 = vmatprep.subr.mxu0 %v2198
    %4218 = vmatpush1.msra.mxu0 %v2197
    %4219 = vmatprep.mubr.f32.mxu0 %v2984
    %4220 = vmatmul.mubr.f32.gmra.mrb[0].mxu0 %v2980
    %v4221 = vpop.f32.mrb[0].mxu0
    %v4222 = vadd.f32 %v4151, %v4221
    %v4223 = vpop.f32.mrb[0].mxu0
    %v4224 = vadd.f32 %v4153, %v4223
    %4225 = vdwg.mxu0
    %4226 = vmatprep.subr.mxu0 %v2206
    %4227 = vmatpush1.msra.mxu0 %v2205
    %4228 = vmatprep.subr.mxu0 %v2214
    %4229 = vmatpush1.msra.mxu0 %v2213
    %4230 = vmatprep.subr.mxu0 %v2222
    %4231 = vmatpush1.msra.mxu0 %v2221
    %4232 = vmatprep.subr.mxu0 %v2230
    %4233 = vmatpush1.msra.mxu0 %v2229
    %4234 = vmatprep.subr.mxu0 %v2238
    %4235 = vmatpush1.msra.mxu0 %v2237
    %4236 = vmatprep.subr.mxu0 %v2246
    %4237 = vmatpush1.msra.mxu0 %v2245
    %4238 = vmatprep.subr.mxu0 %v2254
    %4239 = vmatpush1.msra.mxu0 %v2253
    %4240 = vmatprep.subr.mxu0 %v2262
    %4241 = vmatpush1.msra.mxu0 %v2261
    %4242 = vmatprep.subr.mxu0 %v2270
    %4243 = vmatpush1.msra.mxu0 %v2269
    %4244 = vmatprep.subr.mxu0 %v2278
    %4245 = vmatpush1.msra.mxu0 %v2277
    %4246 = vmatprep.subr.mxu0 %v2286
    %4247 = vmatpush1.msra.mxu0 %v2285
    %4248 = vmatprep.subr.mxu0 %v2294
    %4249 = vmatpush1.msra.mxu0 %v2293
    %4250 = vmatprep.subr.mxu0 %v2302
    %4251 = vmatpush1.msra.mxu0 %v2301
    %4252 = vmatprep.subr.mxu0 %v2310
    %4253 = vmatpush1.msra.mxu0 %v2309
    %4254 = vmatprep.subr.mxu0 %v2318
    %4255 = vmatpush1.msra.mxu0 %v2317
    %4256 = vmatprep.subr.mxu0 %v2326
    %4257 = vmatpush1.msra.mxu0 %v2325
    %4258 = vmatprep.subr.mxu0 %v2334
    %4259 = vmatpush1.msra.mxu0 %v2333
    %4260 = vmatprep.subr.mxu0 %v2342
    %4261 = vmatpush1.msra.mxu0 %v2341
    %4262 = vmatprep.subr.mxu0 %v2350
    %4263 = vmatpush1.msra.mxu0 %v2349
    %4264 = vmatprep.subr.mxu0 %v2358
    %4265 = vmatpush1.msra.mxu0 %v2357
    %4266 = vmatprep.subr.mxu0 %v2366
    %4267 = vmatpush1.msra.mxu0 %v2365
    %4268 = vmatprep.subr.mxu0 %v2374
    %4269 = vmatpush1.msra.mxu0 %v2373
    %4270 = vmatprep.subr.mxu0 %v2382
    %4271 = vmatpush1.msra.mxu0 %v2381
    %4272 = vmatprep.subr.mxu0 %v2390
    %4273 = vmatpush1.msra.mxu0 %v2389
    %4274 = vmatprep.subr.mxu0 %v2398
    %4275 = vmatpush1.msra.mxu0 %v2397
    %4276 = vmatprep.subr.mxu0 %v2406
    %4277 = vmatpush1.msra.mxu0 %v2405
    %4278 = vmatprep.subr.mxu0 %v2414
    %4279 = vmatpush1.msra.mxu0 %v2413
    %4280 = vmatprep.subr.mxu0 %v2422
    %4281 = vmatpush1.msra.mxu0 %v2421
    %4282 = vmatprep.subr.mxu0 %v2430
    %4283 = vmatpush1.msra.mxu0 %v2429
    %4284 = vmatprep.subr.mxu0 %v2438
    %4285 = vmatpush1.msra.mxu0 %v2437
    %4286 = vmatprep.subr.mxu0 %v2446
    %4287 = vmatpush1.msra.mxu0 %v2445
    %4288 = vmatprep.subr.mxu0 %v2454
    %4289 = vmatpush1.msra.mxu0 %v2453
    %4290 = vmatprep.mubr.f32.mxu0 %v2992
    %4291 = vmatmul.mubr.f32.gmra.mrb[0].mxu0 %v2988
    %v4292 = vpop.f32.mrb[0].mxu0
    %v4293 = vadd.f32 %v4222, %v4292
    %v4294 = vpop.f32.mrb[0].mxu0
    %v4295 = vadd.f32 %v4224, %v4294
    %4296 = vdwg.mxu0
    %4297 = vmatprep.subr.mxu0 %v2462
    %4298 = vmatpush1.msra.mxu0 %v2461
    %4299 = vmatprep.subr.mxu0 %v2470
    %4300 = vmatpush1.msra.mxu0 %v2469
    %4301 = vmatprep.subr.mxu0 %v2478
    %4302 = vmatpush1.msra.mxu0 %v2477
    %4303 = vmatprep.subr.mxu0 %v2486
    %4304 = vmatpush1.msra.mxu0 %v2485
    %4305 = vmatprep.subr.mxu0 %v2494
    %4306 = vmatpush1.msra.mxu0 %v2493
    %4307 = vmatprep.subr.mxu0 %v2502
    %4308 = vmatpush1.msra.mxu0 %v2501
    %4309 = vmatprep.subr.mxu0 %v2510
    %4310 = vmatpush1.msra.mxu0 %v2509
    %4311 = vmatprep.subr.mxu0 %v2518
    %4312 = vmatpush1.msra.mxu0 %v2517
    %4313 = vmatprep.subr.mxu0 %v2526
    %4314 = vmatpush1.msra.mxu0 %v2525
    %4315 = vmatprep.subr.mxu0 %v2534
    %4316 = vmatpush1.msra.mxu0 %v2533
    %4317 = vmatprep.subr.mxu0 %v2542
    %4318 = vmatpush1.msra.mxu0 %v2541
    %4319 = vmatprep.subr.mxu0 %v2550
    %4320 = vmatpush1.msra.mxu0 %v2549
    %4321 = vmatprep.subr.mxu0 %v2558
    %4322 = vmatpush1.msra.mxu0 %v2557
    %4323 = vmatprep.subr.mxu0 %v2566
    %4324 = vmatpush1.msra.mxu0 %v2565
    %4325 = vmatprep.subr.mxu0 %v2574
    %4326 = vmatpush1.msra.mxu0 %v2573
    %4327 = vmatprep.subr.mxu0 %v2582
    %4328 = vmatpush1.msra.mxu0 %v2581
    %4329 = vmatprep.subr.mxu0 %v2590
    %4330 = vmatpush1.msra.mxu0 %v2589
    %4331 = vmatprep.subr.mxu0 %v2598
    %4332 = vmatpush1.msra.mxu0 %v2597
    %4333 = vmatprep.subr.mxu0 %v2606
    %4334 = vmatpush1.msra.mxu0 %v2605
    %4335 = vmatprep.subr.mxu0 %v2614
    %4336 = vmatpush1.msra.mxu0 %v2613
    %4337 = vmatprep.subr.mxu0 %v2622
    %4338 = vmatpush1.msra.mxu0 %v2621
    %4339 = vmatprep.subr.mxu0 %v2630
    %4340 = vmatpush1.msra.mxu0 %v2629
    %4341 = vmatprep.subr.mxu0 %v2638
    %4342 = vmatpush1.msra.mxu0 %v2637
    %4343 = vmatprep.subr.mxu0 %v2646
    %4344 = vmatpush1.msra.mxu0 %v2645
    %4345 = vmatprep.subr.mxu0 %v2654
    %4346 = vmatpush1.msra.mxu0 %v2653
    %4347 = vmatprep.subr.mxu0 %v2662
    %4348 = vmatpush1.msra.mxu0 %v2661
    %4349 = vmatprep.subr.mxu0 %v2670
    %4350 = vmatpush1.msra.mxu0 %v2669
    %4351 = vmatprep.subr.mxu0 %v2678
    %4352 = vmatpush1.msra.mxu0 %v2677
    %4353 = vmatprep.subr.mxu0 %v2686
    %4354 = vmatpush1.msra.mxu0 %v2685
    %4355 = vmatprep.subr.mxu0 %v2694
    %4356 = vmatpush1.msra.mxu0 %v2693
    %4357 = vmatprep.subr.mxu0 %v2702
    %4358 = vmatpush1.msra.mxu0 %v2701
    %4359 = vmatprep.subr.mxu0 %v2710
    %4360 = vmatpush1.msra.mxu0 %v2709
    %4361 = vmatprep.mubr.f32.mxu0 %v3000
    %4362 = vmatmul.mubr.f32.gmra.mrb[0].mxu0 %v2996
    %v4363 = vpop.f32.mrb[0].mxu0
    %v4364 = vadd.f32 %v4293, %v4363
    %v4365 = vpop.f32.mrb[0].mxu0
    %v4366 = vadd.f32 %v4295, %v4365
    %4367 = vdwg.mxu0
    %4368 = vmatprep.subr.mxu0 %v2718
    %4369 = vmatpush1.msra.mxu0 %v2717
    %4370 = vmatprep.subr.mxu0 %v2726
    %4371 = vmatpush1.msra.mxu0 %v2725
    %4372 = vmatprep.subr.mxu0 %v2734
    %4373 = vmatpush1.msra.mxu0 %v2733
    %4374 = vmatprep.subr.mxu0 %v2742
    %4375 = vmatpush1.msra.mxu0 %v2741
    %4376 = vmatprep.subr.mxu0 %v2750
    %4377 = vmatpush1.msra.mxu0 %v2749
    %4378 = vmatprep.subr.mxu0 %v2758
    %4379 = vmatpush1.msra.mxu0 %v2757
    %4380 = vmatprep.subr.mxu0 %v2766
    %4381 = vmatpush1.msra.mxu0 %v2765
    %4382 = vmatprep.subr.mxu0 %v2774
    %4383 = vmatpush1.msra.mxu0 %v2773
    %4384 = vmatprep.subr.mxu0 %v2782
    %4385 = vmatpush1.msra.mxu0 %v2781
    %4386 = vmatprep.subr.mxu0 %v2790
    %4387 = vmatpush1.msra.mxu0 %v2789
    %4388 = vmatprep.subr.mxu0 %v2798
    %4389 = vmatpush1.msra.mxu0 %v2797
    %4390 = vmatprep.subr.mxu0 %v2806
    %4391 = vmatpush1.msra.mxu0 %v2805
    %4392 = vmatprep.subr.mxu0 %v2814
    %4393 = vmatpush1.msra.mxu0 %v2813
    %4394 = vmatprep.subr.mxu0 %v2822
    %4395 = vmatpush1.msra.mxu0 %v2821
    %4396 = vmatprep.subr.mxu0 %v2830
    %4397 = vmatpush1.msra.mxu0 %v2829
    %4398 = vmatprep.subr.mxu0 %v2838
    %4399 = vmatpush1.msra.mxu0 %v2837
    %4400 = vmatprep.subr.mxu0 %v2846
    %4401 = vmatpush1.msra.mxu0 %v2845
    %4402 = vmatprep.subr.mxu0 %v2854
    %4403 = vmatpush1.msra.mxu0 %v2853
    %4404 = vmatprep.subr.mxu0 %v2862
    %4405 = vmatpush1.msra.mxu0 %v2861
    %4406 = vmatprep.subr.mxu0 %v2870
    %4407 = vmatpush1.msra.mxu0 %v2869
    %4408 = vmatprep.subr.mxu0 %v2878
    %4409 = vmatpush1.msra.mxu0 %v2877
    %4410 = vmatprep.subr.mxu0 %v2886
    %4411 = vmatpush1.msra.mxu0 %v2885
    %4412 = vmatprep.subr.mxu0 %v2894
    %4413 = vmatpush1.msra.mxu0 %v2893
    %4414 = vmatprep.subr.mxu0 %v2902
    %4415 = vmatpush1.msra.mxu0 %v2901
    %4416 = vmatprep.subr.mxu0 %v2910
    %4417 = vmatpush1.msra.mxu0 %v2909
    %4418 = vmatprep.subr.mxu0 %v2918
    %4419 = vmatpush1.msra.mxu0 %v2917
    %4420 = vmatprep.subr.mxu0 %v2926
    %4421 = vmatpush1.msra.mxu0 %v2925
    %4422 = vmatprep.subr.mxu0 %v2934
    %4423 = vmatpush1.msra.mxu0 %v2933
    %4424 = vmatprep.subr.mxu0 %v2942
    %4425 = vmatpush1.msra.mxu0 %v2941
    %4426 = vmatprep.subr.mxu0 %v2950
    %4427 = vmatpush1.msra.mxu0 %v2949
    %4428 = vmatprep.subr.mxu0 %v2958
    %4429 = vmatpush1.msra.mxu0 %v2957
    %4430 = vmatprep.subr.mxu0 %v2966
    %4431 = vmatpush1.msra.mxu0 %v2965
    %4432 = vmatprep.mubr.f32.mxu0 %v3008
    %4433 = vmatmul.mubr.f32.gmra.mrb[0].mxu0 %v3004
    %v4434 = vpop.f32.mrb[0].mxu0
    %v4435 = vadd.f32 %v4364, %v4434
    %v4436 = vpop.f32.mrb[0].mxu0
    %v4437 = vadd.f32 %v4366, %v4436
    %4438 = vdwg.mxu0
    %v4439 = vld [vmem:[#allocation8] sm:$0xff]
    %v4441 = vlaneseq
    %v4442 = vshrl.u32 %v4441, 7
    %v4443 = vsub.s32 0, %v4442
    %v4444 = vrot.slane %v4439, %v4443
    %v4445 = vlaneseq
    %v4446 = vshrl.u32 %v4445, 7
    %v4447 = vsub.s32 1, %v4446
    %v4448 = vrot.slane %v4439, %v4447
    %v4449 = vlaneseq
    %v4450 = vshrl.u32 %v4449, 7
    %v4451 = vsub.s32 2, %v4450
    %v4452 = vrot.slane %v4439, %v4451
    %v4453 = vlaneseq
    %v4454 = vshrl.u32 %v4453, 7
    %v4455 = vsub.s32 3, %v4454
    %v4456 = vrot.slane %v4439, %v4455
    %v4457 = vlaneseq
    %v4458 = vshrl.u32 %v4457, 7
    %v4459 = vsub.s32 4, %v4458
    %v4460 = vrot.slane %v4439, %v4459
    %v4461 = vlaneseq
    %v4462 = vshrl.u32 %v4461, 7
    %v4463 = vsub.s32 5, %v4462
    %v4464 = vrot.slane %v4439, %v4463
    %v4465 = vlaneseq
    %v4466 = vshrl.u32 %v4465, 7
    %v4467 = vsub.s32 6, %v4466
    %v4468 = vrot.slane %v4439, %v4467
    %v4469 = vlaneseq
    %v4470 = vshrl.u32 %v4469, 7
    %v4471 = vsub.s32 7, %v4470
    %v4472 = vrot.slane %v4439, %v4471
    %v4481 = vmul.f32 %v3370, %v4444
    %v4482 = vmul.f32 %v3372, %v4448
    %v4483 = vmul.f32 %v3725, %v4452
    %v4484 = vmul.f32 %v3727, %v4456
    %v4485 = vmul.f32 %v4080, %v4460
    %v4486 = vmul.f32 %v4082, %v4464
    %v4487 = vmul.f32 %v4435, %v4468
    %v4488 = vmul.f32 %v4437, %v4472
    %v4489 = vld [vmem:[#allocation10] sm:$0xff]
    %v4491 = vlaneseq
    %v4492 = vshrl.u32 %v4491, 7
    %v4493 = vsub.s32 0, %v4492
    %v4494 = vrot.slane %v4489, %v4493
    %v4495 = vlaneseq
    %v4496 = vshrl.u32 %v4495, 7
    %v4497 = vsub.s32 1, %v4496
    %v4498 = vrot.slane %v4489, %v4497
    %v4499 = vlaneseq
    %v4500 = vshrl.u32 %v4499, 7
    %v4501 = vsub.s32 2, %v4500
    %v4502 = vrot.slane %v4489, %v4501
    %v4503 = vlaneseq
    %v4504 = vshrl.u32 %v4503, 7
    %v4505 = vsub.s32 3, %v4504
    %v4506 = vrot.slane %v4489, %v4505
    %v4507 = vlaneseq
    %v4508 = vshrl.u32 %v4507, 7
    %v4509 = vsub.s32 4, %v4508
    %v4510 = vrot.slane %v4489, %v4509
    %v4511 = vlaneseq
    %v4512 = vshrl.u32 %v4511, 7
    %v4513 = vsub.s32 5, %v4512
    %v4514 = vrot.slane %v4489, %v4513
    %v4515 = vlaneseq
    %v4516 = vshrl.u32 %v4515, 7
    %v4517 = vsub.s32 6, %v4516
    %v4518 = vrot.slane %v4489, %v4517
    %v4519 = vlaneseq
    %v4520 = vshrl.u32 %v4519, 7
    %v4521 = vsub.s32 7, %v4520
    %v4522 = vrot.slane %v4489, %v4521
    %v4531 = vadd.f32 %v4481, %v4494
    %v4532 = vadd.f32 %v4482, %v4498
    %v4533 = vadd.f32 %v4483, %v4502
    %v4534 = vadd.f32 %v4484, %v4506
    %v4535 = vadd.f32 %v4485, %v4510
    %v4536 = vadd.f32 %v4486, %v4514
    %v4537 = vadd.f32 %v4487, %v4518
    %v4538 = vadd.f32 %v4488, %v4522
    %v4547 = vcombine.low %v4531, %v4532
    %v4548 = vcombine.low %v4533, %v4534
    %v4549 = vcombine.low %v4535, %v4536
    %v4550 = vcombine.low %v4537, %v4538
    %v4552 = vunpack.c.l.s4 1966171168
    %v4553 = vunpack.c.0.s8 %v4552
    %v4554 = vlaneseq
    %v4555 = vshrl.u32 %v4554, 7
    %v4556 = vsub.s32 %v4553, %v4555
    %v4557 = vrot.slane %v4547, %v4556
    %v4559 = vunpack.c.l.s4 1966171168
    %v4560 = vunpack.c.0.s8 %v4559
    %v4561 = vlaneseq
    %v4562 = vshrl.u32 %v4561, 7
    %v4563 = vsub.s32 %v4560, %v4562
    %v4564 = vrot.slane %v4548, %v4563
    %v4566 = vunpack.c.l.s4 1966171168
    %v4567 = vunpack.c.0.s8 %v4566
    %v4568 = vlaneseq
    %v4569 = vshrl.u32 %v4568, 7
    %v4570 = vsub.s32 %v4567, %v4569
    %v4571 = vrot.slane %v4549, %v4570
    %v4573 = vunpack.c.l.s4 1966171168
    %v4574 = vunpack.c.0.s8 %v4573
    %v4575 = vlaneseq
    %v4576 = vshrl.u32 %v4575, 7
    %v4577 = vsub.s32 %v4574, %v4576
    %v4578 = vrot.slane %v4550, %v4577
    %v4579 = vcombine.low %v4557, %v4564
    %v4580 = vcombine.low %v4571, %v4578
    %v4582 = vunpack.c.l.s4 1966171168
    %v4583 = vunpack.c.0.s8 %v4582
    %v4584 = vlaneseq
    %v4585 = vshrl.u32 %v4584, 7
    %v4586 = vsub.s32 %v4583, %v4585
    %v4587 = vrot.slane %v4579, %v4586
    %v4589 = vunpack.c.l.s4 1966171168
    %v4590 = vunpack.c.0.s8 %v4589
    %v4591 = vlaneseq
    %v4592 = vshrl.u32 %v4591, 7
    %v4593 = vsub.s32 %v4590, %v4592
    %v4594 = vrot.slane %v4580, %v4593
    %v4595 = vcombine.low %v4587, %v4594
    %4597 = vst [vmem:[#allocation11] sm:$0xff] %v4595
    // Predicated region
    $region42: #{run.1} parent=1 // pred_check
      _
    $region43: #{run.1} parent=1 // pred_check_branch
      %4599 = sbr.rel (0) target = $region45
    $region44: #{run.1} parent=1 // pred_region
      %s4601 = ssub.s32 128, 128
      %4602 = vsyncadd [#allocation4], %s4601
      %s4604 = sshll.u32 [#allocation11], 4
      %s4605 = int_to_ptr.vmem [resolvable:$true] %s4604
      %4607 = dma.vmem_to_hbm [thread:$0]  %s4605, 128, %s5, [#allocation4]
    $region45: #{run.1} parent=1 // pred_fallthru
      _
    // Predicated region
    $region46: #{run.1} parent=1 // pred_check
      _
    $region47: #{run.1} parent=1 // pred_check_branch
      %4609 = sbr.rel (0) target = $region49
    $region48: #{run.1} parent=1 // pred_region
      %4610 = dma.done [#allocation4], 128
    $region49: #{run.1} parent=1 // pred_fallthru
      _
    %4611 = vsyncpa [#allocation3], 1
    %4612 = vsyncpa [#allocation6], 1
    %4613 = vsyncpa [#allocation9], 1
    %4614 = vsyncpa [#allocation4], 1

</llo_original>
